<compile_context>
chip_gen: v7x
topology: tpu7x:2x2x1
jax: 0.10.0
libtpu: 0.0.40
codegen_flags: <defaults>
</compile_context>

<pallas_src>
import jax
import jax.numpy as jnp
from jax import lax
from jax.experimental import pallas as pl
from jax.experimental.pallas import tpu as pltpu

# ---- module hyper-parameters (small, consistent with NeRFVoxel defaults) ----
RESO = 8                       # voxel resolution
GRID_RADIUS = 1.3
VOXEL_LEN = GRID_RADIUS * 2.0 / RESO
T_NEAR = 0.2
T_FAR = 2.0
STEPS = 8                      # ray-march steps (module default 64; small here)
SPLINE = 4                     # cubic bezier
ALPHA_INIT = 0.1
EPS = 1e-10

R3 = RESO ** 3                 # 512 (conveniently a multiple of 8 sublanes)
C_WARP = 16                    # rows 0:9 ctrl pts (c1,c2,c3), row 9 rigidity, pad to 16
C_CANON = 8                    # row 0 density, rows 1:4 rgb params, pad to 8

# Ray tile (lane axis).  1024 keeps the per-tile working set (~10-16 MiB: the
# two [R^3, T] selection matrices + iota + temporaries) well under the v7x
# 64 MiB VMEM; on v5e/v6e (128 MiB) MAX_TILE_R and VMEM_LIMIT can be raised
# (e.g. 4096 / 96 MiB) to amortize per-grid-step overhead further.
MAX_TILE_R = 1024
VMEM_LIMIT_BYTES = 48 * 1024 * 1024


def _sigmoid(x):
    return 1.0 / (1.0 + jnp.exp(-x))


def _softplus(x):
    # numerically-stable softplus using only exp/log/abs/max (Mosaic friendly)
    return jnp.maximum(x, 0.0) + jnp.log(1.0 + jnp.exp(-jnp.abs(x)))


def _interp_gather(pts, grid_cm, row_iota):
    """Trilinearly-interpolated gather of a channel-major voxel table.

    pts:      [3, T]    sample positions (rows = x, y, z; rays on lanes)
    grid_cm:  [C, R^3]  channel-major packed voxel table
    row_iota: [R^3, T]  iota along the flat-voxel (sublane) axis
    returns   [C, T]    interpolated channel values.  Trilinear weights are
    zeroed for out-of-bounds neighbours (matching grid_coords_trilin_weights).
    """
    g = GRID_RADIUS
    vl = VOXEL_LEN
    half = 0.5 * vl

    comp = (pts[0:1, :], pts[1:2, :], pts[2:3, :])     # per-axis rows [1, T]

    idx_b, inb_b, w_b = [], [], []
    for a in range(3):
        p = comp[a]
        per_idx, per_inb = [], []
        ctr0 = None
        for bit in range(2):
            off = (2.0 * bit - 1.0) * half             # Python scalar (no jnp.array!)
            nb = jnp.clip(p + off, -g, g)
            ctr = jnp.clip((jnp.floor(nb / vl + EPS) + 0.5) * vl,
                           -(g - half), g - half)
            idf = jnp.floor(ctr / vl + EPS) + (RESO / 2)
            per_inb.append(((idf >= 0.0) & (idf <= RESO - 1.0)).astype(jnp.float32))
            per_idx.append(jnp.clip(idf, 0.0, RESO - 1.0).astype(jnp.int32))
            if bit == 0:
                ctr0 = ctr
        loc = (p - ctr0) / vl                          # local coord in [0,1]
        w_b.append((1.0 - loc, loc))
        idx_b.append(per_idx)
        inb_b.append(per_inb)

    # Weighted selection matrix: trilinear weight fused into the one-hot.
    wsel = None
    for u in range(8):                                 # unrolled at trace time
        bx, by, bz = u & 1, (u >> 1) & 1, (u >> 2) & 1
        w = (w_b[0][bx] * w_b[1][by] * w_b[2][bz]
             * inb_b[0][bx] * inb_b[1][by] * inb_b[2][bz])          # [1, T]
        flat = (idx_b[0][bx] * (RESO * RESO)
                + idx_b[1][by] * RESO + idx_b[2][bz])               # [1, T] int32
        contrib = jnp.where(flat == row_iota, w, 0.0)               # [R^3, T]
        wsel = contrib if wsel is None else wsel + contrib

    # Single small MXU matmul per gather: [C, R^3] @ [R^3, T] -> [C, T].
    # Default precision: the MXU is far from the bottleneck after this
    # restructuring, and f32 accumulation is requested explicitly.
    return jnp.dot(grid_cm, wsel, preferred_element_type=jnp.float32)


def dyn_nerf_kernel(ts_ref, ro_ref, rd_ref, t_ref, rdn_ref, gw_ref, gc_ref,
                    out_ref, trans_ref):
    s = pl.program_id(1)
    ns = pl.num_programs(1)

    @pl.when(s == 0)
    def _init():
        out_ref[...] = jnp.zeros_like(out_ref)
        trans_ref[...] = jnp.ones_like(trans_ref)

    ts_cur = ts_ref[s]
    ts_nxt = ts_ref[jnp.minimum(s + 1, ns - 1)]
    dist = jnp.where(s == ns - 1, 1e10, ts_nxt - ts_cur)
    dist = jnp.maximum(dist, 1e-5)

    r_o = ro_ref[...]                            # [3, T]
    r_d = rd_ref[...]                            # [3, T]
    pts = r_o + ts_cur * r_d                     # [3, T] canonical sample positions

    tile = pts.shape[1]
    row_iota = lax.broadcasted_iota(jnp.int32, (R3, tile), 0)   # built once per body

    # ---- dynamic warp: ctrl points + rigidity interpolated at `pts` ----
    gw = _interp_gather(pts, gw_ref[...], row_iota)             # [16, T]
    c1 = gw[0:3, :]
    c2 = gw[3:6, :]
    c3 = gw[6:9, :]
    rigidity = _sigmoid(gw[9:10, :])                            # [1, T]
    t = t_ref[...]                                              # [1, T]
    m1t = 1.0 - t
    # cubic bezier with ctrl_pts = [0, c1, c2, c3]
    dp = ((3.0 * m1t * m1t * t) * c1 + (3.0 * t * t * m1t) * c2
          + (t * t * t) * c3)                                   # [3, T]
    warped = pts + dp * rigidity

    # ---- canonical NeRFVoxel lookup at warped points ----
    gc = _interp_gather(warped, gc_ref[...], row_iota)          # [8, T]
    density = gc[0:1, :]                                        # [1, T]
    # TODO(synk): load_sigmoid('upshifted') / self.act is undefined in the
    # reference source; plain sigmoid is used as the rgb activation.
    rgb = _sigmoid(gc[1:4, :])                                  # [3, T]

    sigma_a = _softplus(density - 1.0)
    alpha = 1.0 - jnp.exp(-sigma_a * (dist * rdn_ref[...]))     # [1, T]

    weights = alpha * trans_ref[...]                            # exclusive cumprod carry
    out_ref[...] += weights * rgb                               # volumetric integrate
    trans_ref[...] = trans_ref[...] * (1.0 - alpha + 1e-10)
    # sky color 'black' contributes 0.


def pack_grids_channel_major(dens_grid, rgb_grid, ctrl_grid, rig_grid):
    """Pack the four voxel grids into two small channel-major tables."""
    warp = jnp.concatenate(
        [ctrl_grid.reshape(R3, 3 * (SPLINE - 1)), rig_grid.reshape(R3, 1)],
        axis=-1).T.astype(jnp.float32)                          # [10, R^3]
    warp = jnp.pad(warp, ((0, C_WARP - warp.shape[0]), (0, 0)))
    canon = jnp.concatenate(
        [dens_grid.reshape(R3, 1), rgb_grid.reshape(R3, 3)],
        axis=-1).T.astype(jnp.float32)                          # [4, R^3]
    canon = jnp.pad(canon, ((0, C_CANON - canon.shape[0]), (0, 0)))
    return warp, canon


def dynamic_nerf_voxel_forward(rays, t, grid_warp_cm, grid_canon_cm,
                               max_tile_r=MAX_TILE_R):
    """rays: [B, W, H, 6], t: [B], grids: channel-major packed voxel tables."""
    B, W, H, _ = rays.shape
    nr = B * W * H

    rays_f = rays.reshape(nr, 6).astype(jnp.float32)
    r_o = rays_f[:, 0:3].T                                      # [3, nr]
    r_d = rays_f[:, 3:6].T                                      # [3, nr]
    rd_norm = jnp.sqrt(jnp.sum(r_d * r_d, axis=0, keepdims=True))   # [1, nr] (hoisted)
    t_ray = jnp.broadcast_to(t.astype(jnp.float32)[:, None],
                             (B, W * H)).reshape(1, nr)
    ts = jnp.linspace(T_NEAR, T_FAR, STEPS, dtype=jnp.float32)

    # lane-dense ray tiling (multiple of 128 lanes)
    tile_r = min(max_tile_r, ((nr + 127) // 128) * 128)
    nr_pad = ((nr + tile_r - 1) // tile_r) * tile_r
    num_tiles = nr_pad // tile_r

    def pad_lanes(x):
        return jnp.pad(x, ((0, 0), (0, nr_pad - x.shape[1])))

    r_o, r_d, rd_norm, t_ray = map(pad_lanes, (r_o, r_d, rd_norm, t_ray))

    out = pl.pallas_call(
        dyn_nerf_kernel,
        out_shape=jax.ShapeDtypeStruct((3, nr_pad), jnp.float32),
        grid=(num_tiles, STEPS),
        in_specs=[
            pl.BlockSpec(memory_space=pltpu.MemorySpace.SMEM),         # ts
            pl.BlockSpec((3, tile_r), lambda i, s: (0, i)),            # r_o
            pl.BlockSpec((3, tile_r), lambda i, s: (0, i)),            # r_d
            pl.BlockSpec((1, tile_r), lambda i, s: (0, i)),            # t per ray
            pl.BlockSpec((1, tile_r), lambda i, s: (0, i)),            # |r_d|
            pl.BlockSpec((C_WARP, R3), lambda i, s: (0, 0)),           # warp table
            pl.BlockSpec((C_CANON, R3), lambda i, s: (0, 0)),          # canonical table
        ],
        out_specs=pl.BlockSpec((3, tile_r), lambda i, s: (0, i)),
        scratch_shapes=[pltpu.VMEM((1, tile_r), jnp.float32)],         # transmittance
        compiler_params=pltpu.CompilerParams(
            dimension_semantics=("parallel", "arbitrary"),
            vmem_limit_bytes=VMEM_LIMIT_BYTES),
    )(ts, r_o, r_d, t_ray, rd_norm, grid_warp_cm, grid_canon_cm)

    return out[:, :nr].T.reshape(B, W, H, 3)


# ---------------- pure-JAX reference (mirrors the PyTorch module) -------------
def reference_forward(rays, t, dens_grid, rgb_grid, ctrl_grid, rig_grid):
    B, W, H, _ = rays.shape
    r_o = rays[..., :3]
    r_d = rays[..., 3:]
    ts = jnp.linspace(T_NEAR, T_FAR, STEPS, dtype=jnp.float32)
    pts = r_o[None] + ts[:, None, None, None, None] * r_d[None]   # [S,B,W,H,3]

    def grid_coords_trilin_weights(p):
        vl, g, reso = VOXEL_LEN, GRID_RADIUS, RESO
        offsets = 0.5 * vl * jnp.array(
            [[2 * ((u >> i) & 1) - 1 for i in range(3)] for u in range(8)],
            jnp.float32)
        neighbors = jnp.clip(offsets + p[..., None, :], -g, g)
        centers = jnp.clip((jnp.floor(neighbors / vl + EPS) + 0.5) * vl,
                           -(g - vl / 2), g - vl / 2)
        xyz = (p - centers[..., 0, :]) / vl
        x, y, z = xyz[..., 0:1], xyz[..., 1:2], xyz[..., 2:3]
        tv = lambda v, pos: v if pos else 1 - v
        w = jnp.concatenate(
            [tv(x, u & 1) * tv(y, (u >> 1) & 1) * tv(z, (u >> 2) & 1)
             for u in range(8)], -1)[..., None]                    # [...,8,1]
        ids = (jnp.floor(centers / vl + EPS) + reso // 2).astype(jnp.int32)
        oob = jnp.any((ids < 0) | (ids > reso - 1), axis=-1, keepdims=True)
        w = jnp.where(oob, 0.0, w)
        return jnp.clip(ids, 0, reso - 1), w

    ids, w = grid_coords_trilin_weights(pts)
    nx, ny, nz = ids[..., 0], ids[..., 1], ids[..., 2]
    ctrl = ctrl_grid[nx, ny, nz]                                   # [S,B,W,H,8,9]
    ctrl = jnp.stack(jnp.split(ctrl, SPLINE - 1, axis=-1), 0)
    ctrl_pts = (w[None] * ctrl).sum(-2)                            # [3,S,B,W,H,3]
    ctrl_pts = jnp.concatenate([jnp.zeros_like(ctrl_pts[:1]), ctrl_pts], 0)
    t_e = jnp.broadcast_to(t[None, :, None, None, None], (STEPS, B, W, H, 1))
    m1t = 1 - t_e
    k = jnp.stack([m1t ** 3, 3 * m1t ** 2 * t_e, 3 * t_e ** 2 * m1t, t_e ** 3], 0)
    dp = (k * ctrl_pts).sum(0)
    rigidity = jax.nn.sigmoid((w * rig_grid[nx, ny, nz]).sum(-2))
    warped = pts + dp * rigidity

    ids2, w2 = grid_coords_trilin_weights(warped)
    nx2, ny2, nz2 = ids2[..., 0], ids2[..., 1], ids2[..., 2]
    density = (w2 * dens_grid[nx2, ny2, nz2]).sum(-2)[..., 0]      # [S,B,W,H]
    rgb = jax.nn.sigmoid((w2 * rgb_grid[nx2, ny2, nz2]).sum(-2))   # [S,B,W,H,3]

    sigma_a = jax.nn.softplus(density - 1.0)
    dists = jnp.concatenate([ts[1:] - ts[:-1], jnp.array([1e10], jnp.float32)])
    dists = jnp.maximum(dists, 1e-5)[:, None, None, None]
    dists = dists * jnp.linalg.norm(r_d, axis=-1)
    alpha = 1 - jnp.exp(-sigma_a * dists)
    cp = jnp.cumprod(1.0 - alpha + 1e-10, axis=0)
    cp = jnp.concatenate([jnp.ones_like(cp[:1]), cp[:-1]], 0)      # exclusive
    weights = alpha * cp
    return (weights[..., None] * rgb).sum(0)                       # [B,W,H,3]


if __name__ == "__main__":
    key = jax.random.PRNGKey(0)
    k1, k2, k3, k4, k5 = jax.random.split(key, 5)

    B, W, H = 2, 4, 4
    r_o = jax.random.uniform(k1, (B, W, H, 3), jnp.float32, -0.2, 0.2)
    r_d = jax.random.normal(k2, (B, W, H, 3), jnp.float32)
    r_d = r_d / jnp.linalg.norm(r_d, axis=-1, keepdims=True)
    rays = jnp.concatenate([r_o, r_d], axis=-1)
    t = jax.random.uniform(k3, (B,), jnp.float32)

    # deterministic parameter init (mirrors the module __init__ shapes)
    dens_grid = jnp.full((RESO, RESO, RESO, 1), ALPHA_INIT, jnp.float32)
    rgb_grid = jax.random.uniform(k4, (RESO, RESO, RESO, 3), jnp.float32)
    ctrl_grid = jax.random.normal(k5, (RESO, RESO, RESO, 3 * (SPLINE - 1)),
                                  jnp.float32) * 0.3
    rig_grid = jnp.zeros((RESO, RESO, RESO, 1), jnp.float32)

    warp_cm, canon_cm = pack_grids_channel_major(dens_grid, rgb_grid,
                                                 ctrl_grid, rig_grid)

    out = dynamic_nerf_voxel_forward(rays, t, warp_cm, canon_cm)
    out = jax.block_until_ready(out)

    ref = reference_forward(rays, t, dens_grid, rgb_grid, ctrl_grid, rig_grid)
    max_err = float(jnp.max(jnp.abs(out - ref)))
    # 5e-3 tolerance: the gather matmuls now run at default MXU precision (per
    # the perf review); with Precision.HIGHEST the error is < 1e-5.
    assert max_err < 5e-3, f"kernel/reference mismatch, max abs err = {max_err}"

    print("KERNEL_OK")
</pallas_src>

<mosaic_0001>
module attributes {stable_mosaic.version = 11 : i64} {
  func.func @dyn_nerf_kernel(%arg0: i32, %arg1: i32, %arg2: memref<8xf32, #tpu.memory_space<smem>>, %arg3: memref<3x128xf32, #tpu.memory_space<vmem>>, %arg4: memref<3x128xf32, #tpu.memory_space<vmem>>, %arg5: memref<1x128xf32, #tpu.memory_space<vmem>>, %arg6: memref<1x128xf32, #tpu.memory_space<vmem>>, %arg7: memref<16x512xf32, #tpu.memory_space<vmem>>, %arg8: memref<8x512xf32, #tpu.memory_space<vmem>>, %arg9: memref<3x128xf32, #tpu.memory_space<vmem>>, %arg10: memref<1x128xf32, #tpu.memory_space<vmem>>) attributes {dimension_semantics = [#tpu.dimension_semantics<parallel>, #tpu.dimension_semantics<arbitrary>], iteration_bounds = array<i64: 1, 8>, scalar_prefetch = 0 : i64, scratch_operands = 1 : i64, tpu.core_type = #tpu.core_type<tc>, window_params = [{transform_indices = @transform_0, window_bounds = array<i64: 8>}, {transform_indices = @transform_1, window_bounds = array<i64: 3, 128>}, {transform_indices = @transform_2, window_bounds = array<i64: 3, 128>}, {transform_indices = @transform_3, window_bounds = array<i64: 1, 128>}, {transform_indices = @transform_4, window_bounds = array<i64: 1, 128>}, {pipeline_mode = #tpu.pipeline_mode<synchronous>, transform_indices = @transform_5, window_bounds = array<i64: 16, 512>}, {pipeline_mode = #tpu.pipeline_mode<synchronous>, transform_indices = @transform_6, window_bounds = array<i64: 8, 512>}, {transform_indices = @transform_7, window_bounds = array<i64: 3, 128>}]} {
    %c0_i32 = arith.constant 0 : i32
    %0 = arith.cmpi eq, %arg1, %c0_i32 : i32
    %1 = arith.extui %0 : i1 to i32
    %c0_i32_0 = arith.constant 0 : i32
    %2 = arith.cmpi ne, %1, %c0_i32_0 : i32
    scf.if %2 {
      %cst_293 = arith.constant 0.000000e+00 : f32
      %880 = vector.broadcast %cst_293 : f32 to vector<3x128xf32>
      %c0_294 = arith.constant 0 : index
      %c0_295 = arith.constant 0 : index
      %881 = vector.load %arg9[%c0_294, %c0_295] : memref<3x128xf32, #tpu.memory_space<vmem>>, vector<3x128xf32>
      tpu.vector_store %arg9[%c0_294, %c0_295], %880 {strides = array<i32>} : memref<3x128xf32, #tpu.memory_space<vmem>>, vector<3x128xf32>,
      %cst_296 = arith.constant 1.000000e+00 : f32
      %882 = vector.broadcast %cst_296 : f32 to vector<1x128xf32>
      %c0_297 = arith.constant 0 : index
      %c0_298 = arith.constant 0 : index
      %883 = vector.load %arg10[%c0_297, %c0_298] : memref<1x128xf32, #tpu.memory_space<vmem>>, vector<1x128xf32>
      tpu.vector_store %arg10[%c0_297, %c0_298], %882 {strides = array<i32>} : memref<1x128xf32, #tpu.memory_space<vmem>>, vector<1x128xf32>,
    } else {
    }
    %3 = arith.index_cast %arg1 : i32 to index
    %4 = memref.load %arg2[%3] : memref<8xf32, #tpu.memory_space<smem>>
    %c1_i32 = arith.constant 1 : i32
    %5 = arith.addi %arg1, %c1_i32 : i32
    %c7_i32 = arith.constant 7 : i32
    %6 = arith.minsi %5, %c7_i32 : i32
    %7 = arith.index_cast %6 : i32 to index
    %8 = memref.load %arg2[%7] : memref<8xf32, #tpu.memory_space<smem>>
    %c7_i32_1 = arith.constant 7 : i32
    %9 = arith.cmpi eq, %arg1, %c7_i32_1 : i32
    %10 = arith.subf %8, %4 : f32
    %cst = arith.constant 1.000000e+10 : f32
    %11 = arith.select %9, %cst, %10 : f32
    %cst_2 = arith.constant 9.99999974E-6 : f32
    %12 = arith.maximumf %11, %cst_2 : f32
    %c0 = arith.constant 0 : index
    %c0_3 = arith.constant 0 : index
    %13 = vector.load %arg3[%c0, %c0_3] : memref<3x128xf32, #tpu.memory_space<vmem>>, vector<3x128xf32>
    %c0_4 = arith.constant 0 : index
    %c0_5 = arith.constant 0 : index
    %14 = vector.load %arg4[%c0_4, %c0_5] : memref<3x128xf32, #tpu.memory_space<vmem>>, vector<3x128xf32>
    %15 = vector.broadcast %4 : f32 to vector<3x128xf32>
    %16 = arith.mulf %15, %14 : vector<3x128xf32>
    %17 = arith.addf %13, %16 : vector<3x128xf32>
    %18 = tpu.iota {dimensions = array<i32: 0>} : vector<512x128xi32>
    %c0_6 = arith.constant 0 : index
    %c0_7 = arith.constant 0 : index
    %19 = vector.load %arg7[%c0_6, %c0_7] : memref<16x512xf32, #tpu.memory_space<vmem>>, vector<16x512xf32>
    %20 = vector.extract_strided_slice %17 {offsets = [0, 0], sizes = [1, 128], strides = [1, 1]} : vector<3x128xf32> to vector<1x128xf32>
    %21 = vector.extract_strided_slice %17 {offsets = [1, 0], sizes = [1, 128], strides = [1, 1]} : vector<3x128xf32> to vector<1x128xf32>
    %22 = vector.extract_strided_slice %17 {offsets = [2, 0], sizes = [1, 128], strides = [1, 1]} : vector<3x128xf32> to vector<1x128xf32>
    %cst_8 = arith.constant -1.625000e-01 : f32
    %23 = vector.broadcast %cst_8 : f32 to vector<1x128xf32>
    %24 = arith.addf %20, %23 : vector<1x128xf32>
    %cst_9 = arith.constant -1.300000e+00 : f32
    %cst_10 = arith.constant 1.300000e+00 : f32
    %25 = vector.broadcast %cst_9 : f32 to vector<1x128xf32>
    %26 = arith.maximumf %25, %24 : vector<1x128xf32>
    %27 = vector.broadcast %cst_10 : f32 to vector<1x128xf32>
    %28 = arith.minimumf %27, %26 : vector<1x128xf32>
    %cst_11 = arith.constant 3.250000e-01 : f32
    %29 = vector.broadcast %cst_11 : f32 to vector<1x128xf32>
    %30 = arith.divf %28, %29 : vector<1x128xf32>
    %cst_12 = arith.constant 1.000000e-10 : f32
    %31 = vector.broadcast %cst_12 : f32 to vector<1x128xf32>
    %32 = arith.addf %30, %31 : vector<1x128xf32>
    %33 = math.floor %32 : vector<1x128xf32>
    %cst_13 = arith.constant 5.000000e-01 : f32
    %34 = vector.broadcast %cst_13 : f32 to vector<1x128xf32>
    %35 = arith.addf %33, %34 : vector<1x128xf32>
    %cst_14 = arith.constant 3.250000e-01 : f32
    %36 = vector.broadcast %cst_14 : f32 to vector<1x128xf32>
    %37 = arith.mulf %35, %36 : vector<1x128xf32>
    %cst_15 = arith.constant -1.137500e+00 : f32
    %cst_16 = arith.constant 1.137500e+00 : f32
    %38 = vector.broadcast %cst_15 : f32 to vector<1x128xf32>
    %39 = arith.maximumf %38, %37 : vector<1x128xf32>
    %40 = vector.broadcast %cst_16 : f32 to vector<1x128xf32>
    %41 = arith.minimumf %40, %39 : vector<1x128xf32>
    %cst_17 = arith.constant 3.250000e-01 : f32
    %42 = vector.broadcast %cst_17 : f32 to vector<1x128xf32>
    %43 = arith.divf %41, %42 : vector<1x128xf32>
    %cst_18 = arith.constant 1.000000e-10 : f32
    %44 = vector.broadcast %cst_18 : f32 to vector<1x128xf32>
    %45 = arith.addf %43, %44 : vector<1x128xf32>
    %46 = math.floor %45 : vector<1x128xf32>
    %cst_19 = arith.constant 4.000000e+00 : f32
    %47 = vector.broadcast %cst_19 : f32 to vector<1x128xf32>
    %48 = arith.addf %46, %47 : vector<1x128xf32>
    %cst_20 = arith.constant 0.000000e+00 : f32
    %49 = vector.broadcast %cst_20 : f32 to vector<1x128xf32>
    %50 = arith.cmpf oge, %48, %49 : vector<1x128xf32>
    %cst_21 = arith.constant 7.000000e+00 : f32
    %51 = vector.broadcast %cst_21 : f32 to vector<1x128xf32>
    %52 = arith.cmpf ole, %48, %51 : vector<1x128xf32>
    %53 = arith.andi %50, %52 : vector<1x128xi1>
    %54 = arith.extui %53 : vector<1x128xi1> to vector<1x128xi32>
    %55 = arith.sitofp %54 : vector<1x128xi32> to vector<1x128xf32>
    %cst_22 = arith.constant 0.000000e+00 : f32
    %cst_23 = arith.constant 7.000000e+00 : f32
    %56 = vector.broadcast %cst_22 : f32 to vector<1x128xf32>
    %57 = arith.maximumf %56, %48 : vector<1x128xf32>
    %58 = vector.broadcast %cst_23 : f32 to vector<1x128xf32>
    %59 = arith.minimumf %58, %57 : vector<1x128xf32>
    %60 = arith.fptosi %59 : vector<1x128xf32> to vector<1x128xi32>
    %cst_24 = arith.constant 1.625000e-01 : f32
    %61 = vector.broadcast %cst_24 : f32 to vector<1x128xf32>
    %62 = arith.addf %20, %61 : vector<1x128xf32>
    %cst_25 = arith.constant -1.300000e+00 : f32
    %cst_26 = arith.constant 1.300000e+00 : f32
    %63 = vector.broadcast %cst_25 : f32 to vector<1x128xf32>
    %64 = arith.maximumf %63, %62 : vector<1x128xf32>
    %65 = vector.broadcast %cst_26 : f32 to vector<1x128xf32>
    %66 = arith.minimumf %65, %64 : vector<1x128xf32>
    %cst_27 = arith.constant 3.250000e-01 : f32
    %67 = vector.broadcast %cst_27 : f32 to vector<1x128xf32>
    %68 = arith.divf %66, %67 : vector<1x128xf32>
    %cst_28 = arith.constant 1.000000e-10 : f32
    %69 = vector.broadcast %cst_28 : f32 to vector<1x128xf32>
    %70 = arith.addf %68, %69 : vector<1x128xf32>
    %71 = math.floor %70 : vector<1x128xf32>
    %cst_29 = arith.constant 5.000000e-01 : f32
    %72 = vector.broadcast %cst_29 : f32 to vector<1x128xf32>
    %73 = arith.addf %71, %72 : vector<1x128xf32>
    %cst_30 = arith.constant 3.250000e-01 : f32
    %74 = vector.broadcast %cst_30 : f32 to vector<1x128xf32>
    %75 = arith.mulf %73, %74 : vector<1x128xf32>
    %cst_31 = arith.constant -1.137500e+00 : f32
    %cst_32 = arith.constant 1.137500e+00 : f32
    %76 = vector.broadcast %cst_31 : f32 to vector<1x128xf32>
    %77 = arith.maximumf %76, %75 : vector<1x128xf32>
    %78 = vector.broadcast %cst_32 : f32 to vector<1x128xf32>
    %79 = arith.minimumf %78, %77 : vector<1x128xf32>
    %cst_33 = arith.constant 3.250000e-01 : f32
    %80 = vector.broadcast %cst_33 : f32 to vector<1x128xf32>
    %81 = arith.divf %79, %80 : vector<1x128xf32>
    %cst_34 = arith.constant 1.000000e-10 : f32
    %82 = vector.broadcast %cst_34 : f32 to vector<1x128xf32>
    %83 = arith.addf %81, %82 : vector<1x128xf32>
    %84 = math.floor %83 : vector<1x128xf32>
    %cst_35 = arith.constant 4.000000e+00 : f32
    %85 = vector.broadcast %cst_35 : f32 to vector<1x128xf32>
    %86 = arith.addf %84, %85 : vector<1x128xf32>
    %cst_36 = arith.constant 0.000000e+00 : f32
    %87 = vector.broadcast %cst_36 : f32 to vector<1x128xf32>
    %88 = arith.cmpf oge, %86, %87 : vector<1x128xf32>
    %cst_37 = arith.constant 7.000000e+00 : f32
    %89 = vector.broadcast %cst_37 : f32 to vector<1x128xf32>
    %90 = arith.cmpf ole, %86, %89 : vector<1x128xf32>
    %91 = arith.andi %88, %90 : vector<1x128xi1>
    %92 = arith.extui %91 : vector<1x128xi1> to vector<1x128xi32>
    %93 = arith.sitofp %92 : vector<1x128xi32> to vector<1x128xf32>
    %cst_38 = arith.constant 0.000000e+00 : f32
    %cst_39 = arith.constant 7.000000e+00 : f32
    %94 = vector.broadcast %cst_38 : f32 to vector<1x128xf32>
    %95 = arith.maximumf %94, %86 : vector<1x128xf32>
    %96 = vector.broadcast %cst_39 : f32 to vector<1x128xf32>
    %97 = arith.minimumf %96, %95 : vector<1x128xf32>
    %98 = arith.fptosi %97 : vector<1x128xf32> to vector<1x128xi32>
    %99 = arith.subf %20, %41 : vector<1x128xf32>
    %cst_40 = arith.constant 3.250000e-01 : f32
    %100 = vector.broadcast %cst_40 : f32 to vector<1x128xf32>
    %101 = arith.divf %99, %100 : vector<1x128xf32>
    %cst_41 = arith.constant 1.000000e+00 : f32
    %102 = vector.broadcast %cst_41 : f32 to vector<1x128xf32>
    %103 = arith.subf %102, %101 : vector<1x128xf32>
    %cst_42 = arith.constant -1.625000e-01 : f32
    %104 = vector.broadcast %cst_42 : f32 to vector<1x128xf32>
    %105 = arith.addf %21, %104 : vector<1x128xf32>
    %cst_43 = arith.constant -1.300000e+00 : f32
    %cst_44 = arith.constant 1.300000e+00 : f32
    %106 = vector.broadcast %cst_43 : f32 to vector<1x128xf32>
    %107 = arith.maximumf %106, %105 : vector<1x128xf32>
    %108 = vector.broadcast %cst_44 : f32 to vector<1x128xf32>
    %109 = arith.minimumf %108, %107 : vector<1x128xf32>
    %cst_45 = arith.constant 3.250000e-01 : f32
    %110 = vector.broadcast %cst_45 : f32 to vector<1x128xf32>
    %111 = arith.divf %109, %110 : vector<1x128xf32>
    %cst_46 = arith.constant 1.000000e-10 : f32
    %112 = vector.broadcast %cst_46 : f32 to vector<1x128xf32>
    %113 = arith.addf %111, %112 : vector<1x128xf32>
    %114 = math.floor %113 : vector<1x128xf32>
    %cst_47 = arith.constant 5.000000e-01 : f32
    %115 = vector.broadcast %cst_47 : f32 to vector<1x128xf32>
    %116 = arith.addf %114, %115 : vector<1x128xf32>
    %cst_48 = arith.constant 3.250000e-01 : f32
    %117 = vector.broadcast %cst_48 : f32 to vector<1x128xf32>
    %118 = arith.mulf %116, %117 : vector<1x128xf32>
    %cst_49 = arith.constant -1.137500e+00 : f32
    %cst_50 = arith.constant 1.137500e+00 : f32
    %119 = vector.broadcast %cst_49 : f32 to vector<1x128xf32>
    %120 = arith.maximumf %119, %118 : vector<1x128xf32>
    %121 = vector.broadcast %cst_50 : f32 to vector<1x128xf32>
    %122 = arith.minimumf %121, %120 : vector<1x128xf32>
    %cst_51 = arith.constant 3.250000e-01 : f32
    %123 = vector.broadcast %cst_51 : f32 to vector<1x128xf32>
    %124 = arith.divf %122, %123 : vector<1x128xf32>
    %cst_52 = arith.constant 1.000000e-10 : f32
    %125 = vector.broadcast %cst_52 : f32 to vector<1x128xf32>
    %126 = arith.addf %124, %125 : vector<1x128xf32>
    %127 = math.floor %126 : vector<1x128xf32>
    %cst_53 = arith.constant 4.000000e+00 : f32
    %128 = vector.broadcast %cst_53 : f32 to vector<1x128xf32>
    %129 = arith.addf %127, %128 : vector<1x128xf32>
    %cst_54 = arith.constant 0.000000e+00 : f32
    %130 = vector.broadcast %cst_54 : f32 to vector<1x128xf32>
    %131 = arith.cmpf oge, %129, %130 : vector<1x128xf32>
    %cst_55 = arith.constant 7.000000e+00 : f32
    %132 = vector.broadcast %cst_55 : f32 to vector<1x128xf32>
    %133 = arith.cmpf ole, %129, %132 : vector<1x128xf32>
    %134 = arith.andi %131, %133 : vector<1x128xi1>
    %135 = arith.extui %134 : vector<1x128xi1> to vector<1x128xi32>
    %136 = arith.sitofp %135 : vector<1x128xi32> to vector<1x128xf32>
    %cst_56 = arith.constant 0.000000e+00 : f32
    %cst_57 = arith.constant 7.000000e+00 : f32
    %137 = vector.broadcast %cst_56 : f32 to vector<1x128xf32>
    %138 = arith.maximumf %137, %129 : vector<1x128xf32>
    %139 = vector.broadcast %cst_57 : f32 to vector<1x128xf32>
    %140 = arith.minimumf %139, %138 : vector<1x128xf32>
    %141 = arith.fptosi %140 : vector<1x128xf32> to vector<1x128xi32>
    %cst_58 = arith.constant 1.625000e-01 : f32
    %142 = vector.broadcast %cst_58 : f32 to vector<1x128xf32>
    %143 = arith.addf %21, %142 : vector<1x128xf32>
    %cst_59 = arith.constant -1.300000e+00 : f32
    %cst_60 = arith.constant 1.300000e+00 : f32
    %144 = vector.broadcast %cst_59 : f32 to vector<1x128xf32>
    %145 = arith.maximumf %144, %143 : vector<1x128xf32>
    %146 = vector.broadcast %cst_60 : f32 to vector<1x128xf32>
    %147 = arith.minimumf %146, %145 : vector<1x128xf32>
    %cst_61 = arith.constant 3.250000e-01 : f32
    %148 = vector.broadcast %cst_61 : f32 to vector<1x128xf32>
    %149 = arith.divf %147, %148 : vector<1x128xf32>
    %cst_62 = arith.constant 1.000000e-10 : f32
    %150 = vector.broadcast %cst_62 : f32 to vector<1x128xf32>
    %151 = arith.addf %149, %150 : vector<1x128xf32>
    %152 = math.floor %151 : vector<1x128xf32>
    %cst_63 = arith.constant 5.000000e-01 : f32
    %153 = vector.broadcast %cst_63 : f32 to vector<1x128xf32>
    %154 = arith.addf %152, %153 : vector<1x128xf32>
    %cst_64 = arith.constant 3.250000e-01 : f32
    %155 = vector.broadcast %cst_64 : f32 to vector<1x128xf32>
    %156 = arith.mulf %154, %155 : vector<1x128xf32>
    %cst_65 = arith.constant -1.137500e+00 : f32
    %cst_66 = arith.constant 1.137500e+00 : f32
    %157 = vector.broadcast %cst_65 : f32 to vector<1x128xf32>
    %158 = arith.maximumf %157, %156 : vector<1x128xf32>
    %159 = vector.broadcast %cst_66 : f32 to vector<1x128xf32>
    %160 = arith.minimumf %159, %158 : vector<1x128xf32>
    %cst_67 = arith.constant 3.250000e-01 : f32
    %161 = vector.broadcast %cst_67 : f32 to vector<1x128xf32>
    %162 = arith.divf %160, %161 : vector<1x128xf32>
    %cst_68 = arith.constant 1.000000e-10 : f32
    %163 = vector.broadcast %cst_68 : f32 to vector<1x128xf32>
    %164 = arith.addf %162, %163 : vector<1x128xf32>
    %165 = math.floor %164 : vector<1x128xf32>
    %cst_69 = arith.constant 4.000000e+00 : f32
    %166 = vector.broadcast %cst_69 : f32 to vector<1x128xf32>
    %167 = arith.addf %165, %166 : vector<1x128xf32>
    %cst_70 = arith.constant 0.000000e+00 : f32
    %168 = vector.broadcast %cst_70 : f32 to vector<1x128xf32>
    %169 = arith.cmpf oge, %167, %168 : vector<1x128xf32>
    %cst_71 = arith.constant 7.000000e+00 : f32
    %170 = vector.broadcast %cst_71 : f32 to vector<1x128xf32>
    %171 = arith.cmpf ole, %167, %170 : vector<1x128xf32>
    %172 = arith.andi %169, %171 : vector<1x128xi1>
    %173 = arith.extui %172 : vector<1x128xi1> to vector<1x128xi32>
    %174 = arith.sitofp %173 : vector<1x128xi32> to vector<1x128xf32>
    %cst_72 = arith.constant 0.000000e+00 : f32
    %cst_73 = arith.constant 7.000000e+00 : f32
    %175 = vector.broadcast %cst_72 : f32 to vector<1x128xf32>
    %176 = arith.maximumf %175, %167 : vector<1x128xf32>
    %177 = vector.broadcast %cst_73 : f32 to vector<1x128xf32>
    %178 = arith.minimumf %177, %176 : vector<1x128xf32>
    %179 = arith.fptosi %178 : vector<1x128xf32> to vector<1x128xi32>
    %180 = arith.subf %21, %122 : vector<1x128xf32>
    %cst_74 = arith.constant 3.250000e-01 : f32
    %181 = vector.broadcast %cst_74 : f32 to vector<1x128xf32>
    %182 = arith.divf %180, %181 : vector<1x128xf32>
    %cst_75 = arith.constant 1.000000e+00 : f32
    %183 = vector.broadcast %cst_75 : f32 to vector<1x128xf32>
    %184 = arith.subf %183, %182 : vector<1x128xf32>
    %cst_76 = arith.constant -1.625000e-01 : f32
    %185 = vector.broadcast %cst_76 : f32 to vector<1x128xf32>
    %186 = arith.addf %22, %185 : vector<1x128xf32>
    %cst_77 = arith.constant -1.300000e+00 : f32
    %cst_78 = arith.constant 1.300000e+00 : f32
    %187 = vector.broadcast %cst_77 : f32 to vector<1x128xf32>
    %188 = arith.maximumf %187, %186 : vector<1x128xf32>
    %189 = vector.broadcast %cst_78 : f32 to vector<1x128xf32>
    %190 = arith.minimumf %189, %188 : vector<1x128xf32>
    %cst_79 = arith.constant 3.250000e-01 : f32
    %191 = vector.broadcast %cst_79 : f32 to vector<1x128xf32>
    %192 = arith.divf %190, %191 : vector<1x128xf32>
    %cst_80 = arith.constant 1.000000e-10 : f32
    %193 = vector.broadcast %cst_80 : f32 to vector<1x128xf32>
    %194 = arith.addf %192, %193 : vector<1x128xf32>
    %195 = math.floor %194 : vector<1x128xf32>
    %cst_81 = arith.constant 5.000000e-01 : f32
    %196 = vector.broadcast %cst_81 : f32 to vector<1x128xf32>
    %197 = arith.addf %195, %196 : vector<1x128xf32>
    %cst_82 = arith.constant 3.250000e-01 : f32
    %198 = vector.broadcast %cst_82 : f32 to vector<1x128xf32>
    %199 = arith.mulf %197, %198 : vector<1x128xf32>
    %cst_83 = arith.constant -1.137500e+00 : f32
    %cst_84 = arith.constant 1.137500e+00 : f32
    %200 = vector.broadcast %cst_83 : f32 to vector<1x128xf32>
    %201 = arith.maximumf %200, %199 : vector<1x128xf32>
    %202 = vector.broadcast %cst_84 : f32 to vector<1x128xf32>
    %203 = arith.minimumf %202, %201 : vector<1x128xf32>
    %cst_85 = arith.constant 3.250000e-01 : f32
    %204 = vector.broadcast %cst_85 : f32 to vector<1x128xf32>
    %205 = arith.divf %203, %204 : vector<1x128xf32>
    %cst_86 = arith.constant 1.000000e-10 : f32
    %206 = vector.broadcast %cst_86 : f32 to vector<1x128xf32>
    %207 = arith.addf %205, %206 : vector<1x128xf32>
    %208 = math.floor %207 : vector<1x128xf32>
    %cst_87 = arith.constant 4.000000e+00 : f32
    %209 = vector.broadcast %cst_87 : f32 to vector<1x128xf32>
    %210 = arith.addf %208, %209 : vector<1x128xf32>
    %cst_88 = arith.constant 0.000000e+00 : f32
    %211 = vector.broadcast %cst_88 : f32 to vector<1x128xf32>
    %212 = arith.cmpf oge, %210, %211 : vector<1x128xf32>
    %cst_89 = arith.constant 7.000000e+00 : f32
    %213 = vector.broadcast %cst_89 : f32 to vector<1x128xf32>
    %214 = arith.cmpf ole, %210, %213 : vector<1x128xf32>
    %215 = arith.andi %212, %214 : vector<1x128xi1>
    %216 = arith.extui %215 : vector<1x128xi1> to vector<1x128xi32>
    %217 = arith.sitofp %216 : vector<1x128xi32> to vector<1x128xf32>
    %cst_90 = arith.constant 0.000000e+00 : f32
    %cst_91 = arith.constant 7.000000e+00 : f32
    %218 = vector.broadcast %cst_90 : f32 to vector<1x128xf32>
    %219 = arith.maximumf %218, %210 : vector<1x128xf32>
    %220 = vector.broadcast %cst_91 : f32 to vector<1x128xf32>
    %221 = arith.minimumf %220, %219 : vector<1x128xf32>
    %222 = arith.fptosi %221 : vector<1x128xf32> to vector<1x128xi32>
    %cst_92 = arith.constant 1.625000e-01 : f32
    %223 = vector.broadcast %cst_92 : f32 to vector<1x128xf32>
    %224 = arith.addf %22, %223 : vector<1x128xf32>
    %cst_93 = arith.constant -1.300000e+00 : f32
    %cst_94 = arith.constant 1.300000e+00 : f32
    %225 = vector.broadcast %cst_93 : f32 to vector<1x128xf32>
    %226 = arith.maximumf %225, %224 : vector<1x128xf32>
    %227 = vector.broadcast %cst_94 : f32 to vector<1x128xf32>
    %228 = arith.minimumf %227, %226 : vector<1x128xf32>
    %cst_95 = arith.constant 3.250000e-01 : f32
    %229 = vector.broadcast %cst_95 : f32 to vector<1x128xf32>
    %230 = arith.divf %228, %229 : vector<1x128xf32>
    %cst_96 = arith.constant 1.000000e-10 : f32
    %231 = vector.broadcast %cst_96 : f32 to vector<1x128xf32>
    %232 = arith.addf %230, %231 : vector<1x128xf32>
    %233 = math.floor %232 : vector<1x128xf32>
    %cst_97 = arith.constant 5.000000e-01 : f32
    %234 = vector.broadcast %cst_97 : f32 to vector<1x128xf32>
    %235 = arith.addf %233, %234 : vector<1x128xf32>
    %cst_98 = arith.constant 3.250000e-01 : f32
    %236 = vector.broadcast %cst_98 : f32 to vector<1x128xf32>
    %237 = arith.mulf %235, %236 : vector<1x128xf32>
    %cst_99 = arith.constant -1.137500e+00 : f32
    %cst_100 = arith.constant 1.137500e+00 : f32
    %238 = vector.broadcast %cst_99 : f32 to vector<1x128xf32>
    %239 = arith.maximumf %238, %237 : vector<1x128xf32>
    %240 = vector.broadcast %cst_100 : f32 to vector<1x128xf32>
    %241 = arith.minimumf %240, %239 : vector<1x128xf32>
    %cst_101 = arith.constant 3.250000e-01 : f32
    %242 = vector.broadcast %cst_101 : f32 to vector<1x128xf32>
    %243 = arith.divf %241, %242 : vector<1x128xf32>
    %cst_102 = arith.constant 1.000000e-10 : f32
    %244 = vector.broadcast %cst_102 : f32 to vector<1x128xf32>
    %245 = arith.addf %243, %244 : vector<1x128xf32>
    %246 = math.floor %245 : vector<1x128xf32>
    %cst_103 = arith.constant 4.000000e+00 : f32
    %247 = vector.broadcast %cst_103 : f32 to vector<1x128xf32>
    %248 = arith.addf %246, %247 : vector<1x128xf32>
    %cst_104 = arith.constant 0.000000e+00 : f32
    %249 = vector.broadcast %cst_104 : f32 to vector<1x128xf32>
    %250 = arith.cmpf oge, %248, %249 : vector<1x128xf32>
    %cst_105 = arith.constant 7.000000e+00 : f32
    %251 = vector.broadcast %cst_105 : f32 to vector<1x128xf32>
    %252 = arith.cmpf ole, %248, %251 : vector<1x128xf32>
    %253 = arith.andi %250, %252 : vector<1x128xi1>
    %254 = arith.extui %253 : vector<1x128xi1> to vector<1x128xi32>
    %255 = arith.sitofp %254 : vector<1x128xi32> to vector<1x128xf32>
    %cst_106 = arith.constant 0.000000e+00 : f32
    %cst_107 = arith.constant 7.000000e+00 : f32
    %256 = vector.broadcast %cst_106 : f32 to vector<1x128xf32>
    %257 = arith.maximumf %256, %248 : vector<1x128xf32>
    %258 = vector.broadcast %cst_107 : f32 to vector<1x128xf32>
    %259 = arith.minimumf %258, %257 : vector<1x128xf32>
    %260 = arith.fptosi %259 : vector<1x128xf32> to vector<1x128xi32>
    %261 = arith.subf %22, %203 : vector<1x128xf32>
    %cst_108 = arith.constant 3.250000e-01 : f32
    %262 = vector.broadcast %cst_108 : f32 to vector<1x128xf32>
    %263 = arith.divf %261, %262 : vector<1x128xf32>
    %cst_109 = arith.constant 1.000000e+00 : f32
    %264 = vector.broadcast %cst_109 : f32 to vector<1x128xf32>
    %265 = arith.subf %264, %263 : vector<1x128xf32>
    %266 = arith.mulf %103, %184 : vector<1x128xf32>
    %267 = arith.mulf %266, %265 : vector<1x128xf32>
    %268 = arith.mulf %267, %55 : vector<1x128xf32>
    %269 = arith.mulf %268, %136 : vector<1x128xf32>
    %270 = arith.mulf %269, %217 : vector<1x128xf32>
    %c64_i32 = arith.constant 64 : i32
    %271 = vector.broadcast %c64_i32 : i32 to vector<1x128xi32>
    %272 = arith.muli %60, %271 : vector<1x128xi32>
    %c8_i32 = arith.constant 8 : i32
    %273 = vector.broadcast %c8_i32 : i32 to vector<1x128xi32>
    %274 = arith.muli %141, %273 : vector<1x128xi32>
    %275 = arith.addi %272, %274 : vector<1x128xi32>
    %276 = arith.addi %275, %222 : vector<1x128xi32>
    %277 = vector.broadcast %276 : vector<1x128xi32> to vector<512x128xi32>
    %278 = arith.cmpi eq, %277, %18 : vector<512x128xi32>
    %cst_110 = arith.constant 0.000000e+00 : f32
    %279 = vector.shape_cast %270 : vector<1x128xf32> to vector<1x128xf32>
    %280 = vector.broadcast %279 : vector<1x128xf32> to vector<512x128xf32>
    %281 = vector.broadcast %cst_110 : f32 to vector<512x128xf32>
    %282 = arith.select %278, %280, %281 : vector<512x128xi1>, vector<512x128xf32>
    %283 = arith.mulf %101, %184 : vector<1x128xf32>
    %284 = arith.mulf %283, %265 : vector<1x128xf32>
    %285 = arith.mulf %284, %93 : vector<1x128xf32>
    %286 = arith.mulf %285, %136 : vector<1x128xf32>
    %287 = arith.mulf %286, %217 : vector<1x128xf32>
    %c64_i32_111 = arith.constant 64 : i32
    %288 = vector.broadcast %c64_i32_111 : i32 to vector<1x128xi32>
    %289 = arith.muli %98, %288 : vector<1x128xi32>
    %c8_i32_112 = arith.constant 8 : i32
    %290 = vector.broadcast %c8_i32_112 : i32 to vector<1x128xi32>
    %291 = arith.muli %141, %290 : vector<1x128xi32>
    %292 = arith.addi %289, %291 : vector<1x128xi32>
    %293 = arith.addi %292, %222 : vector<1x128xi32>
    %294 = vector.broadcast %293 : vector<1x128xi32> to vector<512x128xi32>
    %295 = arith.cmpi eq, %294, %18 : vector<512x128xi32>
    %cst_113 = arith.constant 0.000000e+00 : f32
    %296 = vector.shape_cast %287 : vector<1x128xf32> to vector<1x128xf32>
    %297 = vector.broadcast %296 : vector<1x128xf32> to vector<512x128xf32>
    %298 = vector.broadcast %cst_113 : f32 to vector<512x128xf32>
    %299 = arith.select %295, %297, %298 : vector<512x128xi1>, vector<512x128xf32>
    %300 = arith.addf %282, %299 : vector<512x128xf32>
    %301 = arith.mulf %103, %182 : vector<1x128xf32>
    %302 = arith.mulf %301, %265 : vector<1x128xf32>
    %303 = arith.mulf %302, %55 : vector<1x128xf32>
    %304 = arith.mulf %303, %174 : vector<1x128xf32>
    %305 = arith.mulf %304, %217 : vector<1x128xf32>
    %c64_i32_114 = arith.constant 64 : i32
    %306 = vector.broadcast %c64_i32_114 : i32 to vector<1x128xi32>
    %307 = arith.muli %60, %306 : vector<1x128xi32>
    %c8_i32_115 = arith.constant 8 : i32
    %308 = vector.broadcast %c8_i32_115 : i32 to vector<1x128xi32>
    %309 = arith.muli %179, %308 : vector<1x128xi32>
    %310 = arith.addi %307, %309 : vector<1x128xi32>
    %311 = arith.addi %310, %222 : vector<1x128xi32>
    %312 = vector.broadcast %311 : vector<1x128xi32> to vector<512x128xi32>
    %313 = arith.cmpi eq, %312, %18 : vector<512x128xi32>
    %cst_116 = arith.constant 0.000000e+00 : f32
    %314 = vector.shape_cast %305 : vector<1x128xf32> to vector<1x128xf32>
    %315 = vector.broadcast %314 : vector<1x128xf32> to vector<512x128xf32>
    %316 = vector.broadcast %cst_116 : f32 to vector<512x128xf32>
    %317 = arith.select %313, %315, %316 : vector<512x128xi1>, vector<512x128xf32>
    %318 = arith.addf %300, %317 : vector<512x128xf32>
    %319 = arith.mulf %101, %182 : vector<1x128xf32>
    %320 = arith.mulf %319, %265 : vector<1x128xf32>
    %321 = arith.mulf %320, %93 : vector<1x128xf32>
    %322 = arith.mulf %321, %174 : vector<1x128xf32>
    %323 = arith.mulf %322, %217 : vector<1x128xf32>
    %c64_i32_117 = arith.constant 64 : i32
    %324 = vector.broadcast %c64_i32_117 : i32 to vector<1x128xi32>
    %325 = arith.muli %98, %324 : vector<1x128xi32>
    %c8_i32_118 = arith.constant 8 : i32
    %326 = vector.broadcast %c8_i32_118 : i32 to vector<1x128xi32>
    %327 = arith.muli %179, %326 : vector<1x128xi32>
    %328 = arith.addi %325, %327 : vector<1x128xi32>
    %329 = arith.addi %328, %222 : vector<1x128xi32>
    %330 = vector.broadcast %329 : vector<1x128xi32> to vector<512x128xi32>
    %331 = arith.cmpi eq, %330, %18 : vector<512x128xi32>
    %cst_119 = arith.constant 0.000000e+00 : f32
    %332 = vector.shape_cast %323 : vector<1x128xf32> to vector<1x128xf32>
    %333 = vector.broadcast %332 : vector<1x128xf32> to vector<512x128xf32>
    %334 = vector.broadcast %cst_119 : f32 to vector<512x128xf32>
    %335 = arith.select %331, %333, %334 : vector<512x128xi1>, vector<512x128xf32>
    %336 = arith.addf %318, %335 : vector<512x128xf32>
    %337 = arith.mulf %103, %184 : vector<1x128xf32>
    %338 = arith.mulf %337, %263 : vector<1x128xf32>
    %339 = arith.mulf %338, %55 : vector<1x128xf32>
    %340 = arith.mulf %339, %136 : vector<1x128xf32>
    %341 = arith.mulf %340, %255 : vector<1x128xf32>
    %c64_i32_120 = arith.constant 64 : i32
    %342 = vector.broadcast %c64_i32_120 : i32 to vector<1x128xi32>
    %343 = arith.muli %60, %342 : vector<1x128xi32>
    %c8_i32_121 = arith.constant 8 : i32
    %344 = vector.broadcast %c8_i32_121 : i32 to vector<1x128xi32>
    %345 = arith.muli %141, %344 : vector<1x128xi32>
    %346 = arith.addi %343, %345 : vector<1x128xi32>
    %347 = arith.addi %346, %260 : vector<1x128xi32>
    %348 = vector.broadcast %347 : vector<1x128xi32> to vector<512x128xi32>
    %349 = arith.cmpi eq, %348, %18 : vector<512x128xi32>
    %cst_122 = arith.constant 0.000000e+00 : f32
    %350 = vector.shape_cast %341 : vector<1x128xf32> to vector<1x128xf32>
    %351 = vector.broadcast %350 : vector<1x128xf32> to vector<512x128xf32>
    %352 = vector.broadcast %cst_122 : f32 to vector<512x128xf32>
    %353 = arith.select %349, %351, %352 : vector<512x128xi1>, vector<512x128xf32>
    %354 = arith.addf %336, %353 : vector<512x128xf32>
    %355 = arith.mulf %101, %184 : vector<1x128xf32>
    %356 = arith.mulf %355, %263 : vector<1x128xf32>
    %357 = arith.mulf %356, %93 : vector<1x128xf32>
    %358 = arith.mulf %357, %136 : vector<1x128xf32>
    %359 = arith.mulf %358, %255 : vector<1x128xf32>
    %c64_i32_123 = arith.constant 64 : i32
    %360 = vector.broadcast %c64_i32_123 : i32 to vector<1x128xi32>
    %361 = arith.muli %98, %360 : vector<1x128xi32>
    %c8_i32_124 = arith.constant 8 : i32
    %362 = vector.broadcast %c8_i32_124 : i32 to vector<1x128xi32>
    %363 = arith.muli %141, %362 : vector<1x128xi32>
    %364 = arith.addi %361, %363 : vector<1x128xi32>
    %365 = arith.addi %364, %260 : vector<1x128xi32>
    %366 = vector.broadcast %365 : vector<1x128xi32> to vector<512x128xi32>
    %367 = arith.cmpi eq, %366, %18 : vector<512x128xi32>
    %cst_125 = arith.constant 0.000000e+00 : f32
    %368 = vector.shape_cast %359 : vector<1x128xf32> to vector<1x128xf32>
    %369 = vector.broadcast %368 : vector<1x128xf32> to vector<512x128xf32>
    %370 = vector.broadcast %cst_125 : f32 to vector<512x128xf32>
    %371 = arith.select %367, %369, %370 : vector<512x128xi1>, vector<512x128xf32>
    %372 = arith.addf %354, %371 : vector<512x128xf32>
    %373 = arith.mulf %103, %182 : vector<1x128xf32>
    %374 = arith.mulf %373, %263 : vector<1x128xf32>
    %375 = arith.mulf %374, %55 : vector<1x128xf32>
    %376 = arith.mulf %375, %174 : vector<1x128xf32>
    %377 = arith.mulf %376, %255 : vector<1x128xf32>
    %c64_i32_126 = arith.constant 64 : i32
    %378 = vector.broadcast %c64_i32_126 : i32 to vector<1x128xi32>
    %379 = arith.muli %60, %378 : vector<1x128xi32>
    %c8_i32_127 = arith.constant 8 : i32
    %380 = vector.broadcast %c8_i32_127 : i32 to vector<1x128xi32>
    %381 = arith.muli %179, %380 : vector<1x128xi32>
    %382 = arith.addi %379, %381 : vector<1x128xi32>
    %383 = arith.addi %382, %260 : vector<1x128xi32>
    %384 = vector.broadcast %383 : vector<1x128xi32> to vector<512x128xi32>
    %385 = arith.cmpi eq, %384, %18 : vector<512x128xi32>
    %cst_128 = arith.constant 0.000000e+00 : f32
    %386 = vector.shape_cast %377 : vector<1x128xf32> to vector<1x128xf32>
    %387 = vector.broadcast %386 : vector<1x128xf32> to vector<512x128xf32>
    %388 = vector.broadcast %cst_128 : f32 to vector<512x128xf32>
    %389 = arith.select %385, %387, %388 : vector<512x128xi1>, vector<512x128xf32>
    %390 = arith.addf %372, %389 : vector<512x128xf32>
    %391 = arith.mulf %101, %182 : vector<1x128xf32>
    %392 = arith.mulf %391, %263 : vector<1x128xf32>
    %393 = arith.mulf %392, %93 : vector<1x128xf32>
    %394 = arith.mulf %393, %174 : vector<1x128xf32>
    %395 = arith.mulf %394, %255 : vector<1x128xf32>
    %c64_i32_129 = arith.constant 64 : i32
    %396 = vector.broadcast %c64_i32_129 : i32 to vector<1x128xi32>
    %397 = arith.muli %98, %396 : vector<1x128xi32>
    %c8_i32_130 = arith.constant 8 : i32
    %398 = vector.broadcast %c8_i32_130 : i32 to vector<1x128xi32>
    %399 = arith.muli %179, %398 : vector<1x128xi32>
    %400 = arith.addi %397, %399 : vector<1x128xi32>
    %401 = arith.addi %400, %260 : vector<1x128xi32>
    %402 = vector.broadcast %401 : vector<1x128xi32> to vector<512x128xi32>
    %403 = arith.cmpi eq, %402, %18 : vector<512x128xi32>
    %cst_131 = arith.constant 0.000000e+00 : f32
    %404 = vector.shape_cast %395 : vector<1x128xf32> to vector<1x128xf32>
    %405 = vector.broadcast %404 : vector<1x128xf32> to vector<512x128xf32>
    %406 = vector.broadcast %cst_131 : f32 to vector<512x128xf32>
    %407 = arith.select %403, %405, %406 : vector<512x128xi1>, vector<512x128xf32>
    %408 = arith.addf %390, %407 : vector<512x128xf32>
    %cst_132 = arith.constant dense<0.000000e+00> : vector<16x128xf32>
    %409 = tpu.matmul %19, %408, %cst_132 {dimension_numbers = #tpu.dot_dimension_numbers<[1], [0], [0], [1], [0, 0, 1, 1], [], []>} : vector<16x512xf32>, vector<512x128xf32>, vector<16x128xf32> -> vector<16x128xf32>
    %410 = vector.extract_strided_slice %409 {offsets = [0, 0], sizes = [3, 128], strides = [1, 1]} : vector<16x128xf32> to vector<3x128xf32>
    %411 = vector.extract_strided_slice %409 {offsets = [3, 0], sizes = [3, 128], strides = [1, 1]} : vector<16x128xf32> to vector<3x128xf32>
    %412 = vector.extract_strided_slice %409 {offsets = [6, 0], sizes = [3, 128], strides = [1, 1]} : vector<16x128xf32> to vector<3x128xf32>
    %413 = vector.extract_strided_slice %409 {offsets = [9, 0], sizes = [1, 128], strides = [1, 1]} : vector<16x128xf32> to vector<1x128xf32>
    %cst_133 = arith.constant 0.000000e+00 : f32
    %414 = vector.broadcast %cst_133 : f32 to vector<1x128xf32>
    %415 = arith.subf %414, %413 : vector<1x128xf32>
    %416 = math.exp %415 : vector<1x128xf32>
    %cst_134 = arith.constant 1.000000e+00 : f32
    %417 = vector.broadcast %cst_134 : f32 to vector<1x128xf32>
    %418 = arith.addf %417, %416 : vector<1x128xf32>
    %cst_135 = arith.constant 1.000000e+00 : f32
    %419 = vector.broadcast %cst_135 : f32 to vector<1x128xf32>
    %420 = arith.divf %419, %418 : vector<1x128xf32>
    %c0_136 = arith.constant 0 : index
    %c0_137 = arith.constant 0 : index
    %421 = vector.load %arg5[%c0_136, %c0_137] : memref<1x128xf32, #tpu.memory_space<vmem>>, vector<1x128xf32>
    %cst_138 = arith.constant 1.000000e+00 : f32
    %422 = vector.broadcast %cst_138 : f32 to vector<1x128xf32>
    %423 = arith.subf %422, %421 : vector<1x128xf32>
    %cst_139 = arith.constant 3.000000e+00 : f32
    %424 = vector.broadcast %cst_139 : f32 to vector<1x128xf32>
    %425 = arith.mulf %424, %423 : vector<1x128xf32>
    %426 = arith.mulf %425, %423 : vector<1x128xf32>
    %427 = arith.mulf %426, %421 : vector<1x128xf32>
    %428 = vector.broadcast %427 : vector<1x128xf32> to vector<3x128xf32>
    %429 = arith.mulf %428, %410 : vector<3x128xf32>
    %cst_140 = arith.constant 3.000000e+00 : f32
    %430 = vector.broadcast %cst_140 : f32 to vector<1x128xf32>
    %431 = arith.mulf %430, %421 : vector<1x128xf32>
    %432 = arith.mulf %431, %421 : vector<1x128xf32>
    %433 = arith.mulf %432, %423 : vector<1x128xf32>
    %434 = vector.broadcast %433 : vector<1x128xf32> to vector<3x128xf32>
    %435 = arith.mulf %434, %411 : vector<3x128xf32>
    %436 = arith.addf %429, %435 : vector<3x128xf32>
    %437 = arith.mulf %421, %421 : vector<1x128xf32>
    %438 = arith.mulf %437, %421 : vector<1x128xf32>
    %439 = vector.broadcast %438 : vector<1x128xf32> to vector<3x128xf32>
    %440 = arith.mulf %439, %412 : vector<3x128xf32>
    %441 = arith.addf %436, %440 : vector<3x128xf32>
    %442 = vector.broadcast %420 : vector<1x128xf32> to vector<3x128xf32>
    %443 = arith.mulf %441, %442 : vector<3x128xf32>
    %444 = arith.addf %17, %443 : vector<3x128xf32>
    %c0_141 = arith.constant 0 : index
    %c0_142 = arith.constant 0 : index
    %445 = vector.load %arg8[%c0_141, %c0_142] : memref<8x512xf32, #tpu.memory_space<vmem>>, vector<8x512xf32>
    %446 = vector.extract_strided_slice %444 {offsets = [0, 0], sizes = [1, 128], strides = [1, 1]} : vector<3x128xf32> to vector<1x128xf32>
    %447 = vector.extract_strided_slice %444 {offsets = [1, 0], sizes = [1, 128], strides = [1, 1]} : vector<3x128xf32> to vector<1x128xf32>
    %448 = vector.extract_strided_slice %444 {offsets = [2, 0], sizes = [1, 128], strides = [1, 1]} : vector<3x128xf32> to vector<1x128xf32>
    %cst_143 = arith.constant -1.625000e-01 : f32
    %449 = vector.broadcast %cst_143 : f32 to vector<1x128xf32>
    %450 = arith.addf %446, %449 : vector<1x128xf32>
    %cst_144 = arith.constant -1.300000e+00 : f32
    %cst_145 = arith.constant 1.300000e+00 : f32
    %451 = vector.broadcast %cst_144 : f32 to vector<1x128xf32>
    %452 = arith.maximumf %451, %450 : vector<1x128xf32>
    %453 = vector.broadcast %cst_145 : f32 to vector<1x128xf32>
    %454 = arith.minimumf %453, %452 : vector<1x128xf32>
    %cst_146 = arith.constant 3.250000e-01 : f32
    %455 = vector.broadcast %cst_146 : f32 to vector<1x128xf32>
    %456 = arith.divf %454, %455 : vector<1x128xf32>
    %cst_147 = arith.constant 1.000000e-10 : f32
    %457 = vector.broadcast %cst_147 : f32 to vector<1x128xf32>
    %458 = arith.addf %456, %457 : vector<1x128xf32>
    %459 = math.floor %458 : vector<1x128xf32>
    %cst_148 = arith.constant 5.000000e-01 : f32
    %460 = vector.broadcast %cst_148 : f32 to vector<1x128xf32>
    %461 = arith.addf %459, %460 : vector<1x128xf32>
    %cst_149 = arith.constant 3.250000e-01 : f32
    %462 = vector.broadcast %cst_149 : f32 to vector<1x128xf32>
    %463 = arith.mulf %461, %462 : vector<1x128xf32>
    %cst_150 = arith.constant -1.137500e+00 : f32
    %cst_151 = arith.constant 1.137500e+00 : f32
    %464 = vector.broadcast %cst_150 : f32 to vector<1x128xf32>
    %465 = arith.maximumf %464, %463 : vector<1x128xf32>
    %466 = vector.broadcast %cst_151 : f32 to vector<1x128xf32>
    %467 = arith.minimumf %466, %465 : vector<1x128xf32>
    %cst_152 = arith.constant 3.250000e-01 : f32
    %468 = vector.broadcast %cst_152 : f32 to vector<1x128xf32>
    %469 = arith.divf %467, %468 : vector<1x128xf32>
    %cst_153 = arith.constant 1.000000e-10 : f32
    %470 = vector.broadcast %cst_153 : f32 to vector<1x128xf32>
    %471 = arith.addf %469, %470 : vector<1x128xf32>
    %472 = math.floor %471 : vector<1x128xf32>
    %cst_154 = arith.constant 4.000000e+00 : f32
    %473 = vector.broadcast %cst_154 : f32 to vector<1x128xf32>
    %474 = arith.addf %472, %473 : vector<1x128xf32>
    %cst_155 = arith.constant 0.000000e+00 : f32
    %475 = vector.broadcast %cst_155 : f32 to vector<1x128xf32>
    %476 = arith.cmpf oge, %474, %475 : vector<1x128xf32>
    %cst_156 = arith.constant 7.000000e+00 : f32
    %477 = vector.broadcast %cst_156 : f32 to vector<1x128xf32>
    %478 = arith.cmpf ole, %474, %477 : vector<1x128xf32>
    %479 = arith.andi %476, %478 : vector<1x128xi1>
    %480 = arith.extui %479 : vector<1x128xi1> to vector<1x128xi32>
    %481 = arith.sitofp %480 : vector<1x128xi32> to vector<1x128xf32>
    %cst_157 = arith.constant 0.000000e+00 : f32
    %cst_158 = arith.constant 7.000000e+00 : f32
    %482 = vector.broadcast %cst_157 : f32 to vector<1x128xf32>
    %483 = arith.maximumf %482, %474 : vector<1x128xf32>
    %484 = vector.broadcast %cst_158 : f32 to vector<1x128xf32>
    %485 = arith.minimumf %484, %483 : vector<1x128xf32>
    %486 = arith.fptosi %485 : vector<1x128xf32> to vector<1x128xi32>
    %cst_159 = arith.constant 1.625000e-01 : f32
    %487 = vector.broadcast %cst_159 : f32 to vector<1x128xf32>
    %488 = arith.addf %446, %487 : vector<1x128xf32>
    %cst_160 = arith.constant -1.300000e+00 : f32
    %cst_161 = arith.constant 1.300000e+00 : f32
    %489 = vector.broadcast %cst_160 : f32 to vector<1x128xf32>
    %490 = arith.maximumf %489, %488 : vector<1x128xf32>
    %491 = vector.broadcast %cst_161 : f32 to vector<1x128xf32>
    %492 = arith.minimumf %491, %490 : vector<1x128xf32>
    %cst_162 = arith.constant 3.250000e-01 : f32
    %493 = vector.broadcast %cst_162 : f32 to vector<1x128xf32>
    %494 = arith.divf %492, %493 : vector<1x128xf32>
    %cst_163 = arith.constant 1.000000e-10 : f32
    %495 = vector.broadcast %cst_163 : f32 to vector<1x128xf32>
    %496 = arith.addf %494, %495 : vector<1x128xf32>
    %497 = math.floor %496 : vector<1x128xf32>
    %cst_164 = arith.constant 5.000000e-01 : f32
    %498 = vector.broadcast %cst_164 : f32 to vector<1x128xf32>
    %499 = arith.addf %497, %498 : vector<1x128xf32>
    %cst_165 = arith.constant 3.250000e-01 : f32
    %500 = vector.broadcast %cst_165 : f32 to vector<1x128xf32>
    %501 = arith.mulf %499, %500 : vector<1x128xf32>
    %cst_166 = arith.constant -1.137500e+00 : f32
    %cst_167 = arith.constant 1.137500e+00 : f32
    %502 = vector.broadcast %cst_166 : f32 to vector<1x128xf32>
    %503 = arith.maximumf %502, %501 : vector<1x128xf32>
    %504 = vector.broadcast %cst_167 : f32 to vector<1x128xf32>
    %505 = arith.minimumf %504, %503 : vector<1x128xf32>
    %cst_168 = arith.constant 3.250000e-01 : f32
    %506 = vector.broadcast %cst_168 : f32 to vector<1x128xf32>
    %507 = arith.divf %505, %506 : vector<1x128xf32>
    %cst_169 = arith.constant 1.000000e-10 : f32
    %508 = vector.broadcast %cst_169 : f32 to vector<1x128xf32>
    %509 = arith.addf %507, %508 : vector<1x128xf32>
    %510 = math.floor %509 : vector<1x128xf32>
    %cst_170 = arith.constant 4.000000e+00 : f32
    %511 = vector.broadcast %cst_170 : f32 to vector<1x128xf32>
    %512 = arith.addf %510, %511 : vector<1x128xf32>
    %cst_171 = arith.constant 0.000000e+00 : f32
    %513 = vector.broadcast %cst_171 : f32 to vector<1x128xf32>
    %514 = arith.cmpf oge, %512, %513 : vector<1x128xf32>
    %cst_172 = arith.constant 7.000000e+00 : f32
    %515 = vector.broadcast %cst_172 : f32 to vector<1x128xf32>
    %516 = arith.cmpf ole, %512, %515 : vector<1x128xf32>
    %517 = arith.andi %514, %516 : vector<1x128xi1>
    %518 = arith.extui %517 : vector<1x128xi1> to vector<1x128xi32>
    %519 = arith.sitofp %518 : vector<1x128xi32> to vector<1x128xf32>
    %cst_173 = arith.constant 0.000000e+00 : f32
    %cst_174 = arith.constant 7.000000e+00 : f32
    %520 = vector.broadcast %cst_173 : f32 to vector<1x128xf32>
    %521 = arith.maximumf %520, %512 : vector<1x128xf32>
    %522 = vector.broadcast %cst_174 : f32 to vector<1x128xf32>
    %523 = arith.minimumf %522, %521 : vector<1x128xf32>
    %524 = arith.fptosi %523 : vector<1x128xf32> to vector<1x128xi32>
    %525 = arith.subf %446, %467 : vector<1x128xf32>
    %cst_175 = arith.constant 3.250000e-01 : f32
    %526 = vector.broadcast %cst_175 : f32 to vector<1x128xf32>
    %527 = arith.divf %525, %526 : vector<1x128xf32>
    %cst_176 = arith.constant 1.000000e+00 : f32
    %528 = vector.broadcast %cst_176 : f32 to vector<1x128xf32>
    %529 = arith.subf %528, %527 : vector<1x128xf32>
    %cst_177 = arith.constant -1.625000e-01 : f32
    %530 = vector.broadcast %cst_177 : f32 to vector<1x128xf32>
    %531 = arith.addf %447, %530 : vector<1x128xf32>
    %cst_178 = arith.constant -1.300000e+00 : f32
    %cst_179 = arith.constant 1.300000e+00 : f32
    %532 = vector.broadcast %cst_178 : f32 to vector<1x128xf32>
    %533 = arith.maximumf %532, %531 : vector<1x128xf32>
    %534 = vector.broadcast %cst_179 : f32 to vector<1x128xf32>
    %535 = arith.minimumf %534, %533 : vector<1x128xf32>
    %cst_180 = arith.constant 3.250000e-01 : f32
    %536 = vector.broadcast %cst_180 : f32 to vector<1x128xf32>
    %537 = arith.divf %535, %536 : vector<1x128xf32>
    %cst_181 = arith.constant 1.000000e-10 : f32
    %538 = vector.broadcast %cst_181 : f32 to vector<1x128xf32>
    %539 = arith.addf %537, %538 : vector<1x128xf32>
    %540 = math.floor %539 : vector<1x128xf32>
    %cst_182 = arith.constant 5.000000e-01 : f32
    %541 = vector.broadcast %cst_182 : f32 to vector<1x128xf32>
    %542 = arith.addf %540, %541 : vector<1x128xf32>
    %cst_183 = arith.constant 3.250000e-01 : f32
    %543 = vector.broadcast %cst_183 : f32 to vector<1x128xf32>
    %544 = arith.mulf %542, %543 : vector<1x128xf32>
    %cst_184 = arith.constant -1.137500e+00 : f32
    %cst_185 = arith.constant 1.137500e+00 : f32
    %545 = vector.broadcast %cst_184 : f32 to vector<1x128xf32>
    %546 = arith.maximumf %545, %544 : vector<1x128xf32>
    %547 = vector.broadcast %cst_185 : f32 to vector<1x128xf32>
    %548 = arith.minimumf %547, %546 : vector<1x128xf32>
    %cst_186 = arith.constant 3.250000e-01 : f32
    %549 = vector.broadcast %cst_186 : f32 to vector<1x128xf32>
    %550 = arith.divf %548, %549 : vector<1x128xf32>
    %cst_187 = arith.constant 1.000000e-10 : f32
    %551 = vector.broadcast %cst_187 : f32 to vector<1x128xf32>
    %552 = arith.addf %550, %551 : vector<1x128xf32>
    %553 = math.floor %552 : vector<1x128xf32>
    %cst_188 = arith.constant 4.000000e+00 : f32
    %554 = vector.broadcast %cst_188 : f32 to vector<1x128xf32>
    %555 = arith.addf %553, %554 : vector<1x128xf32>
    %cst_189 = arith.constant 0.000000e+00 : f32
    %556 = vector.broadcast %cst_189 : f32 to vector<1x128xf32>
    %557 = arith.cmpf oge, %555, %556 : vector<1x128xf32>
    %cst_190 = arith.constant 7.000000e+00 : f32
    %558 = vector.broadcast %cst_190 : f32 to vector<1x128xf32>
    %559 = arith.cmpf ole, %555, %558 : vector<1x128xf32>
    %560 = arith.andi %557, %559 : vector<1x128xi1>
    %561 = arith.extui %560 : vector<1x128xi1> to vector<1x128xi32>
    %562 = arith.sitofp %561 : vector<1x128xi32> to vector<1x128xf32>
    %cst_191 = arith.constant 0.000000e+00 : f32
    %cst_192 = arith.constant 7.000000e+00 : f32
    %563 = vector.broadcast %cst_191 : f32 to vector<1x128xf32>
    %564 = arith.maximumf %563, %555 : vector<1x128xf32>
    %565 = vector.broadcast %cst_192 : f32 to vector<1x128xf32>
    %566 = arith.minimumf %565, %564 : vector<1x128xf32>
    %567 = arith.fptosi %566 : vector<1x128xf32> to vector<1x128xi32>
    %cst_193 = arith.constant 1.625000e-01 : f32
    %568 = vector.broadcast %cst_193 : f32 to vector<1x128xf32>
    %569 = arith.addf %447, %568 : vector<1x128xf32>
    %cst_194 = arith.constant -1.300000e+00 : f32
    %cst_195 = arith.constant 1.300000e+00 : f32
    %570 = vector.broadcast %cst_194 : f32 to vector<1x128xf32>
    %571 = arith.maximumf %570, %569 : vector<1x128xf32>
    %572 = vector.broadcast %cst_195 : f32 to vector<1x128xf32>
    %573 = arith.minimumf %572, %571 : vector<1x128xf32>
    %cst_196 = arith.constant 3.250000e-01 : f32
    %574 = vector.broadcast %cst_196 : f32 to vector<1x128xf32>
    %575 = arith.divf %573, %574 : vector<1x128xf32>
    %cst_197 = arith.constant 1.000000e-10 : f32
    %576 = vector.broadcast %cst_197 : f32 to vector<1x128xf32>
    %577 = arith.addf %575, %576 : vector<1x128xf32>
    %578 = math.floor %577 : vector<1x128xf32>
    %cst_198 = arith.constant 5.000000e-01 : f32
    %579 = vector.broadcast %cst_198 : f32 to vector<1x128xf32>
    %580 = arith.addf %578, %579 : vector<1x128xf32>
    %cst_199 = arith.constant 3.250000e-01 : f32
    %581 = vector.broadcast %cst_199 : f32 to vector<1x128xf32>
    %582 = arith.mulf %580, %581 : vector<1x128xf32>
    %cst_200 = arith.constant -1.137500e+00 : f32
    %cst_201 = arith.constant 1.137500e+00 : f32
    %583 = vector.broadcast %cst_200 : f32 to vector<1x128xf32>
    %584 = arith.maximumf %583, %582 : vector<1x128xf32>
    %585 = vector.broadcast %cst_201 : f32 to vector<1x128xf32>
    %586 = arith.minimumf %585, %584 : vector<1x128xf32>
    %cst_202 = arith.constant 3.250000e-01 : f32
    %587 = vector.broadcast %cst_202 : f32 to vector<1x128xf32>
    %588 = arith.divf %586, %587 : vector<1x128xf32>
    %cst_203 = arith.constant 1.000000e-10 : f32
    %589 = vector.broadcast %cst_203 : f32 to vector<1x128xf32>
    %590 = arith.addf %588, %589 : vector<1x128xf32>
    %591 = math.floor %590 : vector<1x128xf32>
    %cst_204 = arith.constant 4.000000e+00 : f32
    %592 = vector.broadcast %cst_204 : f32 to vector<1x128xf32>
    %593 = arith.addf %591, %592 : vector<1x128xf32>
    %cst_205 = arith.constant 0.000000e+00 : f32
    %594 = vector.broadcast %cst_205 : f32 to vector<1x128xf32>
    %595 = arith.cmpf oge, %593, %594 : vector<1x128xf32>
    %cst_206 = arith.constant 7.000000e+00 : f32
    %596 = vector.broadcast %cst_206 : f32 to vector<1x128xf32>
    %597 = arith.cmpf ole, %593, %596 : vector<1x128xf32>
    %598 = arith.andi %595, %597 : vector<1x128xi1>
    %599 = arith.extui %598 : vector<1x128xi1> to vector<1x128xi32>
    %600 = arith.sitofp %599 : vector<1x128xi32> to vector<1x128xf32>
    %cst_207 = arith.constant 0.000000e+00 : f32
    %cst_208 = arith.constant 7.000000e+00 : f32
    %601 = vector.broadcast %cst_207 : f32 to vector<1x128xf32>
    %602 = arith.maximumf %601, %593 : vector<1x128xf32>
    %603 = vector.broadcast %cst_208 : f32 to vector<1x128xf32>
    %604 = arith.minimumf %603, %602 : vector<1x128xf32>
    %605 = arith.fptosi %604 : vector<1x128xf32> to vector<1x128xi32>
    %606 = arith.subf %447, %548 : vector<1x128xf32>
    %cst_209 = arith.constant 3.250000e-01 : f32
    %607 = vector.broadcast %cst_209 : f32 to vector<1x128xf32>
    %608 = arith.divf %606, %607 : vector<1x128xf32>
    %cst_210 = arith.constant 1.000000e+00 : f32
    %609 = vector.broadcast %cst_210 : f32 to vector<1x128xf32>
    %610 = arith.subf %609, %608 : vector<1x128xf32>
    %cst_211 = arith.constant -1.625000e-01 : f32
    %611 = vector.broadcast %cst_211 : f32 to vector<1x128xf32>
    %612 = arith.addf %448, %611 : vector<1x128xf32>
    %cst_212 = arith.constant -1.300000e+00 : f32
    %cst_213 = arith.constant 1.300000e+00 : f32
    %613 = vector.broadcast %cst_212 : f32 to vector<1x128xf32>
    %614 = arith.maximumf %613, %612 : vector<1x128xf32>
    %615 = vector.broadcast %cst_213 : f32 to vector<1x128xf32>
    %616 = arith.minimumf %615, %614 : vector<1x128xf32>
    %cst_214 = arith.constant 3.250000e-01 : f32
    %617 = vector.broadcast %cst_214 : f32 to vector<1x128xf32>
    %618 = arith.divf %616, %617 : vector<1x128xf32>
    %cst_215 = arith.constant 1.000000e-10 : f32
    %619 = vector.broadcast %cst_215 : f32 to vector<1x128xf32>
    %620 = arith.addf %618, %619 : vector<1x128xf32>
    %621 = math.floor %620 : vector<1x128xf32>
    %cst_216 = arith.constant 5.000000e-01 : f32
    %622 = vector.broadcast %cst_216 : f32 to vector<1x128xf32>
    %623 = arith.addf %621, %622 : vector<1x128xf32>
    %cst_217 = arith.constant 3.250000e-01 : f32
    %624 = vector.broadcast %cst_217 : f32 to vector<1x128xf32>
    %625 = arith.mulf %623, %624 : vector<1x128xf32>
    %cst_218 = arith.constant -1.137500e+00 : f32
    %cst_219 = arith.constant 1.137500e+00 : f32
    %626 = vector.broadcast %cst_218 : f32 to vector<1x128xf32>
    %627 = arith.maximumf %626, %625 : vector<1x128xf32>
    %628 = vector.broadcast %cst_219 : f32 to vector<1x128xf32>
    %629 = arith.minimumf %628, %627 : vector<1x128xf32>
    %cst_220 = arith.constant 3.250000e-01 : f32
    %630 = vector.broadcast %cst_220 : f32 to vector<1x128xf32>
    %631 = arith.divf %629, %630 : vector<1x128xf32>
    %cst_221 = arith.constant 1.000000e-10 : f32
    %632 = vector.broadcast %cst_221 : f32 to vector<1x128xf32>
    %633 = arith.addf %631, %632 : vector<1x128xf32>
    %634 = math.floor %633 : vector<1x128xf32>
    %cst_222 = arith.constant 4.000000e+00 : f32
    %635 = vector.broadcast %cst_222 : f32 to vector<1x128xf32>
    %636 = arith.addf %634, %635 : vector<1x128xf32>
    %cst_223 = arith.constant 0.000000e+00 : f32
    %637 = vector.broadcast %cst_223 : f32 to vector<1x128xf32>
    %638 = arith.cmpf oge, %636, %637 : vector<1x128xf32>
    %cst_224 = arith.constant 7.000000e+00 : f32
    %639 = vector.broadcast %cst_224 : f32 to vector<1x128xf32>
    %640 = arith.cmpf ole, %636, %639 : vector<1x128xf32>
    %641 = arith.andi %638, %640 : vector<1x128xi1>
    %642 = arith.extui %641 : vector<1x128xi1> to vector<1x128xi32>
    %643 = arith.sitofp %642 : vector<1x128xi32> to vector<1x128xf32>
    %cst_225 = arith.constant 0.000000e+00 : f32
    %cst_226 = arith.constant 7.000000e+00 : f32
    %644 = vector.broadcast %cst_225 : f32 to vector<1x128xf32>
    %645 = arith.maximumf %644, %636 : vector<1x128xf32>
    %646 = vector.broadcast %cst_226 : f32 to vector<1x128xf32>
    %647 = arith.minimumf %646, %645 : vector<1x128xf32>
    %648 = arith.fptosi %647 : vector<1x128xf32> to vector<1x128xi32>
    %cst_227 = arith.constant 1.625000e-01 : f32
    %649 = vector.broadcast %cst_227 : f32 to vector<1x128xf32>
    %650 = arith.addf %448, %649 : vector<1x128xf32>
    %cst_228 = arith.constant -1.300000e+00 : f32
    %cst_229 = arith.constant 1.300000e+00 : f32
    %651 = vector.broadcast %cst_228 : f32 to vector<1x128xf32>
    %652 = arith.maximumf %651, %650 : vector<1x128xf32>
    %653 = vector.broadcast %cst_229 : f32 to vector<1x128xf32>
    %654 = arith.minimumf %653, %652 : vector<1x128xf32>
    %cst_230 = arith.constant 3.250000e-01 : f32
    %655 = vector.broadcast %cst_230 : f32 to vector<1x128xf32>
    %656 = arith.divf %654, %655 : vector<1x128xf32>
    %cst_231 = arith.constant 1.000000e-10 : f32
    %657 = vector.broadcast %cst_231 : f32 to vector<1x128xf32>
    %658 = arith.addf %656, %657 : vector<1x128xf32>
    %659 = math.floor %658 : vector<1x128xf32>
    %cst_232 = arith.constant 5.000000e-01 : f32
    %660 = vector.broadcast %cst_232 : f32 to vector<1x128xf32>
    %661 = arith.addf %659, %660 : vector<1x128xf32>
    %cst_233 = arith.constant 3.250000e-01 : f32
    %662 = vector.broadcast %cst_233 : f32 to vector<1x128xf32>
    %663 = arith.mulf %661, %662 : vector<1x128xf32>
    %cst_234 = arith.constant -1.137500e+00 : f32
    %cst_235 = arith.constant 1.137500e+00 : f32
    %664 = vector.broadcast %cst_234 : f32 to vector<1x128xf32>
    %665 = arith.maximumf %664, %663 : vector<1x128xf32>
    %666 = vector.broadcast %cst_235 : f32 to vector<1x128xf32>
    %667 = arith.minimumf %666, %665 : vector<1x128xf32>
    %cst_236 = arith.constant 3.250000e-01 : f32
    %668 = vector.broadcast %cst_236 : f32 to vector<1x128xf32>
    %669 = arith.divf %667, %668 : vector<1x128xf32>
    %cst_237 = arith.constant 1.000000e-10 : f32
    %670 = vector.broadcast %cst_237 : f32 to vector<1x128xf32>
    %671 = arith.addf %669, %670 : vector<1x128xf32>
    %672 = math.floor %671 : vector<1x128xf32>
    %cst_238 = arith.constant 4.000000e+00 : f32
    %673 = vector.broadcast %cst_238 : f32 to vector<1x128xf32>
    %674 = arith.addf %672, %673 : vector<1x128xf32>
    %cst_239 = arith.constant 0.000000e+00 : f32
    %675 = vector.broadcast %cst_239 : f32 to vector<1x128xf32>
    %676 = arith.cmpf oge, %674, %675 : vector<1x128xf32>
    %cst_240 = arith.constant 7.000000e+00 : f32
    %677 = vector.broadcast %cst_240 : f32 to vector<1x128xf32>
    %678 = arith.cmpf ole, %674, %677 : vector<1x128xf32>
    %679 = arith.andi %676, %678 : vector<1x128xi1>
    %680 = arith.extui %679 : vector<1x128xi1> to vector<1x128xi32>
    %681 = arith.sitofp %680 : vector<1x128xi32> to vector<1x128xf32>
    %cst_241 = arith.constant 0.000000e+00 : f32
    %cst_242 = arith.constant 7.000000e+00 : f32
    %682 = vector.broadcast %cst_241 : f32 to vector<1x128xf32>
    %683 = arith.maximumf %682, %674 : vector<1x128xf32>
    %684 = vector.broadcast %cst_242 : f32 to vector<1x128xf32>
    %685 = arith.minimumf %684, %683 : vector<1x128xf32>
    %686 = arith.fptosi %685 : vector<1x128xf32> to vector<1x128xi32>
    %687 = arith.subf %448, %629 : vector<1x128xf32>
    %cst_243 = arith.constant 3.250000e-01 : f32
    %688 = vector.broadcast %cst_243 : f32 to vector<1x128xf32>
    %689 = arith.divf %687, %688 : vector<1x128xf32>
    %cst_244 = arith.constant 1.000000e+00 : f32
    %690 = vector.broadcast %cst_244 : f32 to vector<1x128xf32>
    %691 = arith.subf %690, %689 : vector<1x128xf32>
    %692 = arith.mulf %529, %610 : vector<1x128xf32>
    %693 = arith.mulf %692, %691 : vector<1x128xf32>
    %694 = arith.mulf %693, %481 : vector<1x128xf32>
    %695 = arith.mulf %694, %562 : vector<1x128xf32>
    %696 = arith.mulf %695, %643 : vector<1x128xf32>
    %c64_i32_245 = arith.constant 64 : i32
    %697 = vector.broadcast %c64_i32_245 : i32 to vector<1x128xi32>
    %698 = arith.muli %486, %697 : vector<1x128xi32>
    %c8_i32_246 = arith.constant 8 : i32
    %699 = vector.broadcast %c8_i32_246 : i32 to vector<1x128xi32>
    %700 = arith.muli %567, %699 : vector<1x128xi32>
    %701 = arith.addi %698, %700 : vector<1x128xi32>
    %702 = arith.addi %701, %648 : vector<1x128xi32>
    %703 = vector.broadcast %702 : vector<1x128xi32> to vector<512x128xi32>
    %704 = arith.cmpi eq, %703, %18 : vector<512x128xi32>
    %cst_247 = arith.constant 0.000000e+00 : f32
    %705 = vector.shape_cast %696 : vector<1x128xf32> to vector<1x128xf32>
    %706 = vector.broadcast %705 : vector<1x128xf32> to vector<512x128xf32>
    %707 = vector.broadcast %cst_247 : f32 to vector<512x128xf32>
    %708 = arith.select %704, %706, %707 : vector<512x128xi1>, vector<512x128xf32>
    %709 = arith.mulf %527, %610 : vector<1x128xf32>
    %710 = arith.mulf %709, %691 : vector<1x128xf32>
    %711 = arith.mulf %710, %519 : vector<1x128xf32>
    %712 = arith.mulf %711, %562 : vector<1x128xf32>
    %713 = arith.mulf %712, %643 : vector<1x128xf32>
    %c64_i32_248 = arith.constant 64 : i32
    %714 = vector.broadcast %c64_i32_248 : i32 to vector<1x128xi32>
    %715 = arith.muli %524, %714 : vector<1x128xi32>
    %c8_i32_249 = arith.constant 8 : i32
    %716 = vector.broadcast %c8_i32_249 : i32 to vector<1x128xi32>
    %717 = arith.muli %567, %716 : vector<1x128xi32>
    %718 = arith.addi %715, %717 : vector<1x128xi32>
    %719 = arith.addi %718, %648 : vector<1x128xi32>
    %720 = vector.broadcast %719 : vector<1x128xi32> to vector<512x128xi32>
    %721 = arith.cmpi eq, %720, %18 : vector<512x128xi32>
    %cst_250 = arith.constant 0.000000e+00 : f32
    %722 = vector.shape_cast %713 : vector<1x128xf32> to vector<1x128xf32>
    %723 = vector.broadcast %722 : vector<1x128xf32> to vector<512x128xf32>
    %724 = vector.broadcast %cst_250 : f32 to vector<512x128xf32>
    %725 = arith.select %721, %723, %724 : vector<512x128xi1>, vector<512x128xf32>
    %726 = arith.addf %708, %725 : vector<512x128xf32>
    %727 = arith.mulf %529, %608 : vector<1x128xf32>
    %728 = arith.mulf %727, %691 : vector<1x128xf32>
    %729 = arith.mulf %728, %481 : vector<1x128xf32>
    %730 = arith.mulf %729, %600 : vector<1x128xf32>
    %731 = arith.mulf %730, %643 : vector<1x128xf32>
    %c64_i32_251 = arith.constant 64 : i32
    %732 = vector.broadcast %c64_i32_251 : i32 to vector<1x128xi32>
    %733 = arith.muli %486, %732 : vector<1x128xi32>
    %c8_i32_252 = arith.constant 8 : i32
    %734 = vector.broadcast %c8_i32_252 : i32 to vector<1x128xi32>
    %735 = arith.muli %605, %734 : vector<1x128xi32>
    %736 = arith.addi %733, %735 : vector<1x128xi32>
    %737 = arith.addi %736, %648 : vector<1x128xi32>
    %738 = vector.broadcast %737 : vector<1x128xi32> to vector<512x128xi32>
    %739 = arith.cmpi eq, %738, %18 : vector<512x128xi32>
    %cst_253 = arith.constant 0.000000e+00 : f32
    %740 = vector.shape_cast %731 : vector<1x128xf32> to vector<1x128xf32>
    %741 = vector.broadcast %740 : vector<1x128xf32> to vector<512x128xf32>
    %742 = vector.broadcast %cst_253 : f32 to vector<512x128xf32>
    %743 = arith.select %739, %741, %742 : vector<512x128xi1>, vector<512x128xf32>
    %744 = arith.addf %726, %743 : vector<512x128xf32>
    %745 = arith.mulf %527, %608 : vector<1x128xf32>
    %746 = arith.mulf %745, %691 : vector<1x128xf32>
    %747 = arith.mulf %746, %519 : vector<1x128xf32>
    %748 = arith.mulf %747, %600 : vector<1x128xf32>
    %749 = arith.mulf %748, %643 : vector<1x128xf32>
    %c64_i32_254 = arith.constant 64 : i32
    %750 = vector.broadcast %c64_i32_254 : i32 to vector<1x128xi32>
    %751 = arith.muli %524, %750 : vector<1x128xi32>
    %c8_i32_255 = arith.constant 8 : i32
    %752 = vector.broadcast %c8_i32_255 : i32 to vector<1x128xi32>
    %753 = arith.muli %605, %752 : vector<1x128xi32>
    %754 = arith.addi %751, %753 : vector<1x128xi32>
    %755 = arith.addi %754, %648 : vector<1x128xi32>
    %756 = vector.broadcast %755 : vector<1x128xi32> to vector<512x128xi32>
    %757 = arith.cmpi eq, %756, %18 : vector<512x128xi32>
    %cst_256 = arith.constant 0.000000e+00 : f32
    %758 = vector.shape_cast %749 : vector<1x128xf32> to vector<1x128xf32>
    %759 = vector.broadcast %758 : vector<1x128xf32> to vector<512x128xf32>
    %760 = vector.broadcast %cst_256 : f32 to vector<512x128xf32>
    %761 = arith.select %757, %759, %760 : vector<512x128xi1>, vector<512x128xf32>
    %762 = arith.addf %744, %761 : vector<512x128xf32>
    %763 = arith.mulf %529, %610 : vector<1x128xf32>
    %764 = arith.mulf %763, %689 : vector<1x128xf32>
    %765 = arith.mulf %764, %481 : vector<1x128xf32>
    %766 = arith.mulf %765, %562 : vector<1x128xf32>
    %767 = arith.mulf %766, %681 : vector<1x128xf32>
    %c64_i32_257 = arith.constant 64 : i32
    %768 = vector.broadcast %c64_i32_257 : i32 to vector<1x128xi32>
    %769 = arith.muli %486, %768 : vector<1x128xi32>
    %c8_i32_258 = arith.constant 8 : i32
    %770 = vector.broadcast %c8_i32_258 : i32 to vector<1x128xi32>
    %771 = arith.muli %567, %770 : vector<1x128xi32>
    %772 = arith.addi %769, %771 : vector<1x128xi32>
    %773 = arith.addi %772, %686 : vector<1x128xi32>
    %774 = vector.broadcast %773 : vector<1x128xi32> to vector<512x128xi32>
    %775 = arith.cmpi eq, %774, %18 : vector<512x128xi32>
    %cst_259 = arith.constant 0.000000e+00 : f32
    %776 = vector.shape_cast %767 : vector<1x128xf32> to vector<1x128xf32>
    %777 = vector.broadcast %776 : vector<1x128xf32> to vector<512x128xf32>
    %778 = vector.broadcast %cst_259 : f32 to vector<512x128xf32>
    %779 = arith.select %775, %777, %778 : vector<512x128xi1>, vector<512x128xf32>
    %780 = arith.addf %762, %779 : vector<512x128xf32>
    %781 = arith.mulf %527, %610 : vector<1x128xf32>
    %782 = arith.mulf %781, %689 : vector<1x128xf32>
    %783 = arith.mulf %782, %519 : vector<1x128xf32>
    %784 = arith.mulf %783, %562 : vector<1x128xf32>
    %785 = arith.mulf %784, %681 : vector<1x128xf32>
    %c64_i32_260 = arith.constant 64 : i32
    %786 = vector.broadcast %c64_i32_260 : i32 to vector<1x128xi32>
    %787 = arith.muli %524, %786 : vector<1x128xi32>
    %c8_i32_261 = arith.constant 8 : i32
    %788 = vector.broadcast %c8_i32_261 : i32 to vector<1x128xi32>
    %789 = arith.muli %567, %788 : vector<1x128xi32>
    %790 = arith.addi %787, %789 : vector<1x128xi32>
    %791 = arith.addi %790, %686 : vector<1x128xi32>
    %792 = vector.broadcast %791 : vector<1x128xi32> to vector<512x128xi32>
    %793 = arith.cmpi eq, %792, %18 : vector<512x128xi32>
    %cst_262 = arith.constant 0.000000e+00 : f32
    %794 = vector.shape_cast %785 : vector<1x128xf32> to vector<1x128xf32>
    %795 = vector.broadcast %794 : vector<1x128xf32> to vector<512x128xf32>
    %796 = vector.broadcast %cst_262 : f32 to vector<512x128xf32>
    %797 = arith.select %793, %795, %796 : vector<512x128xi1>, vector<512x128xf32>
    %798 = arith.addf %780, %797 : vector<512x128xf32>
    %799 = arith.mulf %529, %608 : vector<1x128xf32>
    %800 = arith.mulf %799, %689 : vector<1x128xf32>
    %801 = arith.mulf %800, %481 : vector<1x128xf32>
    %802 = arith.mulf %801, %600 : vector<1x128xf32>
    %803 = arith.mulf %802, %681 : vector<1x128xf32>
    %c64_i32_263 = arith.constant 64 : i32
    %804 = vector.broadcast %c64_i32_263 : i32 to vector<1x128xi32>
    %805 = arith.muli %486, %804 : vector<1x128xi32>
    %c8_i32_264 = arith.constant 8 : i32
    %806 = vector.broadcast %c8_i32_264 : i32 to vector<1x128xi32>
    %807 = arith.muli %605, %806 : vector<1x128xi32>
    %808 = arith.addi %805, %807 : vector<1x128xi32>
    %809 = arith.addi %808, %686 : vector<1x128xi32>
    %810 = vector.broadcast %809 : vector<1x128xi32> to vector<512x128xi32>
    %811 = arith.cmpi eq, %810, %18 : vector<512x128xi32>
    %cst_265 = arith.constant 0.000000e+00 : f32
    %812 = vector.shape_cast %803 : vector<1x128xf32> to vector<1x128xf32>
    %813 = vector.broadcast %812 : vector<1x128xf32> to vector<512x128xf32>
    %814 = vector.broadcast %cst_265 : f32 to vector<512x128xf32>
    %815 = arith.select %811, %813, %814 : vector<512x128xi1>, vector<512x128xf32>
    %816 = arith.addf %798, %815 : vector<512x128xf32>
    %817 = arith.mulf %527, %608 : vector<1x128xf32>
    %818 = arith.mulf %817, %689 : vector<1x128xf32>
    %819 = arith.mulf %818, %519 : vector<1x128xf32>
    %820 = arith.mulf %819, %600 : vector<1x128xf32>
    %821 = arith.mulf %820, %681 : vector<1x128xf32>
    %c64_i32_266 = arith.constant 64 : i32
    %822 = vector.broadcast %c64_i32_266 : i32 to vector<1x128xi32>
    %823 = arith.muli %524, %822 : vector<1x128xi32>
    %c8_i32_267 = arith.constant 8 : i32
    %824 = vector.broadcast %c8_i32_267 : i32 to vector<1x128xi32>
    %825 = arith.muli %605, %824 : vector<1x128xi32>
    %826 = arith.addi %823, %825 : vector<1x128xi32>
    %827 = arith.addi %826, %686 : vector<1x128xi32>
    %828 = vector.broadcast %827 : vector<1x128xi32> to vector<512x128xi32>
    %829 = arith.cmpi eq, %828, %18 : vector<512x128xi32>
    %cst_268 = arith.constant 0.000000e+00 : f32
    %830 = vector.shape_cast %821 : vector<1x128xf32> to vector<1x128xf32>
    %831 = vector.broadcast %830 : vector<1x128xf32> to vector<512x128xf32>
    %832 = vector.broadcast %cst_268 : f32 to vector<512x128xf32>
    %833 = arith.select %829, %831, %832 : vector<512x128xi1>, vector<512x128xf32>
    %834 = arith.addf %816, %833 : vector<512x128xf32>
    %cst_269 = arith.constant dense<0.000000e+00> : vector<8x128xf32>
    %835 = tpu.matmul %445, %834, %cst_269 {dimension_numbers = #tpu.dot_dimension_numbers<[1], [0], [0], [1], [0, 0, 1, 1], [], []>} : vector<8x512xf32>, vector<512x128xf32>, vector<8x128xf32> -> vector<8x128xf32>
    %836 = vector.extract_strided_slice %835 {offsets = [0, 0], sizes = [1, 128], strides = [1, 1]} : vector<8x128xf32> to vector<1x128xf32>
    %837 = vector.extract_strided_slice %835 {offsets = [1, 0], sizes = [3, 128], strides = [1, 1]} : vector<8x128xf32> to vector<3x128xf32>
    %cst_270 = arith.constant 0.000000e+00 : f32
    %838 = vector.broadcast %cst_270 : f32 to vector<3x128xf32>
    %839 = arith.subf %838, %837 : vector<3x128xf32>
    %840 = math.exp %839 : vector<3x128xf32>
    %cst_271 = arith.constant 1.000000e+00 : f32
    %841 = vector.broadcast %cst_271 : f32 to vector<3x128xf32>
    %842 = arith.addf %841, %840 : vector<3x128xf32>
    %cst_272 = arith.constant 1.000000e+00 : f32
    %843 = vector.broadcast %cst_272 : f32 to vector<3x128xf32>
    %844 = arith.divf %843, %842 : vector<3x128xf32>
    %cst_273 = arith.constant 1.000000e+00 : f32
    %845 = vector.broadcast %cst_273 : f32 to vector<1x128xf32>
    %846 = arith.subf %836, %845 : vector<1x128xf32>
    %cst_274 = arith.constant 0.000000e+00 : f32
    %847 = vector.broadcast %cst_274 : f32 to vector<1x128xf32>
    %848 = arith.maximumf %846, %847 : vector<1x128xf32>
    %849 = math.absf %846 : vector<1x128xf32>
    %cst_275 = arith.constant 0.000000e+00 : f32
    %850 = vector.broadcast %cst_275 : f32 to vector<1x128xf32>
    %851 = arith.subf %850, %849 : vector<1x128xf32>
    %852 = math.exp %851 : vector<1x128xf32>
    %cst_276 = arith.constant 1.000000e+00 : f32
    %853 = vector.broadcast %cst_276 : f32 to vector<1x128xf32>
    %854 = arith.addf %853, %852 : vector<1x128xf32>
    %855 = math.log %854 : vector<1x128xf32>
    %856 = arith.addf %848, %855 : vector<1x128xf32>
    %cst_277 = arith.constant 0.000000e+00 : f32
    %857 = vector.broadcast %cst_277 : f32 to vector<1x128xf32>
    %858 = arith.subf %857, %856 : vector<1x128xf32>
    %c0_278 = arith.constant 0 : index
    %c0_279 = arith.constant 0 : index
    %859 = vector.load %arg6[%c0_278, %c0_279] : memref<1x128xf32, #tpu.memory_space<vmem>>, vector<1x128xf32>
    %860 = vector.broadcast %12 : f32 to vector<1x128xf32>
    %861 = arith.mulf %860, %859 : vector<1x128xf32>
    %862 = arith.mulf %858, %861 : vector<1x128xf32>
    %863 = math.exp %862 : vector<1x128xf32>
    %cst_280 = arith.constant 1.000000e+00 : f32
    %864 = vector.broadcast %cst_280 : f32 to vector<1x128xf32>
    %865 = arith.subf %864, %863 : vector<1x128xf32>
    %c0_281 = arith.constant 0 : index
    %c0_282 = arith.constant 0 : index
    %866 = vector.load %arg10[%c0_281, %c0_282] : memref<1x128xf32, #tpu.memory_space<vmem>>, vector<1x128xf32>
    %867 = arith.mulf %865, %866 : vector<1x128xf32>
    %c0_283 = arith.constant 0 : index
    %c0_284 = arith.constant 0 : index
    %868 = vector.load %arg9[%c0_283, %c0_284] : memref<3x128xf32, #tpu.memory_space<vmem>>, vector<3x128xf32>
    %869 = vector.broadcast %867 : vector<1x128xf32> to vector<3x128xf32>
    %870 = arith.mulf %869, %844 : vector<3x128xf32>
    %871 = arith.addf %868, %870 : vector<3x128xf32>
    %c0_285 = arith.constant 0 : index
    %c0_286 = arith.constant 0 : index
    %872 = vector.load %arg9[%c0_285, %c0_286] : memref<3x128xf32, #tpu.memory_space<vmem>>, vector<3x128xf32>
    tpu.vector_store %arg9[%c0_285, %c0_286], %871 {strides = array<i32>} : memref<3x128xf32, #tpu.memory_space<vmem>>, vector<3x128xf32>,
    %c0_287 = arith.constant 0 : index
    %c0_288 = arith.constant 0 : index
    %873 = vector.load %arg10[%c0_287, %c0_288] : memref<1x128xf32, #tpu.memory_space<vmem>>, vector<1x128xf32>
    %cst_289 = arith.constant 1.000000e+00 : f32
    %874 = vector.broadcast %cst_289 : f32 to vector<1x128xf32>
    %875 = arith.subf %874, %865 : vector<1x128xf32>
    %cst_290 = arith.constant 1.000000e-10 : f32
    %876 = vector.broadcast %cst_290 : f32 to vector<1x128xf32>
    %877 = arith.addf %875, %876 : vector<1x128xf32>
    %878 = arith.mulf %873, %877 : vector<1x128xf32>
    %c0_291 = arith.constant 0 : index
    %c0_292 = arith.constant 0 : index
    %879 = vector.load %arg10[%c0_291, %c0_292] : memref<1x128xf32, #tpu.memory_space<vmem>>, vector<1x128xf32>
    tpu.vector_store %arg10[%c0_291, %c0_292], %878 {strides = array<i32>} : memref<1x128xf32, #tpu.memory_space<vmem>>, vector<1x128xf32>,
    return
  }
  func.func @transform_0(%arg0: i32, %arg1: i32) -> i32 {
    %c0_i32 = arith.constant 0 : i32
    %c0_i32_0 = arith.constant 0 : i32
    return %c0_i32 : i32
  }
  func.func @transform_1(%arg0: i32, %arg1: i32) -> (i32, i32) {
    %c0_i32 = arith.constant 0 : i32
    %c0_i32_0 = arith.constant 0 : i32
    return %c0_i32, %arg0 : i32, i32
  }
  func.func @transform_2(%arg0: i32, %arg1: i32) -> (i32, i32) {
    %c0_i32 = arith.constant 0 : i32
    %c0_i32_0 = arith.constant 0 : i32
    return %c0_i32, %arg0 : i32, i32
  }
  func.func @transform_3(%arg0: i32, %arg1: i32) -> (i32, i32) {
    %c0_i32 = arith.constant 0 : i32
    %c0_i32_0 = arith.constant 0 : i32
    return %c0_i32, %arg0 : i32, i32
  }
  func.func @transform_4(%arg0: i32, %arg1: i32) -> (i32, i32) {
    %c0_i32 = arith.constant 0 : i32
    %c0_i32_0 = arith.constant 0 : i32
    return %c0_i32, %arg0 : i32, i32
  }
  func.func @transform_5(%arg0: i32, %arg1: i32) -> (i32, i32) {
    %c0_i32 = arith.constant 0 : i32
    %c0_i32_0 = arith.constant 0 : i32
    %c0_i32_1 = arith.constant 0 : i32
    return %c0_i32, %c0_i32_0 : i32, i32
  }
  func.func @transform_6(%arg0: i32, %arg1: i32) -> (i32, i32) {
    %c0_i32 = arith.constant 0 : i32
    %c0_i32_0 = arith.constant 0 : i32
    %c0_i32_1 = arith.constant 0 : i32
    return %c0_i32, %c0_i32_0 : i32, i32
  }
  func.func @transform_7(%arg0: i32, %arg1: i32) -> (i32, i32) {
    %c0_i32 = arith.constant 0 : i32
    %c0_i32_0 = arith.constant 0 : i32
    return %c0_i32, %arg0 : i32, i32
  }
}

</mosaic_0001>

<llo_original>
// kernel: tpu_custom_call.1
$region0: #{tpu_custom_call.1}
  #allocation0 [shape = 'u32[]', space=smem, size = 0x4, offset = 0x4, fixed_abs, tag = 'smem constant byte address 0x4 - core index']
  #allocation1 [shape = 'u32[144,128]{1,0:T(1,128)}', space=vmem, size = 0x12000, scoped, tag = 'internal scratch']
  #allocation2 [shape = 'f32[1,128]{1,0:T(1,128)}', space=vmem, size = 0x200, scoped, tag = 'scratch operand']
  %s0 = inlined_call_operand.hbm [shape: f32[8], index: 0, kind: input, shape index: {}]
  %s1 = inlined_call_operand.hbm [shape: f32[3,128], index: 1, kind: input, shape index: {}]
  %s2 = inlined_call_operand.vmem [shape: f32[3,128], index: 2, kind: input, shape index: {}]
  %s3 = inlined_call_operand.vmem [shape: f32[1,128], index: 3, kind: input, shape index: {}]
  %s4 = inlined_call_operand.vmem [shape: f32[1,128], index: 4, kind: input, shape index: {}]
  %s5 = inlined_call_operand.hbm [shape: f32[16,512], index: 5, kind: input, shape index: {}]
  %s6 = inlined_call_operand.hbm [shape: f32[8,512], index: 6, kind: input, shape index: {}]
  %s7 = inlined_call_operand.hbm [shape: f32[3,128], index: 7, kind: output, shape index: {}]
  %s8 = sld [smem:[#allocation0]]
  $region81: #{tpu_custom_call.1} parent=0
    _
  %s10 = ssub.s32 1, %s8
  %s11 = scalar_select 0, %s10, %s8
  $region1: #{tpu_custom_call.1} parent=0
    #allocation3 [shape = 'u8[512]{0}', space=smem, size = 0x200, scoped, tag = 'input window, operand 0, single buffered']
    #allocation4 [shape = 's32[2]{0}', space=sflag, size = 0x8, scoped, tag = 'scoped memory for tpu_custom_call.1']
    #allocation5 [shape = 's32[2]{0}', space=sflag, size = 0x8, scoped, tag = 'scoped memory for tpu_custom_call.1']
    #allocation6 [shape = 's32[2]{0}', space=sflag, size = 0x8, scoped, tag = 'scoped memory for tpu_custom_call.1']
    #allocation7 [shape = 'u8[2048]{0}', space=vmem, size = 0x800, scoped, tag = 'input window, operand 1, single buffered']
    #allocation8 [shape = 'u8[32768]{0}', space=vmem, size = 0x8000, scoped, tag = 'input window, operand 5, single buffered']
    #allocation9 [shape = 's32[1]{0}', space=sflag, size = 0x4, scoped, tag = 'scoped memory for tpu_custom_call.1']
    #allocation10 [shape = 'u8[16384]{0}', space=vmem, size = 0x4000, scoped, tag = 'input window, operand 6, single buffered']
    #allocation11 [shape = 'u8[2048]{0}', space=vmem, size = 0x800, scoped, tag = 'output window, operand 0, single buffered']
    %12 = vsyncpa [#allocation6], 0
    %13 = vsyncpa [#allocation4], 0
    %14 = vsyncpa [#allocation9], 0
    %15 = vsyncpa [#allocation5], 0
    loop: start=0, step=1, limit=10
    $region2: #{tpu_custom_call.1} parent=1 // loop_pre_header
      _
    $region3: #{tpu_custom_call.1} parent=1 // loop_header
      %s17 = sphi 0, %s21
      %p18 = scmp.ge.s32.totalorder %s17, 10
      %s24 = sphi 0, %s36
      %s25 = sphi 0, %s32
      %s26 = sphi 0, %s24
      %s27 = sphi 0, %s25
      %s28 = sphi 0, %s26
      %s29 = sphi 0, %s27
      %s37 = sphi 0, %s37
      %s39 = sphi 0, %s37
      %s40 = sphi 0, %s39
      %s54 = sphi 0, %s40
      %s60 = sphi 0, %s62
      %s63 = sphi 0, %s60
      %s64 = sphi 0, %s63
      %s80 = sphi 0, %s64
      %s86 = sphi 0, %s88
      %s89 = sphi 0, %s86
      %s90 = sphi 0, %s89
      %s106 = sphi 0, %s90
      %s112 = sphi 0, %s114
      %s115 = sphi 0, %s112
      %s116 = sphi 0, %s115
      %s132 = sphi 0, %s116
      %s138 = sphi 0, %s140
      %s141 = sphi 0, %s138
      %s142 = sphi 0, %s141
      %s158 = sphi 0, %s142
      %s162 = sphi 0, %s162
      %s164 = sphi 0, %s162
      %s165 = sphi 0, %s164
      %s179 = sphi 0, %s165
      %s183 = sphi 0, %s183
      %s185 = sphi 0, %s183
      %s186 = sphi 0, %s185
      %s200 = sphi 0, %s186
      %s206 = sphi 0, %s208
      %s209 = sphi 0, %s206
      %s210 = sphi 0, %s209
      %s226 = sphi 0, %s210
    $region4: #{tpu_custom_call.1} parent=1 // loop_header_branch
      %20 = sbr.rel (%p18) target = $region8
    $region5: #{tpu_custom_call.1} parent=1 // loop_body
      %s22 = ssub.s32 %s17, 1
      %s23 = ssub.s32 %s17, 2
      %s30 = sadd.s32 1, %s25
      %p31 = scmp.ge.s32.totalorder %s30, 8
      %s32 = scalar_select %p31, 0, %s30
      %s33 = sadd.s32 1, %s24
      %s34 = scalar_select %p31, %s33, %s24
      %p35 = scmp.ge.s32.totalorder %s34, 1
      %s36 = scalar_select %p35, 0, %s34
      %s38 = sadd.s32 %s37, 1
      %p41 = scmp.eq.s32.totalorder %s17, 7
      %p42 = scmp.ne.s32.totalorder %s37, %s39
      %p43 = scmp.eq.s32.totalorder %s17, 0
      %p44 = por %p42, %p43
      %p45 = scmp.ne.s32.totalorder %s37, %s39
      %p46 = scmp.eq.s32.totalorder %s22, 7
      %p47 = por %p45, %p46
      %p48 = scmp.ne.s32.totalorder %s39, %s40
      %p49 = scmp.eq.s32.totalorder %s22, 0
      %p50 = por %p48, %p49
      %p51 = scmp.ne.s32.totalorder %s39, %s40
      %p52 = scmp.eq.s32.totalorder %s23, 7
      %p53 = por %p51, %p52
      %p55 = scmp.ne.s32.totalorder %s40, %s54
      %p56 = scmp.eq.s32.totalorder %s23, 0
      %p57 = por %p55, %p56
      %s58 = ssub.s32 %s24, %s36
      %p59 = scmp.eq.s32.totalorder %s58, 0
      %s61 = sadd.s32 %s60, 1
      %s62 = scalar_select %p59, %s60, %s61
      %p65 = pneg %p59
      %p66 = scmp.eq.s32.totalorder %s17, 7
      %p67 = por %p65, %p66
      %p68 = scmp.ne.s32.totalorder %s60, %s63
      %p69 = scmp.eq.s32.totalorder %s17, 0
      %p70 = por %p68, %p69
      %p71 = scmp.ne.s32.totalorder %s60, %s63
      %p72 = scmp.eq.s32.totalorder %s22, 7
      %p73 = por %p71, %p72
      %p74 = scmp.ne.s32.totalorder %s63, %s64
      %p75 = scmp.eq.s32.totalorder %s22, 0
      %p76 = por %p74, %p75
      %p77 = scmp.ne.s32.totalorder %s63, %s64
      %p78 = scmp.eq.s32.totalorder %s23, 7
      %p79 = por %p77, %p78
      %p81 = scmp.ne.s32.totalorder %s64, %s80
      %p82 = scmp.eq.s32.totalorder %s23, 0
      %p83 = por %p81, %p82
      %s84 = ssub.s32 %s24, %s36
      %p85 = scmp.eq.s32.totalorder %s84, 0
      %s87 = sadd.s32 %s86, 1
      %s88 = scalar_select %p85, %s86, %s87
      %p91 = pneg %p85
      %p92 = scmp.eq.s32.totalorder %s17, 7
      %p93 = por %p91, %p92
      %p94 = scmp.ne.s32.totalorder %s86, %s89
      %p95 = scmp.eq.s32.totalorder %s17, 0
      %p96 = por %p94, %p95
      %p97 = scmp.ne.s32.totalorder %s86, %s89
      %p98 = scmp.eq.s32.totalorder %s22, 7
      %p99 = por %p97, %p98
      %p100 = scmp.ne.s32.totalorder %s89, %s90
      %p101 = scmp.eq.s32.totalorder %s22, 0
      %p102 = por %p100, %p101
      %p103 = scmp.ne.s32.totalorder %s89, %s90
      %p104 = scmp.eq.s32.totalorder %s23, 7
      %p105 = por %p103, %p104
      %p107 = scmp.ne.s32.totalorder %s90, %s106
      %p108 = scmp.eq.s32.totalorder %s23, 0
      %p109 = por %p107, %p108
      %s110 = ssub.s32 %s24, %s36
      %p111 = scmp.eq.s32.totalorder %s110, 0
      %s113 = sadd.s32 %s112, 1
      %s114 = scalar_select %p111, %s112, %s113
      %p117 = pneg %p111
      %p118 = scmp.eq.s32.totalorder %s17, 7
      %p119 = por %p117, %p118
      %p120 = scmp.ne.s32.totalorder %s112, %s115
      %p121 = scmp.eq.s32.totalorder %s17, 0
      %p122 = por %p120, %p121
      %p123 = scmp.ne.s32.totalorder %s112, %s115
      %p124 = scmp.eq.s32.totalorder %s22, 7
      %p125 = por %p123, %p124
      %p126 = scmp.ne.s32.totalorder %s115, %s116
      %p127 = scmp.eq.s32.totalorder %s22, 0
      %p128 = por %p126, %p127
      %p129 = scmp.ne.s32.totalorder %s115, %s116
      %p130 = scmp.eq.s32.totalorder %s23, 7
      %p131 = por %p129, %p130
      %p133 = scmp.ne.s32.totalorder %s116, %s132
      %p134 = scmp.eq.s32.totalorder %s23, 0
      %p135 = por %p133, %p134
      %s136 = ssub.s32 %s24, %s36
      %p137 = scmp.eq.s32.totalorder %s136, 0
      %s139 = sadd.s32 %s138, 1
      %s140 = scalar_select %p137, %s138, %s139
      %p143 = pneg %p137
      %p144 = scmp.eq.s32.totalorder %s17, 7
      %p145 = por %p143, %p144
      %p146 = scmp.ne.s32.totalorder %s138, %s141
      %p147 = scmp.eq.s32.totalorder %s17, 0
      %p148 = por %p146, %p147
      %p149 = scmp.ne.s32.totalorder %s138, %s141
      %p150 = scmp.eq.s32.totalorder %s22, 7
      %p151 = por %p149, %p150
      %p152 = scmp.ne.s32.totalorder %s141, %s142
      %p153 = scmp.eq.s32.totalorder %s22, 0
      %p154 = por %p152, %p153
      %p155 = scmp.ne.s32.totalorder %s141, %s142
      %p156 = scmp.eq.s32.totalorder %s23, 7
      %p157 = por %p155, %p156
      %p159 = scmp.ne.s32.totalorder %s142, %s158
      %p160 = scmp.eq.s32.totalorder %s23, 0
      %p161 = por %p159, %p160
      %s163 = sadd.s32 %s162, 1
      %p166 = scmp.eq.s32.totalorder %s17, 7
      %p167 = scmp.ne.s32.totalorder %s162, %s164
      %p168 = scmp.eq.s32.totalorder %s17, 0
      %p169 = por %p167, %p168
      %p170 = scmp.ne.s32.totalorder %s162, %s164
      %p171 = scmp.eq.s32.totalorder %s22, 7
      %p172 = por %p170, %p171
      %p173 = scmp.ne.s32.totalorder %s164, %s165
      %p174 = scmp.eq.s32.totalorder %s22, 0
      %p175 = por %p173, %p174
      %p176 = scmp.ne.s32.totalorder %s164, %s165
      %p177 = scmp.eq.s32.totalorder %s23, 7
      %p178 = por %p176, %p177
      %p180 = scmp.ne.s32.totalorder %s165, %s179
      %p181 = scmp.eq.s32.totalorder %s23, 0
      %p182 = por %p180, %p181
      %s184 = sadd.s32 %s183, 1
      %p187 = scmp.eq.s32.totalorder %s17, 7
      %p188 = scmp.ne.s32.totalorder %s183, %s185
      %p189 = scmp.eq.s32.totalorder %s17, 0
      %p190 = por %p188, %p189
      %p191 = scmp.ne.s32.totalorder %s183, %s185
      %p192 = scmp.eq.s32.totalorder %s22, 7
      %p193 = por %p191, %p192
      %p194 = scmp.ne.s32.totalorder %s185, %s186
      %p195 = scmp.eq.s32.totalorder %s22, 0
      %p196 = por %p194, %p195
      %p197 = scmp.ne.s32.totalorder %s185, %s186
      %p198 = scmp.eq.s32.totalorder %s23, 7
      %p199 = por %p197, %p198
      %p201 = scmp.ne.s32.totalorder %s186, %s200
      %p202 = scmp.eq.s32.totalorder %s23, 0
      %p203 = por %p201, %p202
      %s204 = ssub.s32 %s24, %s36
      %p205 = scmp.eq.s32.totalorder %s204, 0
      %s207 = sadd.s32 %s206, 1
      %s208 = scalar_select %p205, %s206, %s207
      %p211 = pneg %p205
      %p212 = scmp.eq.s32.totalorder %s17, 7
      %p213 = por %p211, %p212
      %p214 = scmp.ne.s32.totalorder %s206, %s209
      %p215 = scmp.eq.s32.totalorder %s17, 0
      %p216 = por %p214, %p215
      %p217 = scmp.ne.s32.totalorder %s206, %s209
      %p218 = scmp.eq.s32.totalorder %s22, 7
      %p219 = por %p217, %p218
      %p220 = scmp.ne.s32.totalorder %s209, %s210
      %p221 = scmp.eq.s32.totalorder %s22, 0
      %p222 = por %p220, %p221
      %p223 = scmp.ne.s32.totalorder %s209, %s210
      %p224 = scmp.eq.s32.totalorder %s23, 7
      %p225 = por %p223, %p224
      %p227 = scmp.ne.s32.totalorder %s210, %s226
      %p228 = scmp.eq.s32.totalorder %s23, 0
      %p229 = por %p227, %p228
      %p230 = scmp.le.s32.totalorder 1, %s17
      %p231 = scmp.lt.s32.totalorder %s17, 9
      %p232 = pnand %p230, %p231
      %p233 = pneg %p232
      // Predicated region
      $region9: #{tpu_custom_call.1} parent=5 // pred_check
        _
      $region10: #{tpu_custom_call.1} parent=5 // pred_check_branch
        %235 = sbr.rel (%p232) target = $region12
      $region11: #{tpu_custom_call.1} parent=5 // pred_region
        %s236 = ssub.s32 %s17, 1
        // Predicated region
        $region13: #{tpu_custom_call.1} parent=11 // pred_check
          %p237 = pneg %p50
        $region14: #{tpu_custom_call.1} parent=11 // pred_check_branch
          %239 = sbr.rel (%p237) target = $region16
        $region15: #{tpu_custom_call.1} parent=11 // pred_region
          %s241 = ssub.s32 16, 16
          %242 = vsyncadd [#allocation6], %s241
          %245 = dma.hbm_to_smem %s0, 16, [#allocation3], [#allocation6]
        $region16: #{tpu_custom_call.1} parent=11 // pred_fallthru
          _
        // Predicated region
        $region17: #{tpu_custom_call.1} parent=11 // pred_check
          %p246 = pneg %p76
        $region18: #{tpu_custom_call.1} parent=11 // pred_check_branch
          %248 = sbr.rel (%p246) target = $region20
        $region19: #{tpu_custom_call.1} parent=11 // pred_region
          %s250 = ssub.s32 64, 64
          %251 = vsyncadd [#allocation4], %s250
          %s252 = smul.addr %s26, 64
          %s253 = scalar_lea.hbm %s1, %s252
          %s255 = sshll.u32 [#allocation7], 4
          %s256 = int_to_ptr.vmem [resolvable:$true] %s255
          %258 = dma.hbm_to_vmem [thread:$0]  %s253, 64, %s256, [#allocation4]
        $region20: #{tpu_custom_call.1} parent=11 // pred_fallthru
          _
        // Predicated region
        $region21: #{tpu_custom_call.1} parent=11 // pred_check
          %p259 = pneg %p102
        $region22: #{tpu_custom_call.1} parent=11 // pred_check_branch
          %261 = sbr.rel (%p259) target = $region24
        $region23: #{tpu_custom_call.1} parent=11 // pred_region
          %p262 = scmp.lt.s32.totalorder %s26, 0
          %s263 = scalar_select %p262, %s26, 0
          %s264 = smul.addr %s263, 4
          %s265 = scalar_lea.vmem %s2, %s264
        $region24: #{tpu_custom_call.1} parent=11 // pred_fallthru
          _
        // Predicated region
        $region25: #{tpu_custom_call.1} parent=11 // pred_check
          %p266 = pneg %p128
        $region26: #{tpu_custom_call.1} parent=11 // pred_check_branch
          %268 = sbr.rel (%p266) target = $region28
        $region27: #{tpu_custom_call.1} parent=11 // pred_region
          %p269 = scmp.lt.s32.totalorder %s26, 0
          %s270 = scalar_select %p269, %s26, 0
          %s271 = scalar_lea.vmem %s3, %s270
        $region28: #{tpu_custom_call.1} parent=11 // pred_fallthru
          _
        // Predicated region
        $region29: #{tpu_custom_call.1} parent=11 // pred_check
          %p272 = pneg %p154
        $region30: #{tpu_custom_call.1} parent=11 // pred_check_branch
          %274 = sbr.rel (%p272) target = $region32
        $region31: #{tpu_custom_call.1} parent=11 // pred_region
          %p275 = scmp.lt.s32.totalorder %s26, 0
          %s276 = scalar_select %p275, %s26, 0
          %s277 = scalar_lea.vmem %s4, %s276
        $region32: #{tpu_custom_call.1} parent=11 // pred_fallthru
          _
        // Predicated region
        $region33: #{tpu_custom_call.1} parent=11 // pred_check
          %p278 = pneg %p175
        $region34: #{tpu_custom_call.1} parent=11 // pred_check_branch
          %280 = sbr.rel (%p278) target = $region36
        $region35: #{tpu_custom_call.1} parent=11 // pred_region
          %s282 = ssub.s32 1024, 1024
          %283 = vsyncadd [#allocation9], %s282
          %s284 = sshll.u32 [#allocation8], 4
          %s285 = int_to_ptr.vmem [resolvable:$true] %s284
          %290 = dma.hbm_to_vmem [thread:$0]  %s5, 1024, %s285, [#allocation9], 512, 512, 32
        $region36: #{tpu_custom_call.1} parent=11 // pred_fallthru
          _
        // Predicated region
        $region37: #{tpu_custom_call.1} parent=11 // pred_check
          %p291 = pneg %p196
        $region38: #{tpu_custom_call.1} parent=11 // pred_check_branch
          %293 = sbr.rel (%p291) target = $region40
        $region39: #{tpu_custom_call.1} parent=11 // pred_region
          %s295 = ssub.s32 512, 512
          %296 = vsyncadd [#allocation9], %s295
          %s298 = sshll.u32 [#allocation10], 4
          %s299 = int_to_ptr.vmem [resolvable:$true] %s298
          %301 = dma.hbm_to_vmem [thread:$0]  %s6, 512, %s299, [#allocation9]
        $region40: #{tpu_custom_call.1} parent=11 // pred_fallthru
          _
      $region12: #{tpu_custom_call.1} parent=5 // pred_fallthru
        _
      %p302 = scmp.lt.s32.totalorder %s17, 8
      // Predicated region
      $region41: #{tpu_custom_call.1} parent=5 // pred_check
        %p303 = pneg %p302
      $region42: #{tpu_custom_call.1} parent=5 // pred_check_branch
        %305 = sbr.rel (%p303) target = $region44
      $region43: #{tpu_custom_call.1} parent=5 // pred_region
        _
      $region44: #{tpu_custom_call.1} parent=5 // pred_fallthru
        _
      %p306 = scmp.le.s32.totalorder 1, %s17
      %p307 = scmp.lt.s32.totalorder %s17, 9
      %p308 = pnand %p306, %p307
      %p309 = pneg %p308
      // Predicated region
      $region45: #{tpu_custom_call.1} parent=5 // pred_check
        _
      $region46: #{tpu_custom_call.1} parent=5 // pred_check_branch
        %311 = sbr.rel (%p308) target = $region48
      $region47: #{tpu_custom_call.1} parent=5 // pred_region
        %s312 = ssub.s32 %s17, 1
        // Predicated region
        $region49: #{tpu_custom_call.1} parent=47 // pred_check
          %p313 = pneg %p50
        $region50: #{tpu_custom_call.1} parent=47 // pred_check_branch
          %315 = sbr.rel (%p313) target = $region52
        $region51: #{tpu_custom_call.1} parent=47 // pred_region
          %316 = dma.done [#allocation6], 16
        $region52: #{tpu_custom_call.1} parent=47 // pred_fallthru
          _
        // Predicated region
        $region53: #{tpu_custom_call.1} parent=47 // pred_check
          %p317 = pneg %p76
        $region54: #{tpu_custom_call.1} parent=47 // pred_check_branch
          %319 = sbr.rel (%p317) target = $region56
        $region55: #{tpu_custom_call.1} parent=47 // pred_region
          %320 = dma.done [#allocation4], 64
        $region56: #{tpu_custom_call.1} parent=47 // pred_fallthru
          _
        // Predicated region
        $region57: #{tpu_custom_call.1} parent=47 // pred_check
          %p321 = pneg %p175
        $region58: #{tpu_custom_call.1} parent=47 // pred_check_branch
          %323 = sbr.rel (%p321) target = $region60
        $region59: #{tpu_custom_call.1} parent=47 // pred_region
          %324 = dma.done [#allocation9], 1024
        $region60: #{tpu_custom_call.1} parent=47 // pred_fallthru
          _
        // Predicated region
        $region61: #{tpu_custom_call.1} parent=47 // pred_check
          %p325 = pneg %p196
        $region62: #{tpu_custom_call.1} parent=47 // pred_check_branch
          %327 = sbr.rel (%p325) target = $region64
        $region63: #{tpu_custom_call.1} parent=47 // pred_region
          %328 = dma.done [#allocation9], 512
        $region64: #{tpu_custom_call.1} parent=47 // pred_fallthru
          _
        %329 = sfence
        %p330 = pneg %p50
        %p331 = pneg %p47
        %p332 = pneg %p76
        %p333 = pneg %p73
        %p334 = scmp.lt.s32.totalorder %s26, 0
        %s335 = scalar_select %p334, %s26, 0
        %s336 = smul.addr %s335, 4
        %s337 = scalar_lea.vmem %s2, %s336
        %p338 = pneg %p102
        %p339 = pneg %p99
        %p340 = scmp.lt.s32.totalorder %s26, 0
        %s341 = scalar_select %p340, %s26, 0
        %s342 = scalar_lea.vmem %s3, %s341
        %p343 = pneg %p128
        %p344 = pneg %p125
        %p345 = scmp.lt.s32.totalorder %s26, 0
        %s346 = scalar_select %p345, %s26, 0
        %s347 = scalar_lea.vmem %s4, %s346
        %p348 = pneg %p154
        %p349 = pneg %p151
        %p350 = pneg %p175
        %p351 = pneg %p172
        %p352 = pneg %p196
        %p353 = pneg %p193
        %p354 = pneg %p222
        %p355 = pneg %p219
        %p356 = scmp.lt.s32.totalorder %s26, 0
        %s357 = scalar_select %p356, %s26, 0
        %s358 = smul.addr %s357, 4
        %s359 = scalar_lea.vmem %s2, %s358
        %p360 = scmp.lt.s32.totalorder %s26, 0
        %s361 = scalar_select %p360, %s26, 0
        %s362 = scalar_lea.vmem %s3, %s361
        %p363 = scmp.lt.s32.totalorder %s26, 0
        %s364 = scalar_select %p363, %s26, 0
        %s365 = scalar_lea.vmem %s4, %s364
        %p366 = scmp.eq.s32.totalorder %s27, 0
        // Predicated region
        $region65: #{tpu_custom_call.1} parent=47 // pred_check
          %p367 = pneg %p366
        $region66: #{tpu_custom_call.1} parent=47 // pred_check_branch
          %369 = sbr.rel (%p367) target = $region68
        $region67: #{tpu_custom_call.1} parent=47 // pred_region
          %370 = vst [vmem:[#allocation11] sm:$0x7] 0.0
          %371 = vst [vmem:[#allocation2] sm:$0x1] 1.0
        $region68: #{tpu_custom_call.1} parent=47 // pred_fallthru
          _
        %s372 = sld [smem:[#allocation3 + %s27]]
        %s373 = sadd.s32 %s27, 1
        %p374 = scmp.lt.s32.totalorder %s373, 7
        %s375 = scalar_select %p374, %s373, 7
        %s376 = sld [smem:[#allocation3 + %s375]]
        %p377 = scmp.eq.s32.totalorder %s27, 7
        %s378 = ssub.f32 %s376, %s372
        %s379 = scalar_select %p377, 1e+10, %s378
        %s380 = smax.f32 %s379, 1e-05
        %v381 = vld [vmem:[#allocation7] sm:$0x7]
        %v382 = vld [vmem:[%s359] sm:$0x7]
        %v383 = vstv %s372
        %v384 = vmul.f32 %v383, %v382
        %v385 = vadd.f32 %v381, %v384
        %v386 = vlaneseq
        %v387 = vshrl.u32 %v386, 7
        %v388 = vadd.s32 %v387, 8
        %v389 = vadd.s32 %v387, 16
        %v390 = vadd.s32 %v387, 24
        %v391 = vadd.s32 %v387, 32
        %v392 = vadd.s32 %v387, 40
        %v393 = vadd.s32 %v387, 48
        %v394 = vadd.s32 %v387, 56
        %v395 = vadd.s32 %v387, 64
        %v396 = vadd.s32 %v387, 72
        %v397 = vadd.s32 %v387, 80
        %v398 = vadd.s32 %v387, 88
        %v399 = vadd.s32 %v387, 96
        %v400 = vadd.s32 %v387, 104
        %v401 = vadd.s32 %v387, 112
        %v402 = vadd.s32 %v387, 120
        %v403 = vadd.s32 %v387, 128
        %v404 = vadd.s32 %v387, 136
        %v405 = vadd.s32 %v387, 144
        %v406 = vadd.s32 %v387, 152
        %v407 = vadd.s32 %v387, 160
        %v408 = vadd.s32 %v387, 168
        %v409 = vadd.s32 %v387, 176
        %v410 = vadd.s32 %v387, 184
        %v411 = vadd.s32 %v387, 192
        %v412 = vadd.s32 %v387, 200
        %v413 = vadd.s32 %v387, 208
        %v414 = vadd.s32 %v387, 216
        %v415 = vadd.s32 %v387, 224
        %v416 = vadd.s32 %v387, 232
        %v417 = vadd.s32 %v387, 240
        %v418 = vadd.s32 %v387, 248
        %v419 = vadd.s32 %v387, 256
        %v420 = vadd.s32 %v387, 264
        %v421 = vadd.s32 %v387, 272
        %v422 = vadd.s32 %v387, 280
        %v423 = vadd.s32 %v387, 288
        %v424 = vadd.s32 %v387, 296
        %v425 = vadd.s32 %v387, 304
        %v426 = vadd.s32 %v387, 312
        %v427 = vadd.s32 %v387, 320
        %v428 = vadd.s32 %v387, 328
        %v429 = vadd.s32 %v387, 336
        %v430 = vadd.s32 %v387, 344
        %v431 = vadd.s32 %v387, 352
        %v432 = vadd.s32 %v387, 360
        %v433 = vadd.s32 %v387, 368
        %v434 = vadd.s32 %v387, 376
        %v435 = vadd.s32 %v387, 384
        %v436 = vadd.s32 %v387, 392
        %v437 = vadd.s32 %v387, 400
        %v438 = vadd.s32 %v387, 408
        %v439 = vadd.s32 %v387, 416
        %v440 = vadd.s32 %v387, 424
        %v441 = vadd.s32 %v387, 432
        %v442 = vadd.s32 %v387, 440
        %v443 = vadd.s32 %v387, 448
        %v444 = vadd.s32 %v387, 456
        %v445 = vadd.s32 %v387, 464
        %v446 = vadd.s32 %v387, 472
        %v447 = vadd.s32 %v387, 480
        %v448 = vadd.s32 %v387, 488
        %v449 = vadd.s32 %v387, 496
        %v450 = vadd.s32 %v387, 504
        %v451 = vld [vmem:[#allocation8] sm:$0xff]
        %v452 = vld [vmem:[#allocation8 + $0x8] sm:$0xff]
        %v453 = vld [vmem:[#allocation8 + $0x10] sm:$0xff]
        %v454 = vld [vmem:[#allocation8 + $0x18] sm:$0xff]
        %v455 = vld [vmem:[#allocation8 + $0x20] sm:$0xff]
        %v456 = vld [vmem:[#allocation8 + $0x28] sm:$0xff]
        %v457 = vld [vmem:[#allocation8 + $0x30] sm:$0xff]
        %v458 = vld [vmem:[#allocation8 + $0x38] sm:$0xff]
        %v459 = vadd.f32 %v385, -0.1625
        %v460 = vmax.f32 %v459, -1.3
        %v461 = vmin.f32 %v460, 1.3
        %v462 = vrcp.pop 0.325
        %v463 = vmul.f32 %v461, %v462
        %v464 = vadd.f32 %v463, 1e-10
        %v465 = vfloor.f32 %v464
        %v466 = vadd.f32 %v465, 0.5
        %v467 = vmul.f32 %v466, 0.325
        %v468 = vmax.f32 %v467, -1.1375
        %v469 = vmin.f32 %v468, 1.1375
        %v470 = vmul.f32 %v469, %v462
        %v471 = vadd.f32 %v470, 1e-10
        %v472 = vfloor.f32 %v471
        %v473 = vadd.f32 %v472, 4.0
        %vm474 = vcmp.ge.f32.partialorder %v473, 0.0
        %vm475 = vcmp.le.f32.partialorder %v473, 7.0
        %vm476 = vmand %vm474, %vm475
        %v477 = vsel %vm476, 1, 0
        %v478 = vcvt.s32.f32 %v477
        %v479 = vmax.f32 %v473, 0.0
        %v480 = vmin.f32 %v479, 7.0
        %v481 = vcvt.f32.s32.to.zero.pseudo %v480
        %v482 = vadd.f32 %v385, 0.1625
        %v483 = vmax.f32 %v482, -1.3
        %v484 = vmin.f32 %v483, 1.3
        %v485 = vmul.f32 %v484, %v462
        %v486 = vadd.f32 %v485, 1e-10
        %v487 = vfloor.f32 %v486
        %v488 = vadd.f32 %v487, 0.5
        %v489 = vmul.f32 %v488, 0.325
        %v490 = vmax.f32 %v489, -1.1375
        %v491 = vmin.f32 %v490, 1.1375
        %v492 = vmul.f32 %v491, %v462
        %v493 = vadd.f32 %v492, 1e-10
        %v494 = vfloor.f32 %v493
        %v495 = vadd.f32 %v494, 4.0
        %vm496 = vcmp.ge.f32.partialorder %v495, 0.0
        %vm497 = vcmp.le.f32.partialorder %v495, 7.0
        %vm498 = vmand %vm496, %vm497
        %v499 = vsel %vm498, 1, 0
        %v500 = vcvt.s32.f32 %v499
        %v501 = vmax.f32 %v495, 0.0
        %v502 = vmin.f32 %v501, 7.0
        %v503 = vcvt.f32.s32.to.zero.pseudo %v502
        %v504 = vsub.f32 %v385, %v469
        %v505 = vmul.f32 %v504, %v462
        %v506 = vsub.f32 1.0, %v505
        %v508 = vrot.slane %v506, 1
        %v510 = vmul.f32 %v506, %v508
        %v511 = vrot.slane %v506, 2
        %v513 = vmul.f32 %v510, %v511
        %v514 = vmul.f32 %v513, %v478
        %v516 = vrot.slane %v478, 1
        %v518 = vmul.f32 %v514, %v516
        %v519 = vrot.slane %v478, 2
        %v521 = vmul.f32 %v518, %v519
        %v522 = vmul.u32 %v481, 64
        %v523 = vmul.u32 %v481, 8
        %v524 = vrot.slane %v523, 1
        %v525 = vadd.s32 %v522, %v524
        %v526 = vrot.slane %v481, 2
        %v527 = vadd.s32 %v525, %v526
        %v528 = vlaneseq
        %v529 = vshrl.u32 %v528, 7
        %v530 = vsub.s32 0, %v529
        %v531 = vrot.slane %v527, %v530
        %vm532 = vcmp.eq.s32.totalorder %v531, %v387
        %vm533 = vcmp.eq.s32.totalorder %v531, %v388
        %vm534 = vcmp.eq.s32.totalorder %v531, %v389
        %vm535 = vcmp.eq.s32.totalorder %v531, %v390
        %vm536 = vcmp.eq.s32.totalorder %v531, %v391
        %vm537 = vcmp.eq.s32.totalorder %v531, %v392
        %vm538 = vcmp.eq.s32.totalorder %v531, %v393
        %vm539 = vcmp.eq.s32.totalorder %v531, %v394
        %vm540 = vcmp.eq.s32.totalorder %v531, %v395
        %vm541 = vcmp.eq.s32.totalorder %v531, %v396
        %vm542 = vcmp.eq.s32.totalorder %v531, %v397
        %vm543 = vcmp.eq.s32.totalorder %v531, %v398
        %vm544 = vcmp.eq.s32.totalorder %v531, %v399
        %vm545 = vcmp.eq.s32.totalorder %v531, %v400
        %vm546 = vcmp.eq.s32.totalorder %v531, %v401
        %vm547 = vcmp.eq.s32.totalorder %v531, %v402
        %vm548 = vcmp.eq.s32.totalorder %v531, %v403
        %vm549 = vcmp.eq.s32.totalorder %v531, %v404
        %vm550 = vcmp.eq.s32.totalorder %v531, %v405
        %vm551 = vcmp.eq.s32.totalorder %v531, %v406
        %vm552 = vcmp.eq.s32.totalorder %v531, %v407
        %vm553 = vcmp.eq.s32.totalorder %v531, %v408
        %vm554 = vcmp.eq.s32.totalorder %v531, %v409
        %vm555 = vcmp.eq.s32.totalorder %v531, %v410
        %vm556 = vcmp.eq.s32.totalorder %v531, %v411
        %vm557 = vcmp.eq.s32.totalorder %v531, %v412
        %vm558 = vcmp.eq.s32.totalorder %v531, %v413
        %vm559 = vcmp.eq.s32.totalorder %v531, %v414
        %vm560 = vcmp.eq.s32.totalorder %v531, %v415
        %vm561 = vcmp.eq.s32.totalorder %v531, %v416
        %vm562 = vcmp.eq.s32.totalorder %v531, %v417
        %vm563 = vcmp.eq.s32.totalorder %v531, %v418
        %vm564 = vcmp.eq.s32.totalorder %v531, %v419
        %vm565 = vcmp.eq.s32.totalorder %v531, %v420
        %vm566 = vcmp.eq.s32.totalorder %v531, %v421
        %vm567 = vcmp.eq.s32.totalorder %v531, %v422
        %vm568 = vcmp.eq.s32.totalorder %v531, %v423
        %vm569 = vcmp.eq.s32.totalorder %v531, %v424
        %vm570 = vcmp.eq.s32.totalorder %v531, %v425
        %vm571 = vcmp.eq.s32.totalorder %v531, %v426
        %vm572 = vcmp.eq.s32.totalorder %v531, %v427
        %vm573 = vcmp.eq.s32.totalorder %v531, %v428
        %vm574 = vcmp.eq.s32.totalorder %v531, %v429
        %vm575 = vcmp.eq.s32.totalorder %v531, %v430
        %vm576 = vcmp.eq.s32.totalorder %v531, %v431
        %vm577 = vcmp.eq.s32.totalorder %v531, %v432
        %vm578 = vcmp.eq.s32.totalorder %v531, %v433
        %vm579 = vcmp.eq.s32.totalorder %v531, %v434
        %vm580 = vcmp.eq.s32.totalorder %v531, %v435
        %vm581 = vcmp.eq.s32.totalorder %v531, %v436
        %vm582 = vcmp.eq.s32.totalorder %v531, %v437
        %vm583 = vcmp.eq.s32.totalorder %v531, %v438
        %vm584 = vcmp.eq.s32.totalorder %v531, %v439
        %vm585 = vcmp.eq.s32.totalorder %v531, %v440
        %vm586 = vcmp.eq.s32.totalorder %v531, %v441
        %vm587 = vcmp.eq.s32.totalorder %v531, %v442
        %vm588 = vcmp.eq.s32.totalorder %v531, %v443
        %vm589 = vcmp.eq.s32.totalorder %v531, %v444
        %vm590 = vcmp.eq.s32.totalorder %v531, %v445
        %vm591 = vcmp.eq.s32.totalorder %v531, %v446
        %vm592 = vcmp.eq.s32.totalorder %v531, %v447
        %vm593 = vcmp.eq.s32.totalorder %v531, %v448
        %vm594 = vcmp.eq.s32.totalorder %v531, %v449
        %vm595 = vcmp.eq.s32.totalorder %v531, %v450
        %v596 = vlaneseq
        %v597 = vshrl.u32 %v596, 7
        %v598 = vsub.s32 0, %v597
        %v599 = vrot.slane %v521, %v598
        %v600 = vsel %vm532, %v599, 0.0
        %v601 = vsel %vm533, %v599, 0.0
        %v602 = vsel %vm534, %v599, 0.0
        %v603 = vsel %vm535, %v599, 0.0
        %v604 = vsel %vm536, %v599, 0.0
        %v605 = vsel %vm537, %v599, 0.0
        %v606 = vsel %vm538, %v599, 0.0
        %v607 = vsel %vm539, %v599, 0.0
        %v608 = vsel %vm540, %v599, 0.0
        %v609 = vsel %vm541, %v599, 0.0
        %v610 = vsel %vm542, %v599, 0.0
        %v611 = vsel %vm543, %v599, 0.0
        %v612 = vsel %vm544, %v599, 0.0
        %v613 = vsel %vm545, %v599, 0.0
        %v614 = vsel %vm546, %v599, 0.0
        %v615 = vsel %vm547, %v599, 0.0
        %v616 = vsel %vm548, %v599, 0.0
        %v617 = vsel %vm549, %v599, 0.0
        %v618 = vsel %vm550, %v599, 0.0
        %v619 = vsel %vm551, %v599, 0.0
        %v620 = vsel %vm552, %v599, 0.0
        %v621 = vsel %vm553, %v599, 0.0
        %v622 = vsel %vm554, %v599, 0.0
        %v623 = vsel %vm555, %v599, 0.0
        %v624 = vsel %vm556, %v599, 0.0
        %v625 = vsel %vm557, %v599, 0.0
        %v626 = vsel %vm558, %v599, 0.0
        %v627 = vsel %vm559, %v599, 0.0
        %v628 = vsel %vm560, %v599, 0.0
        %v629 = vsel %vm561, %v599, 0.0
        %v630 = vsel %vm562, %v599, 0.0
        %v631 = vsel %vm563, %v599, 0.0
        %v632 = vsel %vm564, %v599, 0.0
        %v633 = vsel %vm565, %v599, 0.0
        %v634 = vsel %vm566, %v599, 0.0
        %v635 = vsel %vm567, %v599, 0.0
        %v636 = vsel %vm568, %v599, 0.0
        %v637 = vsel %vm569, %v599, 0.0
        %v638 = vsel %vm570, %v599, 0.0
        %v639 = vsel %vm571, %v599, 0.0
        %v640 = vsel %vm572, %v599, 0.0
        %v641 = vsel %vm573, %v599, 0.0
        %v642 = vsel %vm574, %v599, 0.0
        %v643 = vsel %vm575, %v599, 0.0
        %v644 = vsel %vm576, %v599, 0.0
        %v645 = vsel %vm577, %v599, 0.0
        %v646 = vsel %vm578, %v599, 0.0
        %v647 = vsel %vm579, %v599, 0.0
        %v648 = vsel %vm580, %v599, 0.0
        %v649 = vsel %vm581, %v599, 0.0
        %v650 = vsel %vm582, %v599, 0.0
        %v651 = vsel %vm583, %v599, 0.0
        %v652 = vsel %vm584, %v599, 0.0
        %v653 = vsel %vm585, %v599, 0.0
        %v654 = vsel %vm586, %v599, 0.0
        %v655 = vsel %vm587, %v599, 0.0
        %v656 = vsel %vm588, %v599, 0.0
        %v657 = vsel %vm589, %v599, 0.0
        %v658 = vsel %vm590, %v599, 0.0
        %v659 = vsel %vm591, %v599, 0.0
        %v660 = vsel %vm592, %v599, 0.0
        %v661 = vsel %vm593, %v599, 0.0
        %v662 = vsel %vm594, %v599, 0.0
        %v663 = vsel %vm595, %v599, 0.0
        %v664 = vmul.f32 %v505, %v508
        %v665 = vmul.f32 %v664, %v511
        %v666 = vmul.f32 %v665, %v500
        %v667 = vmul.f32 %v666, %v516
        %v668 = vmul.f32 %v667, %v519
        %v669 = vmul.u32 %v503, 64
        %v670 = vadd.s32 %v669, %v524
        %v671 = vadd.s32 %v670, %v526
        %v672 = vlaneseq
        %v673 = vshrl.u32 %v672, 7
        %v674 = vsub.s32 0, %v673
        %v675 = vrot.slane %v671, %v674
        %vm676 = vcmp.eq.s32.totalorder %v675, %v387
        %vm677 = vcmp.eq.s32.totalorder %v675, %v388
        %vm678 = vcmp.eq.s32.totalorder %v675, %v389
        %vm679 = vcmp.eq.s32.totalorder %v675, %v390
        %vm680 = vcmp.eq.s32.totalorder %v675, %v391
        %vm681 = vcmp.eq.s32.totalorder %v675, %v392
        %vm682 = vcmp.eq.s32.totalorder %v675, %v393
        %vm683 = vcmp.eq.s32.totalorder %v675, %v394
        %vm684 = vcmp.eq.s32.totalorder %v675, %v395
        %vm685 = vcmp.eq.s32.totalorder %v675, %v396
        %vm686 = vcmp.eq.s32.totalorder %v675, %v397
        %vm687 = vcmp.eq.s32.totalorder %v675, %v398
        %vm688 = vcmp.eq.s32.totalorder %v675, %v399
        %vm689 = vcmp.eq.s32.totalorder %v675, %v400
        %vm690 = vcmp.eq.s32.totalorder %v675, %v401
        %vm691 = vcmp.eq.s32.totalorder %v675, %v402
        %vm692 = vcmp.eq.s32.totalorder %v675, %v403
        %vm693 = vcmp.eq.s32.totalorder %v675, %v404
        %vm694 = vcmp.eq.s32.totalorder %v675, %v405
        %vm695 = vcmp.eq.s32.totalorder %v675, %v406
        %vm696 = vcmp.eq.s32.totalorder %v675, %v407
        %vm697 = vcmp.eq.s32.totalorder %v675, %v408
        %vm698 = vcmp.eq.s32.totalorder %v675, %v409
        %vm699 = vcmp.eq.s32.totalorder %v675, %v410
        %vm700 = vcmp.eq.s32.totalorder %v675, %v411
        %vm701 = vcmp.eq.s32.totalorder %v675, %v412
        %vm702 = vcmp.eq.s32.totalorder %v675, %v413
        %vm703 = vcmp.eq.s32.totalorder %v675, %v414
        %vm704 = vcmp.eq.s32.totalorder %v675, %v415
        %vm705 = vcmp.eq.s32.totalorder %v675, %v416
        %vm706 = vcmp.eq.s32.totalorder %v675, %v417
        %vm707 = vcmp.eq.s32.totalorder %v675, %v418
        %vm708 = vcmp.eq.s32.totalorder %v675, %v419
        %vm709 = vcmp.eq.s32.totalorder %v675, %v420
        %vm710 = vcmp.eq.s32.totalorder %v675, %v421
        %vm711 = vcmp.eq.s32.totalorder %v675, %v422
        %vm712 = vcmp.eq.s32.totalorder %v675, %v423
        %vm713 = vcmp.eq.s32.totalorder %v675, %v424
        %vm714 = vcmp.eq.s32.totalorder %v675, %v425
        %vm715 = vcmp.eq.s32.totalorder %v675, %v426
        %vm716 = vcmp.eq.s32.totalorder %v675, %v427
        %vm717 = vcmp.eq.s32.totalorder %v675, %v428
        %vm718 = vcmp.eq.s32.totalorder %v675, %v429
        %vm719 = vcmp.eq.s32.totalorder %v675, %v430
        %vm720 = vcmp.eq.s32.totalorder %v675, %v431
        %vm721 = vcmp.eq.s32.totalorder %v675, %v432
        %vm722 = vcmp.eq.s32.totalorder %v675, %v433
        %vm723 = vcmp.eq.s32.totalorder %v675, %v434
        %vm724 = vcmp.eq.s32.totalorder %v675, %v435
        %vm725 = vcmp.eq.s32.totalorder %v675, %v436
        %vm726 = vcmp.eq.s32.totalorder %v675, %v437
        %vm727 = vcmp.eq.s32.totalorder %v675, %v438
        %vm728 = vcmp.eq.s32.totalorder %v675, %v439
        %vm729 = vcmp.eq.s32.totalorder %v675, %v440
        %vm730 = vcmp.eq.s32.totalorder %v675, %v441
        %vm731 = vcmp.eq.s32.totalorder %v675, %v442
        %vm732 = vcmp.eq.s32.totalorder %v675, %v443
        %vm733 = vcmp.eq.s32.totalorder %v675, %v444
        %vm734 = vcmp.eq.s32.totalorder %v675, %v445
        %vm735 = vcmp.eq.s32.totalorder %v675, %v446
        %vm736 = vcmp.eq.s32.totalorder %v675, %v447
        %vm737 = vcmp.eq.s32.totalorder %v675, %v448
        %vm738 = vcmp.eq.s32.totalorder %v675, %v449
        %vm739 = vcmp.eq.s32.totalorder %v675, %v450
        %v740 = vlaneseq
        %v741 = vshrl.u32 %v740, 7
        %v742 = vsub.s32 0, %v741
        %v743 = vrot.slane %v668, %v742
        %v744 = vsel %vm676, %v743, 0.0
        %v745 = vsel %vm677, %v743, 0.0
        %v746 = vsel %vm678, %v743, 0.0
        %v747 = vsel %vm679, %v743, 0.0
        %v748 = vsel %vm680, %v743, 0.0
        %v749 = vsel %vm681, %v743, 0.0
        %v750 = vsel %vm682, %v743, 0.0
        %v751 = vsel %vm683, %v743, 0.0
        %v752 = vsel %vm684, %v743, 0.0
        %v753 = vsel %vm685, %v743, 0.0
        %v754 = vsel %vm686, %v743, 0.0
        %v755 = vsel %vm687, %v743, 0.0
        %v756 = vsel %vm688, %v743, 0.0
        %v757 = vsel %vm689, %v743, 0.0
        %v758 = vsel %vm690, %v743, 0.0
        %v759 = vsel %vm691, %v743, 0.0
        %v760 = vsel %vm692, %v743, 0.0
        %v761 = vsel %vm693, %v743, 0.0
        %v762 = vsel %vm694, %v743, 0.0
        %v763 = vsel %vm695, %v743, 0.0
        %v764 = vsel %vm696, %v743, 0.0
        %v765 = vsel %vm697, %v743, 0.0
        %v766 = vsel %vm698, %v743, 0.0
        %v767 = vsel %vm699, %v743, 0.0
        %v768 = vsel %vm700, %v743, 0.0
        %v769 = vsel %vm701, %v743, 0.0
        %v770 = vsel %vm702, %v743, 0.0
        %v771 = vsel %vm703, %v743, 0.0
        %v772 = vsel %vm704, %v743, 0.0
        %v773 = vsel %vm705, %v743, 0.0
        %v774 = vsel %vm706, %v743, 0.0
        %v775 = vsel %vm707, %v743, 0.0
        %v776 = vsel %vm708, %v743, 0.0
        %v777 = vsel %vm709, %v743, 0.0
        %v778 = vsel %vm710, %v743, 0.0
        %v779 = vsel %vm711, %v743, 0.0
        %v780 = vsel %vm712, %v743, 0.0
        %v781 = vsel %vm713, %v743, 0.0
        %v782 = vsel %vm714, %v743, 0.0
        %v783 = vsel %vm715, %v743, 0.0
        %v784 = vsel %vm716, %v743, 0.0
        %v785 = vsel %vm717, %v743, 0.0
        %v786 = vsel %vm718, %v743, 0.0
        %v787 = vsel %vm719, %v743, 0.0
        %v788 = vsel %vm720, %v743, 0.0
        %v789 = vsel %vm721, %v743, 0.0
        %v790 = vsel %vm722, %v743, 0.0
        %v791 = vsel %vm723, %v743, 0.0
        %v792 = vsel %vm724, %v743, 0.0
        %v793 = vsel %vm725, %v743, 0.0
        %v794 = vsel %vm726, %v743, 0.0
        %v795 = vsel %vm727, %v743, 0.0
        %v796 = vsel %vm728, %v743, 0.0
        %v797 = vsel %vm729, %v743, 0.0
        %v798 = vsel %vm730, %v743, 0.0
        %v799 = vsel %vm731, %v743, 0.0
        %v800 = vsel %vm732, %v743, 0.0
        %v801 = vsel %vm733, %v743, 0.0
        %v802 = vsel %vm734, %v743, 0.0
        %v803 = vsel %vm735, %v743, 0.0
        %v804 = vsel %vm736, %v743, 0.0
        %v805 = vsel %vm737, %v743, 0.0
        %v806 = vsel %vm738, %v743, 0.0
        %v807 = vsel %vm739, %v743, 0.0
        %v808 = vadd.f32 %v600, %v744
        %v809 = vadd.f32 %v601, %v745
        %v810 = vadd.f32 %v602, %v746
        %v811 = vadd.f32 %v603, %v747
        %v812 = vadd.f32 %v604, %v748
        %v813 = vadd.f32 %v605, %v749
        %v814 = vadd.f32 %v606, %v750
        %v815 = vadd.f32 %v607, %v751
        %v816 = vadd.f32 %v608, %v752
        %v817 = vadd.f32 %v609, %v753
        %v818 = vadd.f32 %v610, %v754
        %v819 = vadd.f32 %v611, %v755
        %v820 = vadd.f32 %v612, %v756
        %v821 = vadd.f32 %v613, %v757
        %v822 = vadd.f32 %v614, %v758
        %v823 = vadd.f32 %v615, %v759
        %v824 = vadd.f32 %v616, %v760
        %v825 = vadd.f32 %v617, %v761
        %v826 = vadd.f32 %v618, %v762
        %v827 = vadd.f32 %v619, %v763
        %v828 = vadd.f32 %v620, %v764
        %v829 = vadd.f32 %v621, %v765
        %v830 = vadd.f32 %v622, %v766
        %v831 = vadd.f32 %v623, %v767
        %v832 = vadd.f32 %v624, %v768
        %v833 = vadd.f32 %v625, %v769
        %v834 = vadd.f32 %v626, %v770
        %v835 = vadd.f32 %v627, %v771
        %v836 = vadd.f32 %v628, %v772
        %v837 = vadd.f32 %v629, %v773
        %v838 = vadd.f32 %v630, %v774
        %v839 = vadd.f32 %v631, %v775
        %v840 = vadd.f32 %v632, %v776
        %v841 = vadd.f32 %v633, %v777
        %v842 = vadd.f32 %v634, %v778
        %v843 = vadd.f32 %v635, %v779
        %v844 = vadd.f32 %v636, %v780
        %v845 = vadd.f32 %v637, %v781
        %v846 = vadd.f32 %v638, %v782
        %v847 = vadd.f32 %v639, %v783
        %v848 = vadd.f32 %v640, %v784
        %v849 = vadd.f32 %v641, %v785
        %v850 = vadd.f32 %v642, %v786
        %v851 = vadd.f32 %v643, %v787
        %v852 = vadd.f32 %v644, %v788
        %v853 = vadd.f32 %v645, %v789
        %v854 = vadd.f32 %v646, %v790
        %v855 = vadd.f32 %v647, %v791
        %v856 = vadd.f32 %v648, %v792
        %v857 = vadd.f32 %v649, %v793
        %v858 = vadd.f32 %v650, %v794
        %v859 = vadd.f32 %v651, %v795
        %v860 = vadd.f32 %v652, %v796
        %v861 = vadd.f32 %v653, %v797
        %v862 = vadd.f32 %v654, %v798
        %v863 = vadd.f32 %v655, %v799
        %v864 = vadd.f32 %v656, %v800
        %v865 = vadd.f32 %v657, %v801
        %v866 = vadd.f32 %v658, %v802
        %v867 = vadd.f32 %v659, %v803
        %v868 = vadd.f32 %v660, %v804
        %v869 = vadd.f32 %v661, %v805
        %v870 = vadd.f32 %v662, %v806
        %v871 = vadd.f32 %v663, %v807
        %v873 = vrot.slane %v505, 1
        %v875 = vmul.f32 %v506, %v873
        %v876 = vmul.f32 %v875, %v511
        %v877 = vmul.f32 %v876, %v478
        %v879 = vrot.slane %v500, 1
        %v881 = vmul.f32 %v877, %v879
        %v882 = vmul.f32 %v881, %v519
        %v883 = vmul.u32 %v503, 8
        %v884 = vrot.slane %v883, 1
        %v885 = vadd.s32 %v522, %v884
        %v886 = vadd.s32 %v885, %v526
        %v887 = vlaneseq
        %v888 = vshrl.u32 %v887, 7
        %v889 = vsub.s32 0, %v888
        %v890 = vrot.slane %v886, %v889
        %vm891 = vcmp.eq.s32.totalorder %v890, %v387
        %vm892 = vcmp.eq.s32.totalorder %v890, %v388
        %vm893 = vcmp.eq.s32.totalorder %v890, %v389
        %vm894 = vcmp.eq.s32.totalorder %v890, %v390
        %vm895 = vcmp.eq.s32.totalorder %v890, %v391
        %vm896 = vcmp.eq.s32.totalorder %v890, %v392
        %vm897 = vcmp.eq.s32.totalorder %v890, %v393
        %vm898 = vcmp.eq.s32.totalorder %v890, %v394
        %vm899 = vcmp.eq.s32.totalorder %v890, %v395
        %vm900 = vcmp.eq.s32.totalorder %v890, %v396
        %vm901 = vcmp.eq.s32.totalorder %v890, %v397
        %vm902 = vcmp.eq.s32.totalorder %v890, %v398
        %vm903 = vcmp.eq.s32.totalorder %v890, %v399
        %vm904 = vcmp.eq.s32.totalorder %v890, %v400
        %vm905 = vcmp.eq.s32.totalorder %v890, %v401
        %vm906 = vcmp.eq.s32.totalorder %v890, %v402
        %vm907 = vcmp.eq.s32.totalorder %v890, %v403
        %vm908 = vcmp.eq.s32.totalorder %v890, %v404
        %vm909 = vcmp.eq.s32.totalorder %v890, %v405
        %vm910 = vcmp.eq.s32.totalorder %v890, %v406
        %vm911 = vcmp.eq.s32.totalorder %v890, %v407
        %vm912 = vcmp.eq.s32.totalorder %v890, %v408
        %vm913 = vcmp.eq.s32.totalorder %v890, %v409
        %vm914 = vcmp.eq.s32.totalorder %v890, %v410
        %vm915 = vcmp.eq.s32.totalorder %v890, %v411
        %vm916 = vcmp.eq.s32.totalorder %v890, %v412
        %vm917 = vcmp.eq.s32.totalorder %v890, %v413
        %vm918 = vcmp.eq.s32.totalorder %v890, %v414
        %vm919 = vcmp.eq.s32.totalorder %v890, %v415
        %vm920 = vcmp.eq.s32.totalorder %v890, %v416
        %vm921 = vcmp.eq.s32.totalorder %v890, %v417
        %vm922 = vcmp.eq.s32.totalorder %v890, %v418
        %vm923 = vcmp.eq.s32.totalorder %v890, %v419
        %vm924 = vcmp.eq.s32.totalorder %v890, %v420
        %vm925 = vcmp.eq.s32.totalorder %v890, %v421
        %vm926 = vcmp.eq.s32.totalorder %v890, %v422
        %vm927 = vcmp.eq.s32.totalorder %v890, %v423
        %vm928 = vcmp.eq.s32.totalorder %v890, %v424
        %vm929 = vcmp.eq.s32.totalorder %v890, %v425
        %vm930 = vcmp.eq.s32.totalorder %v890, %v426
        %vm931 = vcmp.eq.s32.totalorder %v890, %v427
        %vm932 = vcmp.eq.s32.totalorder %v890, %v428
        %vm933 = vcmp.eq.s32.totalorder %v890, %v429
        %vm934 = vcmp.eq.s32.totalorder %v890, %v430
        %vm935 = vcmp.eq.s32.totalorder %v890, %v431
        %vm936 = vcmp.eq.s32.totalorder %v890, %v432
        %vm937 = vcmp.eq.s32.totalorder %v890, %v433
        %vm938 = vcmp.eq.s32.totalorder %v890, %v434
        %vm939 = vcmp.eq.s32.totalorder %v890, %v435
        %vm940 = vcmp.eq.s32.totalorder %v890, %v436
        %vm941 = vcmp.eq.s32.totalorder %v890, %v437
        %vm942 = vcmp.eq.s32.totalorder %v890, %v438
        %vm943 = vcmp.eq.s32.totalorder %v890, %v439
        %vm944 = vcmp.eq.s32.totalorder %v890, %v440
        %vm945 = vcmp.eq.s32.totalorder %v890, %v441
        %vm946 = vcmp.eq.s32.totalorder %v890, %v442
        %vm947 = vcmp.eq.s32.totalorder %v890, %v443
        %vm948 = vcmp.eq.s32.totalorder %v890, %v444
        %vm949 = vcmp.eq.s32.totalorder %v890, %v445
        %vm950 = vcmp.eq.s32.totalorder %v890, %v446
        %vm951 = vcmp.eq.s32.totalorder %v890, %v447
        %vm952 = vcmp.eq.s32.totalorder %v890, %v448
        %vm953 = vcmp.eq.s32.totalorder %v890, %v449
        %vm954 = vcmp.eq.s32.totalorder %v890, %v450
        %v955 = vlaneseq
        %v956 = vshrl.u32 %v955, 7
        %v957 = vsub.s32 0, %v956
        %v958 = vrot.slane %v882, %v957
        %v959 = vsel %vm891, %v958, 0.0
        %v960 = vsel %vm892, %v958, 0.0
        %v961 = vsel %vm893, %v958, 0.0
        %v962 = vsel %vm894, %v958, 0.0
        %v963 = vsel %vm895, %v958, 0.0
        %v964 = vsel %vm896, %v958, 0.0
        %v965 = vsel %vm897, %v958, 0.0
        %v966 = vsel %vm898, %v958, 0.0
        %v967 = vsel %vm899, %v958, 0.0
        %v968 = vsel %vm900, %v958, 0.0
        %v969 = vsel %vm901, %v958, 0.0
        %v970 = vsel %vm902, %v958, 0.0
        %v971 = vsel %vm903, %v958, 0.0
        %v972 = vsel %vm904, %v958, 0.0
        %v973 = vsel %vm905, %v958, 0.0
        %v974 = vsel %vm906, %v958, 0.0
        %v975 = vsel %vm907, %v958, 0.0
        %v976 = vsel %vm908, %v958, 0.0
        %v977 = vsel %vm909, %v958, 0.0
        %v978 = vsel %vm910, %v958, 0.0
        %v979 = vsel %vm911, %v958, 0.0
        %v980 = vsel %vm912, %v958, 0.0
        %v981 = vsel %vm913, %v958, 0.0
        %v982 = vsel %vm914, %v958, 0.0
        %v983 = vsel %vm915, %v958, 0.0
        %v984 = vsel %vm916, %v958, 0.0
        %v985 = vsel %vm917, %v958, 0.0
        %v986 = vsel %vm918, %v958, 0.0
        %v987 = vsel %vm919, %v958, 0.0
        %v988 = vsel %vm920, %v958, 0.0
        %v989 = vsel %vm921, %v958, 0.0
        %v990 = vsel %vm922, %v958, 0.0
        %v991 = vsel %vm923, %v958, 0.0
        %v992 = vsel %vm924, %v958, 0.0
        %v993 = vsel %vm925, %v958, 0.0
        %v994 = vsel %vm926, %v958, 0.0
        %v995 = vsel %vm927, %v958, 0.0
        %v996 = vsel %vm928, %v958, 0.0
        %v997 = vsel %vm929, %v958, 0.0
        %v998 = vsel %vm930, %v958, 0.0
        %v999 = vsel %vm931, %v958, 0.0
        %v1000 = vsel %vm932, %v958, 0.0
        %v1001 = vsel %vm933, %v958, 0.0
        %v1002 = vsel %vm934, %v958, 0.0
        %v1003 = vsel %vm935, %v958, 0.0
        %v1004 = vsel %vm936, %v958, 0.0
        %v1005 = vsel %vm937, %v958, 0.0
        %v1006 = vsel %vm938, %v958, 0.0
        %v1007 = vsel %vm939, %v958, 0.0
        %v1008 = vsel %vm940, %v958, 0.0
        %v1009 = vsel %vm941, %v958, 0.0
        %v1010 = vsel %vm942, %v958, 0.0
        %v1011 = vsel %vm943, %v958, 0.0
        %v1012 = vsel %vm944, %v958, 0.0
        %v1013 = vsel %vm945, %v958, 0.0
        %v1014 = vsel %vm946, %v958, 0.0
        %v1015 = vsel %vm947, %v958, 0.0
        %v1016 = vsel %vm948, %v958, 0.0
        %v1017 = vsel %vm949, %v958, 0.0
        %v1018 = vsel %vm950, %v958, 0.0
        %v1019 = vsel %vm951, %v958, 0.0
        %v1020 = vsel %vm952, %v958, 0.0
        %v1021 = vsel %vm953, %v958, 0.0
        %v1022 = vsel %vm954, %v958, 0.0
        %v1023 = vadd.f32 %v808, %v959
        %v1024 = vadd.f32 %v809, %v960
        %v1025 = vadd.f32 %v810, %v961
        %v1026 = vadd.f32 %v811, %v962
        %v1027 = vadd.f32 %v812, %v963
        %v1028 = vadd.f32 %v813, %v964
        %v1029 = vadd.f32 %v814, %v965
        %v1030 = vadd.f32 %v815, %v966
        %v1031 = vadd.f32 %v816, %v967
        %v1032 = vadd.f32 %v817, %v968
        %v1033 = vadd.f32 %v818, %v969
        %v1034 = vadd.f32 %v819, %v970
        %v1035 = vadd.f32 %v820, %v971
        %v1036 = vadd.f32 %v821, %v972
        %v1037 = vadd.f32 %v822, %v973
        %v1038 = vadd.f32 %v823, %v974
        %v1039 = vadd.f32 %v824, %v975
        %v1040 = vadd.f32 %v825, %v976
        %v1041 = vadd.f32 %v826, %v977
        %v1042 = vadd.f32 %v827, %v978
        %v1043 = vadd.f32 %v828, %v979
        %v1044 = vadd.f32 %v829, %v980
        %v1045 = vadd.f32 %v830, %v981
        %v1046 = vadd.f32 %v831, %v982
        %v1047 = vadd.f32 %v832, %v983
        %v1048 = vadd.f32 %v833, %v984
        %v1049 = vadd.f32 %v834, %v985
        %v1050 = vadd.f32 %v835, %v986
        %v1051 = vadd.f32 %v836, %v987
        %v1052 = vadd.f32 %v837, %v988
        %v1053 = vadd.f32 %v838, %v989
        %v1054 = vadd.f32 %v839, %v990
        %v1055 = vadd.f32 %v840, %v991
        %v1056 = vadd.f32 %v841, %v992
        %v1057 = vadd.f32 %v842, %v993
        %v1058 = vadd.f32 %v843, %v994
        %v1059 = vadd.f32 %v844, %v995
        %v1060 = vadd.f32 %v845, %v996
        %v1061 = vadd.f32 %v846, %v997
        %v1062 = vadd.f32 %v847, %v998
        %v1063 = vadd.f32 %v848, %v999
        %v1064 = vadd.f32 %v849, %v1000
        %v1065 = vadd.f32 %v850, %v1001
        %v1066 = vadd.f32 %v851, %v1002
        %v1067 = vadd.f32 %v852, %v1003
        %v1068 = vadd.f32 %v853, %v1004
        %v1069 = vadd.f32 %v854, %v1005
        %v1070 = vadd.f32 %v855, %v1006
        %v1071 = vadd.f32 %v856, %v1007
        %v1072 = vadd.f32 %v857, %v1008
        %v1073 = vadd.f32 %v858, %v1009
        %v1074 = vadd.f32 %v859, %v1010
        %v1075 = vadd.f32 %v860, %v1011
        %v1076 = vadd.f32 %v861, %v1012
        %v1077 = vadd.f32 %v862, %v1013
        %v1078 = vadd.f32 %v863, %v1014
        %v1079 = vadd.f32 %v864, %v1015
        %v1080 = vadd.f32 %v865, %v1016
        %v1081 = vadd.f32 %v866, %v1017
        %v1082 = vadd.f32 %v867, %v1018
        %v1083 = vadd.f32 %v868, %v1019
        %v1084 = vadd.f32 %v869, %v1020
        %v1085 = vadd.f32 %v870, %v1021
        %v1086 = vadd.f32 %v871, %v1022
        %v1087 = vmul.f32 %v505, %v873
        %v1088 = vmul.f32 %v1087, %v511
        %v1089 = vmul.f32 %v1088, %v500
        %v1090 = vmul.f32 %v1089, %v879
        %v1091 = vmul.f32 %v1090, %v519
        %v1092 = vadd.s32 %v669, %v884
        %v1093 = vadd.s32 %v1092, %v526
        %v1094 = vlaneseq
        %v1095 = vshrl.u32 %v1094, 7
        %v1096 = vsub.s32 0, %v1095
        %v1097 = vrot.slane %v1093, %v1096
        %vm1098 = vcmp.eq.s32.totalorder %v1097, %v387
        %vm1099 = vcmp.eq.s32.totalorder %v1097, %v388
        %vm1100 = vcmp.eq.s32.totalorder %v1097, %v389
        %vm1101 = vcmp.eq.s32.totalorder %v1097, %v390
        %vm1102 = vcmp.eq.s32.totalorder %v1097, %v391
        %vm1103 = vcmp.eq.s32.totalorder %v1097, %v392
        %vm1104 = vcmp.eq.s32.totalorder %v1097, %v393
        %vm1105 = vcmp.eq.s32.totalorder %v1097, %v394
        %vm1106 = vcmp.eq.s32.totalorder %v1097, %v395
        %vm1107 = vcmp.eq.s32.totalorder %v1097, %v396
        %vm1108 = vcmp.eq.s32.totalorder %v1097, %v397
        %vm1109 = vcmp.eq.s32.totalorder %v1097, %v398
        %vm1110 = vcmp.eq.s32.totalorder %v1097, %v399
        %vm1111 = vcmp.eq.s32.totalorder %v1097, %v400
        %vm1112 = vcmp.eq.s32.totalorder %v1097, %v401
        %vm1113 = vcmp.eq.s32.totalorder %v1097, %v402
        %vm1114 = vcmp.eq.s32.totalorder %v1097, %v403
        %vm1115 = vcmp.eq.s32.totalorder %v1097, %v404
        %vm1116 = vcmp.eq.s32.totalorder %v1097, %v405
        %vm1117 = vcmp.eq.s32.totalorder %v1097, %v406
        %vm1118 = vcmp.eq.s32.totalorder %v1097, %v407
        %vm1119 = vcmp.eq.s32.totalorder %v1097, %v408
        %vm1120 = vcmp.eq.s32.totalorder %v1097, %v409
        %vm1121 = vcmp.eq.s32.totalorder %v1097, %v410
        %vm1122 = vcmp.eq.s32.totalorder %v1097, %v411
        %vm1123 = vcmp.eq.s32.totalorder %v1097, %v412
        %vm1124 = vcmp.eq.s32.totalorder %v1097, %v413
        %vm1125 = vcmp.eq.s32.totalorder %v1097, %v414
        %vm1126 = vcmp.eq.s32.totalorder %v1097, %v415
        %vm1127 = vcmp.eq.s32.totalorder %v1097, %v416
        %vm1128 = vcmp.eq.s32.totalorder %v1097, %v417
        %vm1129 = vcmp.eq.s32.totalorder %v1097, %v418
        %vm1130 = vcmp.eq.s32.totalorder %v1097, %v419
        %vm1131 = vcmp.eq.s32.totalorder %v1097, %v420
        %vm1132 = vcmp.eq.s32.totalorder %v1097, %v421
        %vm1133 = vcmp.eq.s32.totalorder %v1097, %v422
        %vm1134 = vcmp.eq.s32.totalorder %v1097, %v423
        %vm1135 = vcmp.eq.s32.totalorder %v1097, %v424
        %vm1136 = vcmp.eq.s32.totalorder %v1097, %v425
        %vm1137 = vcmp.eq.s32.totalorder %v1097, %v426
        %vm1138 = vcmp.eq.s32.totalorder %v1097, %v427
        %vm1139 = vcmp.eq.s32.totalorder %v1097, %v428
        %vm1140 = vcmp.eq.s32.totalorder %v1097, %v429
        %vm1141 = vcmp.eq.s32.totalorder %v1097, %v430
        %vm1142 = vcmp.eq.s32.totalorder %v1097, %v431
        %vm1143 = vcmp.eq.s32.totalorder %v1097, %v432
        %vm1144 = vcmp.eq.s32.totalorder %v1097, %v433
        %vm1145 = vcmp.eq.s32.totalorder %v1097, %v434
        %vm1146 = vcmp.eq.s32.totalorder %v1097, %v435
        %vm1147 = vcmp.eq.s32.totalorder %v1097, %v436
        %vm1148 = vcmp.eq.s32.totalorder %v1097, %v437
        %vm1149 = vcmp.eq.s32.totalorder %v1097, %v438
        %vm1150 = vcmp.eq.s32.totalorder %v1097, %v439
        %vm1151 = vcmp.eq.s32.totalorder %v1097, %v440
        %vm1152 = vcmp.eq.s32.totalorder %v1097, %v441
        %vm1153 = vcmp.eq.s32.totalorder %v1097, %v442
        %vm1154 = vcmp.eq.s32.totalorder %v1097, %v443
        %vm1155 = vcmp.eq.s32.totalorder %v1097, %v444
        %vm1156 = vcmp.eq.s32.totalorder %v1097, %v445
        %vm1157 = vcmp.eq.s32.totalorder %v1097, %v446
        %vm1158 = vcmp.eq.s32.totalorder %v1097, %v447
        %vm1159 = vcmp.eq.s32.totalorder %v1097, %v448
        %vm1160 = vcmp.eq.s32.totalorder %v1097, %v449
        %vm1161 = vcmp.eq.s32.totalorder %v1097, %v450
        %v1162 = vlaneseq
        %v1163 = vshrl.u32 %v1162, 7
        %v1164 = vsub.s32 0, %v1163
        %v1165 = vrot.slane %v1091, %v1164
        %v1166 = vsel %vm1098, %v1165, 0.0
        %v1167 = vsel %vm1099, %v1165, 0.0
        %v1168 = vsel %vm1100, %v1165, 0.0
        %v1169 = vsel %vm1101, %v1165, 0.0
        %v1170 = vsel %vm1102, %v1165, 0.0
        %v1171 = vsel %vm1103, %v1165, 0.0
        %v1172 = vsel %vm1104, %v1165, 0.0
        %v1173 = vsel %vm1105, %v1165, 0.0
        %v1174 = vsel %vm1106, %v1165, 0.0
        %v1175 = vsel %vm1107, %v1165, 0.0
        %v1176 = vsel %vm1108, %v1165, 0.0
        %v1177 = vsel %vm1109, %v1165, 0.0
        %v1178 = vsel %vm1110, %v1165, 0.0
        %v1179 = vsel %vm1111, %v1165, 0.0
        %v1180 = vsel %vm1112, %v1165, 0.0
        %v1181 = vsel %vm1113, %v1165, 0.0
        %v1182 = vsel %vm1114, %v1165, 0.0
        %v1183 = vsel %vm1115, %v1165, 0.0
        %v1184 = vsel %vm1116, %v1165, 0.0
        %v1185 = vsel %vm1117, %v1165, 0.0
        %v1186 = vsel %vm1118, %v1165, 0.0
        %v1187 = vsel %vm1119, %v1165, 0.0
        %v1188 = vsel %vm1120, %v1165, 0.0
        %v1189 = vsel %vm1121, %v1165, 0.0
        %v1190 = vsel %vm1122, %v1165, 0.0
        %v1191 = vsel %vm1123, %v1165, 0.0
        %v1192 = vsel %vm1124, %v1165, 0.0
        %v1193 = vsel %vm1125, %v1165, 0.0
        %v1194 = vsel %vm1126, %v1165, 0.0
        %v1195 = vsel %vm1127, %v1165, 0.0
        %v1196 = vsel %vm1128, %v1165, 0.0
        %v1197 = vsel %vm1129, %v1165, 0.0
        %v1198 = vsel %vm1130, %v1165, 0.0
        %v1199 = vsel %vm1131, %v1165, 0.0
        %v1200 = vsel %vm1132, %v1165, 0.0
        %v1201 = vsel %vm1133, %v1165, 0.0
        %v1202 = vsel %vm1134, %v1165, 0.0
        %v1203 = vsel %vm1135, %v1165, 0.0
        %v1204 = vsel %vm1136, %v1165, 0.0
        %v1205 = vsel %vm1137, %v1165, 0.0
        %v1206 = vsel %vm1138, %v1165, 0.0
        %v1207 = vsel %vm1139, %v1165, 0.0
        %v1208 = vsel %vm1140, %v1165, 0.0
        %v1209 = vsel %vm1141, %v1165, 0.0
        %v1210 = vsel %vm1142, %v1165, 0.0
        %v1211 = vsel %vm1143, %v1165, 0.0
        %v1212 = vsel %vm1144, %v1165, 0.0
        %v1213 = vsel %vm1145, %v1165, 0.0
        %v1214 = vsel %vm1146, %v1165, 0.0
        %v1215 = vsel %vm1147, %v1165, 0.0
        %v1216 = vsel %vm1148, %v1165, 0.0
        %v1217 = vsel %vm1149, %v1165, 0.0
        %v1218 = vsel %vm1150, %v1165, 0.0
        %v1219 = vsel %vm1151, %v1165, 0.0
        %v1220 = vsel %vm1152, %v1165, 0.0
        %v1221 = vsel %vm1153, %v1165, 0.0
        %v1222 = vsel %vm1154, %v1165, 0.0
        %v1223 = vsel %vm1155, %v1165, 0.0
        %v1224 = vsel %vm1156, %v1165, 0.0
        %v1225 = vsel %vm1157, %v1165, 0.0
        %v1226 = vsel %vm1158, %v1165, 0.0
        %v1227 = vsel %vm1159, %v1165, 0.0
        %v1228 = vsel %vm1160, %v1165, 0.0
        %v1229 = vsel %vm1161, %v1165, 0.0
        %v1230 = vadd.f32 %v1023, %v1166
        %v1231 = vadd.f32 %v1024, %v1167
        %v1232 = vadd.f32 %v1025, %v1168
        %v1233 = vadd.f32 %v1026, %v1169
        %v1234 = vadd.f32 %v1027, %v1170
        %v1235 = vadd.f32 %v1028, %v1171
        %v1236 = vadd.f32 %v1029, %v1172
        %v1237 = vadd.f32 %v1030, %v1173
        %v1238 = vadd.f32 %v1031, %v1174
        %v1239 = vadd.f32 %v1032, %v1175
        %v1240 = vadd.f32 %v1033, %v1176
        %v1241 = vadd.f32 %v1034, %v1177
        %v1242 = vadd.f32 %v1035, %v1178
        %v1243 = vadd.f32 %v1036, %v1179
        %v1244 = vadd.f32 %v1037, %v1180
        %v1245 = vadd.f32 %v1038, %v1181
        %v1246 = vadd.f32 %v1039, %v1182
        %v1247 = vadd.f32 %v1040, %v1183
        %v1248 = vadd.f32 %v1041, %v1184
        %v1249 = vadd.f32 %v1042, %v1185
        %v1250 = vadd.f32 %v1043, %v1186
        %v1251 = vadd.f32 %v1044, %v1187
        %v1252 = vadd.f32 %v1045, %v1188
        %v1253 = vadd.f32 %v1046, %v1189
        %v1254 = vadd.f32 %v1047, %v1190
        %v1255 = vadd.f32 %v1048, %v1191
        %v1256 = vadd.f32 %v1049, %v1192
        %v1257 = vadd.f32 %v1050, %v1193
        %v1258 = vadd.f32 %v1051, %v1194
        %v1259 = vadd.f32 %v1052, %v1195
        %v1260 = vadd.f32 %v1053, %v1196
        %v1261 = vadd.f32 %v1054, %v1197
        %v1262 = vadd.f32 %v1055, %v1198
        %v1263 = vadd.f32 %v1056, %v1199
        %v1264 = vadd.f32 %v1057, %v1200
        %v1265 = vadd.f32 %v1058, %v1201
        %v1266 = vadd.f32 %v1059, %v1202
        %v1267 = vadd.f32 %v1060, %v1203
        %v1268 = vadd.f32 %v1061, %v1204
        %v1269 = vadd.f32 %v1062, %v1205
        %v1270 = vadd.f32 %v1063, %v1206
        %v1271 = vadd.f32 %v1064, %v1207
        %v1272 = vadd.f32 %v1065, %v1208
        %v1273 = vadd.f32 %v1066, %v1209
        %v1274 = vadd.f32 %v1067, %v1210
        %v1275 = vadd.f32 %v1068, %v1211
        %v1276 = vadd.f32 %v1069, %v1212
        %v1277 = vadd.f32 %v1070, %v1213
        %v1278 = vadd.f32 %v1071, %v1214
        %v1279 = vadd.f32 %v1072, %v1215
        %v1280 = vadd.f32 %v1073, %v1216
        %v1281 = vadd.f32 %v1074, %v1217
        %v1282 = vadd.f32 %v1075, %v1218
        %v1283 = vadd.f32 %v1076, %v1219
        %v1284 = vadd.f32 %v1077, %v1220
        %v1285 = vadd.f32 %v1078, %v1221
        %v1286 = vadd.f32 %v1079, %v1222
        %v1287 = vadd.f32 %v1080, %v1223
        %v1288 = vadd.f32 %v1081, %v1224
        %v1289 = vadd.f32 %v1082, %v1225
        %v1290 = vadd.f32 %v1083, %v1226
        %v1291 = vadd.f32 %v1084, %v1227
        %v1292 = vadd.f32 %v1085, %v1228
        %v1293 = vadd.f32 %v1086, %v1229
        %v1294 = vrot.slane %v505, 2
        %v1296 = vmul.f32 %v510, %v1294
        %v1297 = vmul.f32 %v1296, %v478
        %v1298 = vmul.f32 %v1297, %v516
        %v1299 = vrot.slane %v500, 2
        %v1301 = vmul.f32 %v1298, %v1299
        %v1302 = vrot.slane %v503, 2
        %v1303 = vadd.s32 %v525, %v1302
        %v1304 = vlaneseq
        %v1305 = vshrl.u32 %v1304, 7
        %v1306 = vsub.s32 0, %v1305
        %v1307 = vrot.slane %v1303, %v1306
        %vm1308 = vcmp.eq.s32.totalorder %v1307, %v387
        %vm1309 = vcmp.eq.s32.totalorder %v1307, %v388
        %vm1310 = vcmp.eq.s32.totalorder %v1307, %v389
        %vm1311 = vcmp.eq.s32.totalorder %v1307, %v390
        %vm1312 = vcmp.eq.s32.totalorder %v1307, %v391
        %vm1313 = vcmp.eq.s32.totalorder %v1307, %v392
        %vm1314 = vcmp.eq.s32.totalorder %v1307, %v393
        %vm1315 = vcmp.eq.s32.totalorder %v1307, %v394
        %vm1316 = vcmp.eq.s32.totalorder %v1307, %v395
        %vm1317 = vcmp.eq.s32.totalorder %v1307, %v396
        %vm1318 = vcmp.eq.s32.totalorder %v1307, %v397
        %vm1319 = vcmp.eq.s32.totalorder %v1307, %v398
        %vm1320 = vcmp.eq.s32.totalorder %v1307, %v399
        %vm1321 = vcmp.eq.s32.totalorder %v1307, %v400
        %vm1322 = vcmp.eq.s32.totalorder %v1307, %v401
        %vm1323 = vcmp.eq.s32.totalorder %v1307, %v402
        %vm1324 = vcmp.eq.s32.totalorder %v1307, %v403
        %vm1325 = vcmp.eq.s32.totalorder %v1307, %v404
        %vm1326 = vcmp.eq.s32.totalorder %v1307, %v405
        %vm1327 = vcmp.eq.s32.totalorder %v1307, %v406
        %vm1328 = vcmp.eq.s32.totalorder %v1307, %v407
        %vm1329 = vcmp.eq.s32.totalorder %v1307, %v408
        %vm1330 = vcmp.eq.s32.totalorder %v1307, %v409
        %vm1331 = vcmp.eq.s32.totalorder %v1307, %v410
        %vm1332 = vcmp.eq.s32.totalorder %v1307, %v411
        %vm1333 = vcmp.eq.s32.totalorder %v1307, %v412
        %vm1334 = vcmp.eq.s32.totalorder %v1307, %v413
        %vm1335 = vcmp.eq.s32.totalorder %v1307, %v414
        %vm1336 = vcmp.eq.s32.totalorder %v1307, %v415
        %vm1337 = vcmp.eq.s32.totalorder %v1307, %v416
        %vm1338 = vcmp.eq.s32.totalorder %v1307, %v417
        %vm1339 = vcmp.eq.s32.totalorder %v1307, %v418
        %vm1340 = vcmp.eq.s32.totalorder %v1307, %v419
        %vm1341 = vcmp.eq.s32.totalorder %v1307, %v420
        %vm1342 = vcmp.eq.s32.totalorder %v1307, %v421
        %vm1343 = vcmp.eq.s32.totalorder %v1307, %v422
        %vm1344 = vcmp.eq.s32.totalorder %v1307, %v423
        %vm1345 = vcmp.eq.s32.totalorder %v1307, %v424
        %vm1346 = vcmp.eq.s32.totalorder %v1307, %v425
        %vm1347 = vcmp.eq.s32.totalorder %v1307, %v426
        %vm1348 = vcmp.eq.s32.totalorder %v1307, %v427
        %vm1349 = vcmp.eq.s32.totalorder %v1307, %v428
        %vm1350 = vcmp.eq.s32.totalorder %v1307, %v429
        %vm1351 = vcmp.eq.s32.totalorder %v1307, %v430
        %vm1352 = vcmp.eq.s32.totalorder %v1307, %v431
        %vm1353 = vcmp.eq.s32.totalorder %v1307, %v432
        %vm1354 = vcmp.eq.s32.totalorder %v1307, %v433
        %vm1355 = vcmp.eq.s32.totalorder %v1307, %v434
        %vm1356 = vcmp.eq.s32.totalorder %v1307, %v435
        %vm1357 = vcmp.eq.s32.totalorder %v1307, %v436
        %vm1358 = vcmp.eq.s32.totalorder %v1307, %v437
        %vm1359 = vcmp.eq.s32.totalorder %v1307, %v438
        %vm1360 = vcmp.eq.s32.totalorder %v1307, %v439
        %vm1361 = vcmp.eq.s32.totalorder %v1307, %v440
        %vm1362 = vcmp.eq.s32.totalorder %v1307, %v441
        %vm1363 = vcmp.eq.s32.totalorder %v1307, %v442
        %vm1364 = vcmp.eq.s32.totalorder %v1307, %v443
        %vm1365 = vcmp.eq.s32.totalorder %v1307, %v444
        %vm1366 = vcmp.eq.s32.totalorder %v1307, %v445
        %vm1367 = vcmp.eq.s32.totalorder %v1307, %v446
        %vm1368 = vcmp.eq.s32.totalorder %v1307, %v447
        %vm1369 = vcmp.eq.s32.totalorder %v1307, %v448
        %vm1370 = vcmp.eq.s32.totalorder %v1307, %v449
        %vm1371 = vcmp.eq.s32.totalorder %v1307, %v450
        %v1372 = vlaneseq
        %v1373 = vshrl.u32 %v1372, 7
        %v1374 = vsub.s32 0, %v1373
        %v1375 = vrot.slane %v1301, %v1374
        %v1376 = vsel %vm1308, %v1375, 0.0
        %v1377 = vsel %vm1309, %v1375, 0.0
        %v1378 = vsel %vm1310, %v1375, 0.0
        %v1379 = vsel %vm1311, %v1375, 0.0
        %v1380 = vsel %vm1312, %v1375, 0.0
        %v1381 = vsel %vm1313, %v1375, 0.0
        %v1382 = vsel %vm1314, %v1375, 0.0
        %v1383 = vsel %vm1315, %v1375, 0.0
        %v1384 = vsel %vm1316, %v1375, 0.0
        %v1385 = vsel %vm1317, %v1375, 0.0
        %v1386 = vsel %vm1318, %v1375, 0.0
        %v1387 = vsel %vm1319, %v1375, 0.0
        %v1388 = vsel %vm1320, %v1375, 0.0
        %v1389 = vsel %vm1321, %v1375, 0.0
        %v1390 = vsel %vm1322, %v1375, 0.0
        %v1391 = vsel %vm1323, %v1375, 0.0
        %v1392 = vsel %vm1324, %v1375, 0.0
        %v1393 = vsel %vm1325, %v1375, 0.0
        %v1394 = vsel %vm1326, %v1375, 0.0
        %v1395 = vsel %vm1327, %v1375, 0.0
        %v1396 = vsel %vm1328, %v1375, 0.0
        %v1397 = vsel %vm1329, %v1375, 0.0
        %v1398 = vsel %vm1330, %v1375, 0.0
        %v1399 = vsel %vm1331, %v1375, 0.0
        %v1400 = vsel %vm1332, %v1375, 0.0
        %v1401 = vsel %vm1333, %v1375, 0.0
        %v1402 = vsel %vm1334, %v1375, 0.0
        %v1403 = vsel %vm1335, %v1375, 0.0
        %v1404 = vsel %vm1336, %v1375, 0.0
        %v1405 = vsel %vm1337, %v1375, 0.0
        %v1406 = vsel %vm1338, %v1375, 0.0
        %v1407 = vsel %vm1339, %v1375, 0.0
        %v1408 = vsel %vm1340, %v1375, 0.0
        %v1409 = vsel %vm1341, %v1375, 0.0
        %v1410 = vsel %vm1342, %v1375, 0.0
        %v1411 = vsel %vm1343, %v1375, 0.0
        %v1412 = vsel %vm1344, %v1375, 0.0
        %v1413 = vsel %vm1345, %v1375, 0.0
        %v1414 = vsel %vm1346, %v1375, 0.0
        %v1415 = vsel %vm1347, %v1375, 0.0
        %v1416 = vsel %vm1348, %v1375, 0.0
        %v1417 = vsel %vm1349, %v1375, 0.0
        %v1418 = vsel %vm1350, %v1375, 0.0
        %v1419 = vsel %vm1351, %v1375, 0.0
        %v1420 = vsel %vm1352, %v1375, 0.0
        %v1421 = vsel %vm1353, %v1375, 0.0
        %v1422 = vsel %vm1354, %v1375, 0.0
        %v1423 = vsel %vm1355, %v1375, 0.0
        %v1424 = vsel %vm1356, %v1375, 0.0
        %v1425 = vsel %vm1357, %v1375, 0.0
        %v1426 = vsel %vm1358, %v1375, 0.0
        %v1427 = vsel %vm1359, %v1375, 0.0
        %v1428 = vsel %vm1360, %v1375, 0.0
        %v1429 = vsel %vm1361, %v1375, 0.0
        %v1430 = vsel %vm1362, %v1375, 0.0
        %v1431 = vsel %vm1363, %v1375, 0.0
        %v1432 = vsel %vm1364, %v1375, 0.0
        %v1433 = vsel %vm1365, %v1375, 0.0
        %v1434 = vsel %vm1366, %v1375, 0.0
        %v1435 = vsel %vm1367, %v1375, 0.0
        %v1436 = vsel %vm1368, %v1375, 0.0
        %v1437 = vsel %vm1369, %v1375, 0.0
        %v1438 = vsel %vm1370, %v1375, 0.0
        %v1439 = vsel %vm1371, %v1375, 0.0
        %v1440 = vadd.f32 %v1230, %v1376
        %v1441 = vadd.f32 %v1231, %v1377
        %v1442 = vadd.f32 %v1232, %v1378
        %v1443 = vadd.f32 %v1233, %v1379
        %v1444 = vadd.f32 %v1234, %v1380
        %v1445 = vadd.f32 %v1235, %v1381
        %v1446 = vadd.f32 %v1236, %v1382
        %v1447 = vadd.f32 %v1237, %v1383
        %v1448 = vadd.f32 %v1238, %v1384
        %v1449 = vadd.f32 %v1239, %v1385
        %v1450 = vadd.f32 %v1240, %v1386
        %v1451 = vadd.f32 %v1241, %v1387
        %v1452 = vadd.f32 %v1242, %v1388
        %v1453 = vadd.f32 %v1243, %v1389
        %v1454 = vadd.f32 %v1244, %v1390
        %v1455 = vadd.f32 %v1245, %v1391
        %v1456 = vadd.f32 %v1246, %v1392
        %v1457 = vadd.f32 %v1247, %v1393
        %v1458 = vadd.f32 %v1248, %v1394
        %v1459 = vadd.f32 %v1249, %v1395
        %v1460 = vadd.f32 %v1250, %v1396
        %v1461 = vadd.f32 %v1251, %v1397
        %v1462 = vadd.f32 %v1252, %v1398
        %v1463 = vadd.f32 %v1253, %v1399
        %v1464 = vadd.f32 %v1254, %v1400
        %v1465 = vadd.f32 %v1255, %v1401
        %v1466 = vadd.f32 %v1256, %v1402
        %v1467 = vadd.f32 %v1257, %v1403
        %v1468 = vadd.f32 %v1258, %v1404
        %v1469 = vadd.f32 %v1259, %v1405
        %v1470 = vadd.f32 %v1260, %v1406
        %v1471 = vadd.f32 %v1261, %v1407
        %v1472 = vadd.f32 %v1262, %v1408
        %v1473 = vadd.f32 %v1263, %v1409
        %v1474 = vadd.f32 %v1264, %v1410
        %v1475 = vadd.f32 %v1265, %v1411
        %v1476 = vadd.f32 %v1266, %v1412
        %v1477 = vadd.f32 %v1267, %v1413
        %v1478 = vadd.f32 %v1268, %v1414
        %v1479 = vadd.f32 %v1269, %v1415
        %v1480 = vadd.f32 %v1270, %v1416
        %v1481 = vadd.f32 %v1271, %v1417
        %v1482 = vadd.f32 %v1272, %v1418
        %v1483 = vadd.f32 %v1273, %v1419
        %v1484 = vadd.f32 %v1274, %v1420
        %v1485 = vadd.f32 %v1275, %v1421
        %v1486 = vadd.f32 %v1276, %v1422
        %v1487 = vadd.f32 %v1277, %v1423
        %v1488 = vadd.f32 %v1278, %v1424
        %v1489 = vadd.f32 %v1279, %v1425
        %v1490 = vadd.f32 %v1280, %v1426
        %v1491 = vadd.f32 %v1281, %v1427
        %v1492 = vadd.f32 %v1282, %v1428
        %v1493 = vadd.f32 %v1283, %v1429
        %v1494 = vadd.f32 %v1284, %v1430
        %v1495 = vadd.f32 %v1285, %v1431
        %v1496 = vadd.f32 %v1286, %v1432
        %v1497 = vadd.f32 %v1287, %v1433
        %v1498 = vadd.f32 %v1288, %v1434
        %v1499 = vadd.f32 %v1289, %v1435
        %v1500 = vadd.f32 %v1290, %v1436
        %v1501 = vadd.f32 %v1291, %v1437
        %v1502 = vadd.f32 %v1292, %v1438
        %v1503 = vadd.f32 %v1293, %v1439
        %v1504 = vmul.f32 %v664, %v1294
        %v1505 = vmul.f32 %v1504, %v500
        %v1506 = vmul.f32 %v1505, %v516
        %v1507 = vmul.f32 %v1506, %v1299
        %v1508 = vadd.s32 %v670, %v1302
        %v1509 = vlaneseq
        %v1510 = vshrl.u32 %v1509, 7
        %v1511 = vsub.s32 0, %v1510
        %v1512 = vrot.slane %v1508, %v1511
        %vm1513 = vcmp.eq.s32.totalorder %v1512, %v387
        %vm1514 = vcmp.eq.s32.totalorder %v1512, %v388
        %vm1515 = vcmp.eq.s32.totalorder %v1512, %v389
        %vm1516 = vcmp.eq.s32.totalorder %v1512, %v390
        %vm1517 = vcmp.eq.s32.totalorder %v1512, %v391
        %vm1518 = vcmp.eq.s32.totalorder %v1512, %v392
        %vm1519 = vcmp.eq.s32.totalorder %v1512, %v393
        %vm1520 = vcmp.eq.s32.totalorder %v1512, %v394
        %vm1521 = vcmp.eq.s32.totalorder %v1512, %v395
        %vm1522 = vcmp.eq.s32.totalorder %v1512, %v396
        %vm1523 = vcmp.eq.s32.totalorder %v1512, %v397
        %vm1524 = vcmp.eq.s32.totalorder %v1512, %v398
        %vm1525 = vcmp.eq.s32.totalorder %v1512, %v399
        %vm1526 = vcmp.eq.s32.totalorder %v1512, %v400
        %vm1527 = vcmp.eq.s32.totalorder %v1512, %v401
        %vm1528 = vcmp.eq.s32.totalorder %v1512, %v402
        %vm1529 = vcmp.eq.s32.totalorder %v1512, %v403
        %vm1530 = vcmp.eq.s32.totalorder %v1512, %v404
        %vm1531 = vcmp.eq.s32.totalorder %v1512, %v405
        %vm1532 = vcmp.eq.s32.totalorder %v1512, %v406
        %vm1533 = vcmp.eq.s32.totalorder %v1512, %v407
        %vm1534 = vcmp.eq.s32.totalorder %v1512, %v408
        %vm1535 = vcmp.eq.s32.totalorder %v1512, %v409
        %vm1536 = vcmp.eq.s32.totalorder %v1512, %v410
        %vm1537 = vcmp.eq.s32.totalorder %v1512, %v411
        %vm1538 = vcmp.eq.s32.totalorder %v1512, %v412
        %vm1539 = vcmp.eq.s32.totalorder %v1512, %v413
        %vm1540 = vcmp.eq.s32.totalorder %v1512, %v414
        %vm1541 = vcmp.eq.s32.totalorder %v1512, %v415
        %vm1542 = vcmp.eq.s32.totalorder %v1512, %v416
        %vm1543 = vcmp.eq.s32.totalorder %v1512, %v417
        %vm1544 = vcmp.eq.s32.totalorder %v1512, %v418
        %vm1545 = vcmp.eq.s32.totalorder %v1512, %v419
        %vm1546 = vcmp.eq.s32.totalorder %v1512, %v420
        %vm1547 = vcmp.eq.s32.totalorder %v1512, %v421
        %vm1548 = vcmp.eq.s32.totalorder %v1512, %v422
        %vm1549 = vcmp.eq.s32.totalorder %v1512, %v423
        %vm1550 = vcmp.eq.s32.totalorder %v1512, %v424
        %vm1551 = vcmp.eq.s32.totalorder %v1512, %v425
        %vm1552 = vcmp.eq.s32.totalorder %v1512, %v426
        %vm1553 = vcmp.eq.s32.totalorder %v1512, %v427
        %vm1554 = vcmp.eq.s32.totalorder %v1512, %v428
        %vm1555 = vcmp.eq.s32.totalorder %v1512, %v429
        %vm1556 = vcmp.eq.s32.totalorder %v1512, %v430
        %vm1557 = vcmp.eq.s32.totalorder %v1512, %v431
        %vm1558 = vcmp.eq.s32.totalorder %v1512, %v432
        %vm1559 = vcmp.eq.s32.totalorder %v1512, %v433
        %vm1560 = vcmp.eq.s32.totalorder %v1512, %v434
        %vm1561 = vcmp.eq.s32.totalorder %v1512, %v435
        %vm1562 = vcmp.eq.s32.totalorder %v1512, %v436
        %vm1563 = vcmp.eq.s32.totalorder %v1512, %v437
        %vm1564 = vcmp.eq.s32.totalorder %v1512, %v438
        %vm1565 = vcmp.eq.s32.totalorder %v1512, %v439
        %vm1566 = vcmp.eq.s32.totalorder %v1512, %v440
        %vm1567 = vcmp.eq.s32.totalorder %v1512, %v441
        %vm1568 = vcmp.eq.s32.totalorder %v1512, %v442
        %vm1569 = vcmp.eq.s32.totalorder %v1512, %v443
        %vm1570 = vcmp.eq.s32.totalorder %v1512, %v444
        %vm1571 = vcmp.eq.s32.totalorder %v1512, %v445
        %vm1572 = vcmp.eq.s32.totalorder %v1512, %v446
        %vm1573 = vcmp.eq.s32.totalorder %v1512, %v447
        %vm1574 = vcmp.eq.s32.totalorder %v1512, %v448
        %vm1575 = vcmp.eq.s32.totalorder %v1512, %v449
        %vm1576 = vcmp.eq.s32.totalorder %v1512, %v450
        %v1577 = vlaneseq
        %v1578 = vshrl.u32 %v1577, 7
        %v1579 = vsub.s32 0, %v1578
        %v1580 = vrot.slane %v1507, %v1579
        %v1581 = vsel %vm1513, %v1580, 0.0
        %v1582 = vsel %vm1514, %v1580, 0.0
        %v1583 = vsel %vm1515, %v1580, 0.0
        %v1584 = vsel %vm1516, %v1580, 0.0
        %v1585 = vsel %vm1517, %v1580, 0.0
        %v1586 = vsel %vm1518, %v1580, 0.0
        %v1587 = vsel %vm1519, %v1580, 0.0
        %v1588 = vsel %vm1520, %v1580, 0.0
        %v1589 = vsel %vm1521, %v1580, 0.0
        %v1590 = vsel %vm1522, %v1580, 0.0
        %v1591 = vsel %vm1523, %v1580, 0.0
        %v1592 = vsel %vm1524, %v1580, 0.0
        %v1593 = vsel %vm1525, %v1580, 0.0
        %v1594 = vsel %vm1526, %v1580, 0.0
        %v1595 = vsel %vm1527, %v1580, 0.0
        %v1596 = vsel %vm1528, %v1580, 0.0
        %v1597 = vsel %vm1529, %v1580, 0.0
        %v1598 = vsel %vm1530, %v1580, 0.0
        %v1599 = vsel %vm1531, %v1580, 0.0
        %v1600 = vsel %vm1532, %v1580, 0.0
        %v1601 = vsel %vm1533, %v1580, 0.0
        %v1602 = vsel %vm1534, %v1580, 0.0
        %v1603 = vsel %vm1535, %v1580, 0.0
        %v1604 = vsel %vm1536, %v1580, 0.0
        %v1605 = vsel %vm1537, %v1580, 0.0
        %v1606 = vsel %vm1538, %v1580, 0.0
        %v1607 = vsel %vm1539, %v1580, 0.0
        %v1608 = vsel %vm1540, %v1580, 0.0
        %v1609 = vsel %vm1541, %v1580, 0.0
        %v1610 = vsel %vm1542, %v1580, 0.0
        %v1611 = vsel %vm1543, %v1580, 0.0
        %v1612 = vsel %vm1544, %v1580, 0.0
        %v1613 = vsel %vm1545, %v1580, 0.0
        %v1614 = vsel %vm1546, %v1580, 0.0
        %v1615 = vsel %vm1547, %v1580, 0.0
        %v1616 = vsel %vm1548, %v1580, 0.0
        %v1617 = vsel %vm1549, %v1580, 0.0
        %v1618 = vsel %vm1550, %v1580, 0.0
        %v1619 = vsel %vm1551, %v1580, 0.0
        %v1620 = vsel %vm1552, %v1580, 0.0
        %v1621 = vsel %vm1553, %v1580, 0.0
        %v1622 = vsel %vm1554, %v1580, 0.0
        %v1623 = vsel %vm1555, %v1580, 0.0
        %v1624 = vsel %vm1556, %v1580, 0.0
        %v1625 = vsel %vm1557, %v1580, 0.0
        %v1626 = vsel %vm1558, %v1580, 0.0
        %v1627 = vsel %vm1559, %v1580, 0.0
        %v1628 = vsel %vm1560, %v1580, 0.0
        %v1629 = vsel %vm1561, %v1580, 0.0
        %v1630 = vsel %vm1562, %v1580, 0.0
        %v1631 = vsel %vm1563, %v1580, 0.0
        %v1632 = vsel %vm1564, %v1580, 0.0
        %v1633 = vsel %vm1565, %v1580, 0.0
        %v1634 = vsel %vm1566, %v1580, 0.0
        %v1635 = vsel %vm1567, %v1580, 0.0
        %v1636 = vsel %vm1568, %v1580, 0.0
        %v1637 = vsel %vm1569, %v1580, 0.0
        %v1638 = vsel %vm1570, %v1580, 0.0
        %v1639 = vsel %vm1571, %v1580, 0.0
        %v1640 = vsel %vm1572, %v1580, 0.0
        %v1641 = vsel %vm1573, %v1580, 0.0
        %v1642 = vsel %vm1574, %v1580, 0.0
        %v1643 = vsel %vm1575, %v1580, 0.0
        %v1644 = vsel %vm1576, %v1580, 0.0
        %v1645 = vadd.f32 %v1440, %v1581
        %v1646 = vadd.f32 %v1441, %v1582
        %v1647 = vadd.f32 %v1442, %v1583
        %v1648 = vadd.f32 %v1443, %v1584
        %v1649 = vadd.f32 %v1444, %v1585
        %v1650 = vadd.f32 %v1445, %v1586
        %v1651 = vadd.f32 %v1446, %v1587
        %v1652 = vadd.f32 %v1447, %v1588
        %v1653 = vadd.f32 %v1448, %v1589
        %v1654 = vadd.f32 %v1449, %v1590
        %v1655 = vadd.f32 %v1450, %v1591
        %v1656 = vadd.f32 %v1451, %v1592
        %v1657 = vadd.f32 %v1452, %v1593
        %v1658 = vadd.f32 %v1453, %v1594
        %v1659 = vadd.f32 %v1454, %v1595
        %v1660 = vadd.f32 %v1455, %v1596
        %v1661 = vadd.f32 %v1456, %v1597
        %v1662 = vadd.f32 %v1457, %v1598
        %v1663 = vadd.f32 %v1458, %v1599
        %v1664 = vadd.f32 %v1459, %v1600
        %v1665 = vadd.f32 %v1460, %v1601
        %v1666 = vadd.f32 %v1461, %v1602
        %v1667 = vadd.f32 %v1462, %v1603
        %v1668 = vadd.f32 %v1463, %v1604
        %v1669 = vadd.f32 %v1464, %v1605
        %v1670 = vadd.f32 %v1465, %v1606
        %v1671 = vadd.f32 %v1466, %v1607
        %v1672 = vadd.f32 %v1467, %v1608
        %v1673 = vadd.f32 %v1468, %v1609
        %v1674 = vadd.f32 %v1469, %v1610
        %v1675 = vadd.f32 %v1470, %v1611
        %v1676 = vadd.f32 %v1471, %v1612
        %v1677 = vadd.f32 %v1472, %v1613
        %v1678 = vadd.f32 %v1473, %v1614
        %v1679 = vadd.f32 %v1474, %v1615
        %v1680 = vadd.f32 %v1475, %v1616
        %v1681 = vadd.f32 %v1476, %v1617
        %v1682 = vadd.f32 %v1477, %v1618
        %v1683 = vadd.f32 %v1478, %v1619
        %v1684 = vadd.f32 %v1479, %v1620
        %v1685 = vadd.f32 %v1480, %v1621
        %v1686 = vadd.f32 %v1481, %v1622
        %v1687 = vadd.f32 %v1482, %v1623
        %v1688 = vadd.f32 %v1483, %v1624
        %v1689 = vadd.f32 %v1484, %v1625
        %v1690 = vadd.f32 %v1485, %v1626
        %v1691 = vadd.f32 %v1486, %v1627
        %v1692 = vadd.f32 %v1487, %v1628
        %v1693 = vadd.f32 %v1488, %v1629
        %v1694 = vadd.f32 %v1489, %v1630
        %v1695 = vadd.f32 %v1490, %v1631
        %v1696 = vadd.f32 %v1491, %v1632
        %v1697 = vadd.f32 %v1492, %v1633
        %v1698 = vadd.f32 %v1493, %v1634
        %v1699 = vadd.f32 %v1494, %v1635
        %v1700 = vadd.f32 %v1495, %v1636
        %v1701 = vadd.f32 %v1496, %v1637
        %v1702 = vadd.f32 %v1497, %v1638
        %v1703 = vadd.f32 %v1498, %v1639
        %v1704 = vadd.f32 %v1499, %v1640
        %v1705 = vadd.f32 %v1500, %v1641
        %v1706 = vadd.f32 %v1501, %v1642
        %v1707 = vadd.f32 %v1502, %v1643
        %v1708 = vadd.f32 %v1503, %v1644
        %v1709 = vmul.f32 %v875, %v1294
        %v1710 = vmul.f32 %v1709, %v478
        %v1711 = vmul.f32 %v1710, %v879
        %v1712 = vmul.f32 %v1711, %v1299
        %v1713 = vadd.s32 %v885, %v1302
        %v1714 = vlaneseq
        %v1715 = vshrl.u32 %v1714, 7
        %v1716 = vsub.s32 0, %v1715
        %v1717 = vrot.slane %v1713, %v1716
        %vm1718 = vcmp.eq.s32.totalorder %v1717, %v387
        %vm1719 = vcmp.eq.s32.totalorder %v1717, %v388
        %vm1720 = vcmp.eq.s32.totalorder %v1717, %v389
        %vm1721 = vcmp.eq.s32.totalorder %v1717, %v390
        %vm1722 = vcmp.eq.s32.totalorder %v1717, %v391
        %vm1723 = vcmp.eq.s32.totalorder %v1717, %v392
        %vm1724 = vcmp.eq.s32.totalorder %v1717, %v393
        %vm1725 = vcmp.eq.s32.totalorder %v1717, %v394
        %vm1726 = vcmp.eq.s32.totalorder %v1717, %v395
        %vm1727 = vcmp.eq.s32.totalorder %v1717, %v396
        %vm1728 = vcmp.eq.s32.totalorder %v1717, %v397
        %vm1729 = vcmp.eq.s32.totalorder %v1717, %v398
        %vm1730 = vcmp.eq.s32.totalorder %v1717, %v399
        %vm1731 = vcmp.eq.s32.totalorder %v1717, %v400
        %vm1732 = vcmp.eq.s32.totalorder %v1717, %v401
        %vm1733 = vcmp.eq.s32.totalorder %v1717, %v402
        %vm1734 = vcmp.eq.s32.totalorder %v1717, %v403
        %vm1735 = vcmp.eq.s32.totalorder %v1717, %v404
        %vm1736 = vcmp.eq.s32.totalorder %v1717, %v405
        %vm1737 = vcmp.eq.s32.totalorder %v1717, %v406
        %vm1738 = vcmp.eq.s32.totalorder %v1717, %v407
        %vm1739 = vcmp.eq.s32.totalorder %v1717, %v408
        %vm1740 = vcmp.eq.s32.totalorder %v1717, %v409
        %vm1741 = vcmp.eq.s32.totalorder %v1717, %v410
        %vm1742 = vcmp.eq.s32.totalorder %v1717, %v411
        %vm1743 = vcmp.eq.s32.totalorder %v1717, %v412
        %vm1744 = vcmp.eq.s32.totalorder %v1717, %v413
        %vm1745 = vcmp.eq.s32.totalorder %v1717, %v414
        %vm1746 = vcmp.eq.s32.totalorder %v1717, %v415
        %vm1747 = vcmp.eq.s32.totalorder %v1717, %v416
        %vm1748 = vcmp.eq.s32.totalorder %v1717, %v417
        %vm1749 = vcmp.eq.s32.totalorder %v1717, %v418
        %vm1750 = vcmp.eq.s32.totalorder %v1717, %v419
        %vm1751 = vcmp.eq.s32.totalorder %v1717, %v420
        %vm1752 = vcmp.eq.s32.totalorder %v1717, %v421
        %vm1753 = vcmp.eq.s32.totalorder %v1717, %v422
        %vm1754 = vcmp.eq.s32.totalorder %v1717, %v423
        %vm1755 = vcmp.eq.s32.totalorder %v1717, %v424
        %vm1756 = vcmp.eq.s32.totalorder %v1717, %v425
        %vm1757 = vcmp.eq.s32.totalorder %v1717, %v426
        %vm1758 = vcmp.eq.s32.totalorder %v1717, %v427
        %vm1759 = vcmp.eq.s32.totalorder %v1717, %v428
        %vm1760 = vcmp.eq.s32.totalorder %v1717, %v429
        %vm1761 = vcmp.eq.s32.totalorder %v1717, %v430
        %vm1762 = vcmp.eq.s32.totalorder %v1717, %v431
        %vm1763 = vcmp.eq.s32.totalorder %v1717, %v432
        %vm1764 = vcmp.eq.s32.totalorder %v1717, %v433
        %vm1765 = vcmp.eq.s32.totalorder %v1717, %v434
        %vm1766 = vcmp.eq.s32.totalorder %v1717, %v435
        %vm1767 = vcmp.eq.s32.totalorder %v1717, %v436
        %vm1768 = vcmp.eq.s32.totalorder %v1717, %v437
        %vm1769 = vcmp.eq.s32.totalorder %v1717, %v438
        %vm1770 = vcmp.eq.s32.totalorder %v1717, %v439
        %vm1771 = vcmp.eq.s32.totalorder %v1717, %v440
        %vm1772 = vcmp.eq.s32.totalorder %v1717, %v441
        %vm1773 = vcmp.eq.s32.totalorder %v1717, %v442
        %vm1774 = vcmp.eq.s32.totalorder %v1717, %v443
        %vm1775 = vcmp.eq.s32.totalorder %v1717, %v444
        %vm1776 = vcmp.eq.s32.totalorder %v1717, %v445
        %vm1777 = vcmp.eq.s32.totalorder %v1717, %v446
        %vm1778 = vcmp.eq.s32.totalorder %v1717, %v447
        %vm1779 = vcmp.eq.s32.totalorder %v1717, %v448
        %vm1780 = vcmp.eq.s32.totalorder %v1717, %v449
        %vm1781 = vcmp.eq.s32.totalorder %v1717, %v450
        %v1782 = vlaneseq
        %v1783 = vshrl.u32 %v1782, 7
        %v1784 = vsub.s32 0, %v1783
        %v1785 = vrot.slane %v1712, %v1784
        %v1786 = vsel %vm1718, %v1785, 0.0
        %v1787 = vsel %vm1719, %v1785, 0.0
        %v1788 = vsel %vm1720, %v1785, 0.0
        %v1789 = vsel %vm1721, %v1785, 0.0
        %v1790 = vsel %vm1722, %v1785, 0.0
        %v1791 = vsel %vm1723, %v1785, 0.0
        %v1792 = vsel %vm1724, %v1785, 0.0
        %v1793 = vsel %vm1725, %v1785, 0.0
        %v1794 = vsel %vm1726, %v1785, 0.0
        %v1795 = vsel %vm1727, %v1785, 0.0
        %v1796 = vsel %vm1728, %v1785, 0.0
        %v1797 = vsel %vm1729, %v1785, 0.0
        %v1798 = vsel %vm1730, %v1785, 0.0
        %v1799 = vsel %vm1731, %v1785, 0.0
        %v1800 = vsel %vm1732, %v1785, 0.0
        %v1801 = vsel %vm1733, %v1785, 0.0
        %v1802 = vsel %vm1734, %v1785, 0.0
        %v1803 = vsel %vm1735, %v1785, 0.0
        %v1804 = vsel %vm1736, %v1785, 0.0
        %v1805 = vsel %vm1737, %v1785, 0.0
        %v1806 = vsel %vm1738, %v1785, 0.0
        %v1807 = vsel %vm1739, %v1785, 0.0
        %v1808 = vsel %vm1740, %v1785, 0.0
        %v1809 = vsel %vm1741, %v1785, 0.0
        %v1810 = vsel %vm1742, %v1785, 0.0
        %v1811 = vsel %vm1743, %v1785, 0.0
        %v1812 = vsel %vm1744, %v1785, 0.0
        %v1813 = vsel %vm1745, %v1785, 0.0
        %v1814 = vsel %vm1746, %v1785, 0.0
        %v1815 = vsel %vm1747, %v1785, 0.0
        %v1816 = vsel %vm1748, %v1785, 0.0
        %v1817 = vsel %vm1749, %v1785, 0.0
        %v1818 = vsel %vm1750, %v1785, 0.0
        %v1819 = vsel %vm1751, %v1785, 0.0
        %v1820 = vsel %vm1752, %v1785, 0.0
        %v1821 = vsel %vm1753, %v1785, 0.0
        %v1822 = vsel %vm1754, %v1785, 0.0
        %v1823 = vsel %vm1755, %v1785, 0.0
        %v1824 = vsel %vm1756, %v1785, 0.0
        %v1825 = vsel %vm1757, %v1785, 0.0
        %v1826 = vsel %vm1758, %v1785, 0.0
        %v1827 = vsel %vm1759, %v1785, 0.0
        %v1828 = vsel %vm1760, %v1785, 0.0
        %v1829 = vsel %vm1761, %v1785, 0.0
        %v1830 = vsel %vm1762, %v1785, 0.0
        %v1831 = vsel %vm1763, %v1785, 0.0
        %v1832 = vsel %vm1764, %v1785, 0.0
        %v1833 = vsel %vm1765, %v1785, 0.0
        %v1834 = vsel %vm1766, %v1785, 0.0
        %v1835 = vsel %vm1767, %v1785, 0.0
        %v1836 = vsel %vm1768, %v1785, 0.0
        %v1837 = vsel %vm1769, %v1785, 0.0
        %v1838 = vsel %vm1770, %v1785, 0.0
        %v1839 = vsel %vm1771, %v1785, 0.0
        %v1840 = vsel %vm1772, %v1785, 0.0
        %v1841 = vsel %vm1773, %v1785, 0.0
        %v1842 = vsel %vm1774, %v1785, 0.0
        %v1843 = vsel %vm1775, %v1785, 0.0
        %v1844 = vsel %vm1776, %v1785, 0.0
        %v1845 = vsel %vm1777, %v1785, 0.0
        %v1846 = vsel %vm1778, %v1785, 0.0
        %v1847 = vsel %vm1779, %v1785, 0.0
        %v1848 = vsel %vm1780, %v1785, 0.0
        %v1849 = vsel %vm1781, %v1785, 0.0
        %v1850 = vadd.f32 %v1645, %v1786
        %v1851 = vadd.f32 %v1646, %v1787
        %v1852 = vadd.f32 %v1647, %v1788
        %v1853 = vadd.f32 %v1648, %v1789
        %v1854 = vadd.f32 %v1649, %v1790
        %v1855 = vadd.f32 %v1650, %v1791
        %v1856 = vadd.f32 %v1651, %v1792
        %v1857 = vadd.f32 %v1652, %v1793
        %v1858 = vadd.f32 %v1653, %v1794
        %v1859 = vadd.f32 %v1654, %v1795
        %v1860 = vadd.f32 %v1655, %v1796
        %v1861 = vadd.f32 %v1656, %v1797
        %v1862 = vadd.f32 %v1657, %v1798
        %v1863 = vadd.f32 %v1658, %v1799
        %v1864 = vadd.f32 %v1659, %v1800
        %v1865 = vadd.f32 %v1660, %v1801
        %v1866 = vadd.f32 %v1661, %v1802
        %v1867 = vadd.f32 %v1662, %v1803
        %v1868 = vadd.f32 %v1663, %v1804
        %v1869 = vadd.f32 %v1664, %v1805
        %v1870 = vadd.f32 %v1665, %v1806
        %v1871 = vadd.f32 %v1666, %v1807
        %v1872 = vadd.f32 %v1667, %v1808
        %v1873 = vadd.f32 %v1668, %v1809
        %v1874 = vadd.f32 %v1669, %v1810
        %v1875 = vadd.f32 %v1670, %v1811
        %v1876 = vadd.f32 %v1671, %v1812
        %v1877 = vadd.f32 %v1672, %v1813
        %v1878 = vadd.f32 %v1673, %v1814
        %v1879 = vadd.f32 %v1674, %v1815
        %v1880 = vadd.f32 %v1675, %v1816
        %v1881 = vadd.f32 %v1676, %v1817
        %v1882 = vadd.f32 %v1677, %v1818
        %v1883 = vadd.f32 %v1678, %v1819
        %v1884 = vadd.f32 %v1679, %v1820
        %v1885 = vadd.f32 %v1680, %v1821
        %v1886 = vadd.f32 %v1681, %v1822
        %v1887 = vadd.f32 %v1682, %v1823
        %v1888 = vadd.f32 %v1683, %v1824
        %v1889 = vadd.f32 %v1684, %v1825
        %v1890 = vadd.f32 %v1685, %v1826
        %v1891 = vadd.f32 %v1686, %v1827
        %v1892 = vadd.f32 %v1687, %v1828
        %v1893 = vadd.f32 %v1688, %v1829
        %v1894 = vadd.f32 %v1689, %v1830
        %v1895 = vadd.f32 %v1690, %v1831
        %v1896 = vadd.f32 %v1691, %v1832
        %v1897 = vadd.f32 %v1692, %v1833
        %v1898 = vadd.f32 %v1693, %v1834
        %v1899 = vadd.f32 %v1694, %v1835
        %v1900 = vadd.f32 %v1695, %v1836
        %v1901 = vadd.f32 %v1696, %v1837
        %v1902 = vadd.f32 %v1697, %v1838
        %v1903 = vadd.f32 %v1698, %v1839
        %v1904 = vadd.f32 %v1699, %v1840
        %v1905 = vadd.f32 %v1700, %v1841
        %v1906 = vadd.f32 %v1701, %v1842
        %v1907 = vadd.f32 %v1702, %v1843
        %v1908 = vadd.f32 %v1703, %v1844
        %v1909 = vadd.f32 %v1704, %v1845
        %v1910 = vadd.f32 %v1705, %v1846
        %v1911 = vadd.f32 %v1706, %v1847
        %v1912 = vadd.f32 %v1707, %v1848
        %v1913 = vadd.f32 %v1708, %v1849
        %v1914 = vmul.f32 %v1087, %v1294
        %v1915 = vmul.f32 %v1914, %v500
        %v1916 = vmul.f32 %v1915, %v879
        %v1917 = vmul.f32 %v1916, %v1299
        %v1918 = vadd.s32 %v1092, %v1302
        %v1919 = vlaneseq
        %v1920 = vshrl.u32 %v1919, 7
        %v1921 = vsub.s32 0, %v1920
        %v1922 = vrot.slane %v1918, %v1921
        %vm1923 = vcmp.eq.s32.totalorder %v1922, %v387
        %vm1924 = vcmp.eq.s32.totalorder %v1922, %v388
        %vm1925 = vcmp.eq.s32.totalorder %v1922, %v389
        %vm1926 = vcmp.eq.s32.totalorder %v1922, %v390
        %vm1927 = vcmp.eq.s32.totalorder %v1922, %v391
        %vm1928 = vcmp.eq.s32.totalorder %v1922, %v392
        %vm1929 = vcmp.eq.s32.totalorder %v1922, %v393
        %vm1930 = vcmp.eq.s32.totalorder %v1922, %v394
        %vm1931 = vcmp.eq.s32.totalorder %v1922, %v395
        %vm1932 = vcmp.eq.s32.totalorder %v1922, %v396
        %vm1933 = vcmp.eq.s32.totalorder %v1922, %v397
        %vm1934 = vcmp.eq.s32.totalorder %v1922, %v398
        %vm1935 = vcmp.eq.s32.totalorder %v1922, %v399
        %vm1936 = vcmp.eq.s32.totalorder %v1922, %v400
        %vm1937 = vcmp.eq.s32.totalorder %v1922, %v401
        %vm1938 = vcmp.eq.s32.totalorder %v1922, %v402
        %vm1939 = vcmp.eq.s32.totalorder %v1922, %v403
        %vm1940 = vcmp.eq.s32.totalorder %v1922, %v404
        %vm1941 = vcmp.eq.s32.totalorder %v1922, %v405
        %vm1942 = vcmp.eq.s32.totalorder %v1922, %v406
        %vm1943 = vcmp.eq.s32.totalorder %v1922, %v407
        %vm1944 = vcmp.eq.s32.totalorder %v1922, %v408
        %vm1945 = vcmp.eq.s32.totalorder %v1922, %v409
        %vm1946 = vcmp.eq.s32.totalorder %v1922, %v410
        %vm1947 = vcmp.eq.s32.totalorder %v1922, %v411
        %vm1948 = vcmp.eq.s32.totalorder %v1922, %v412
        %vm1949 = vcmp.eq.s32.totalorder %v1922, %v413
        %vm1950 = vcmp.eq.s32.totalorder %v1922, %v414
        %vm1951 = vcmp.eq.s32.totalorder %v1922, %v415
        %vm1952 = vcmp.eq.s32.totalorder %v1922, %v416
        %vm1953 = vcmp.eq.s32.totalorder %v1922, %v417
        %vm1954 = vcmp.eq.s32.totalorder %v1922, %v418
        %vm1955 = vcmp.eq.s32.totalorder %v1922, %v419
        %vm1956 = vcmp.eq.s32.totalorder %v1922, %v420
        %vm1957 = vcmp.eq.s32.totalorder %v1922, %v421
        %vm1958 = vcmp.eq.s32.totalorder %v1922, %v422
        %vm1959 = vcmp.eq.s32.totalorder %v1922, %v423
        %vm1960 = vcmp.eq.s32.totalorder %v1922, %v424
        %vm1961 = vcmp.eq.s32.totalorder %v1922, %v425
        %vm1962 = vcmp.eq.s32.totalorder %v1922, %v426
        %vm1963 = vcmp.eq.s32.totalorder %v1922, %v427
        %vm1964 = vcmp.eq.s32.totalorder %v1922, %v428
        %vm1965 = vcmp.eq.s32.totalorder %v1922, %v429
        %vm1966 = vcmp.eq.s32.totalorder %v1922, %v430
        %vm1967 = vcmp.eq.s32.totalorder %v1922, %v431
        %vm1968 = vcmp.eq.s32.totalorder %v1922, %v432
        %vm1969 = vcmp.eq.s32.totalorder %v1922, %v433
        %vm1970 = vcmp.eq.s32.totalorder %v1922, %v434
        %vm1971 = vcmp.eq.s32.totalorder %v1922, %v435
        %vm1972 = vcmp.eq.s32.totalorder %v1922, %v436
        %vm1973 = vcmp.eq.s32.totalorder %v1922, %v437
        %vm1974 = vcmp.eq.s32.totalorder %v1922, %v438
        %vm1975 = vcmp.eq.s32.totalorder %v1922, %v439
        %vm1976 = vcmp.eq.s32.totalorder %v1922, %v440
        %vm1977 = vcmp.eq.s32.totalorder %v1922, %v441
        %vm1978 = vcmp.eq.s32.totalorder %v1922, %v442
        %vm1979 = vcmp.eq.s32.totalorder %v1922, %v443
        %vm1980 = vcmp.eq.s32.totalorder %v1922, %v444
        %vm1981 = vcmp.eq.s32.totalorder %v1922, %v445
        %vm1982 = vcmp.eq.s32.totalorder %v1922, %v446
        %vm1983 = vcmp.eq.s32.totalorder %v1922, %v447
        %vm1984 = vcmp.eq.s32.totalorder %v1922, %v448
        %vm1985 = vcmp.eq.s32.totalorder %v1922, %v449
        %vm1986 = vcmp.eq.s32.totalorder %v1922, %v450
        %v1987 = vlaneseq
        %v1988 = vshrl.u32 %v1987, 7
        %v1989 = vsub.s32 0, %v1988
        %v1990 = vrot.slane %v1917, %v1989
        %v1991 = vsel %vm1923, %v1990, 0.0
        %v1992 = vsel %vm1924, %v1990, 0.0
        %v1993 = vsel %vm1925, %v1990, 0.0
        %v1994 = vsel %vm1926, %v1990, 0.0
        %v1995 = vsel %vm1927, %v1990, 0.0
        %v1996 = vsel %vm1928, %v1990, 0.0
        %v1997 = vsel %vm1929, %v1990, 0.0
        %v1998 = vsel %vm1930, %v1990, 0.0
        %v1999 = vsel %vm1931, %v1990, 0.0
        %v2000 = vsel %vm1932, %v1990, 0.0
        %v2001 = vsel %vm1933, %v1990, 0.0
        %v2002 = vsel %vm1934, %v1990, 0.0
        %v2003 = vsel %vm1935, %v1990, 0.0
        %v2004 = vsel %vm1936, %v1990, 0.0
        %v2005 = vsel %vm1937, %v1990, 0.0
        %v2006 = vsel %vm1938, %v1990, 0.0
        %v2007 = vsel %vm1939, %v1990, 0.0
        %v2008 = vsel %vm1940, %v1990, 0.0
        %v2009 = vsel %vm1941, %v1990, 0.0
        %v2010 = vsel %vm1942, %v1990, 0.0
        %v2011 = vsel %vm1943, %v1990, 0.0
        %v2012 = vsel %vm1944, %v1990, 0.0
        %v2013 = vsel %vm1945, %v1990, 0.0
        %v2014 = vsel %vm1946, %v1990, 0.0
        %v2015 = vsel %vm1947, %v1990, 0.0
        %v2016 = vsel %vm1948, %v1990, 0.0
        %v2017 = vsel %vm1949, %v1990, 0.0
        %v2018 = vsel %vm1950, %v1990, 0.0
        %v2019 = vsel %vm1951, %v1990, 0.0
        %v2020 = vsel %vm1952, %v1990, 0.0
        %v2021 = vsel %vm1953, %v1990, 0.0
        %v2022 = vsel %vm1954, %v1990, 0.0
        %v2023 = vsel %vm1955, %v1990, 0.0
        %v2024 = vsel %vm1956, %v1990, 0.0
        %v2025 = vsel %vm1957, %v1990, 0.0
        %v2026 = vsel %vm1958, %v1990, 0.0
        %v2027 = vsel %vm1959, %v1990, 0.0
        %v2028 = vsel %vm1960, %v1990, 0.0
        %v2029 = vsel %vm1961, %v1990, 0.0
        %v2030 = vsel %vm1962, %v1990, 0.0
        %v2031 = vsel %vm1963, %v1990, 0.0
        %v2032 = vsel %vm1964, %v1990, 0.0
        %v2033 = vsel %vm1965, %v1990, 0.0
        %v2034 = vsel %vm1966, %v1990, 0.0
        %v2035 = vsel %vm1967, %v1990, 0.0
        %v2036 = vsel %vm1968, %v1990, 0.0
        %v2037 = vsel %vm1969, %v1990, 0.0
        %v2038 = vsel %vm1970, %v1990, 0.0
        %v2039 = vsel %vm1971, %v1990, 0.0
        %v2040 = vsel %vm1972, %v1990, 0.0
        %v2041 = vsel %vm1973, %v1990, 0.0
        %v2042 = vsel %vm1974, %v1990, 0.0
        %v2043 = vsel %vm1975, %v1990, 0.0
        %v2044 = vsel %vm1976, %v1990, 0.0
        %v2045 = vsel %vm1977, %v1990, 0.0
        %v2046 = vsel %vm1978, %v1990, 0.0
        %v2047 = vsel %vm1979, %v1990, 0.0
        %v2048 = vsel %vm1980, %v1990, 0.0
        %v2049 = vsel %vm1981, %v1990, 0.0
        %v2050 = vsel %vm1982, %v1990, 0.0
        %v2051 = vsel %vm1983, %v1990, 0.0
        %v2052 = vsel %vm1984, %v1990, 0.0
        %v2053 = vsel %vm1985, %v1990, 0.0
        %v2054 = vsel %vm1986, %v1990, 0.0
        %v2055 = vadd.f32 %v1850, %v1991
        %v2056 = vadd.f32 %v1851, %v1992
        %v2057 = vadd.f32 %v1852, %v1993
        %v2058 = vadd.f32 %v1853, %v1994
        %v2059 = vadd.f32 %v1854, %v1995
        %v2060 = vadd.f32 %v1855, %v1996
        %v2061 = vadd.f32 %v1856, %v1997
        %v2062 = vadd.f32 %v1857, %v1998
        %v2063 = vadd.f32 %v1858, %v1999
        %v2064 = vadd.f32 %v1859, %v2000
        %v2065 = vadd.f32 %v1860, %v2001
        %v2066 = vadd.f32 %v1861, %v2002
        %v2067 = vadd.f32 %v1862, %v2003
        %v2068 = vadd.f32 %v1863, %v2004
        %v2069 = vadd.f32 %v1864, %v2005
        %v2070 = vadd.f32 %v1865, %v2006
        %v2071 = vadd.f32 %v1866, %v2007
        %v2072 = vadd.f32 %v1867, %v2008
        %v2073 = vadd.f32 %v1868, %v2009
        %v2074 = vadd.f32 %v1869, %v2010
        %v2075 = vadd.f32 %v1870, %v2011
        %v2076 = vadd.f32 %v1871, %v2012
        %v2077 = vadd.f32 %v1872, %v2013
        %v2078 = vadd.f32 %v1873, %v2014
        %v2079 = vadd.f32 %v1874, %v2015
        %v2080 = vadd.f32 %v1875, %v2016
        %v2081 = vadd.f32 %v1876, %v2017
        %v2082 = vadd.f32 %v1877, %v2018
        %v2083 = vadd.f32 %v1878, %v2019
        %v2084 = vadd.f32 %v1879, %v2020
        %v2085 = vadd.f32 %v1880, %v2021
        %v2086 = vadd.f32 %v1881, %v2022
        %v2087 = vadd.f32 %v1882, %v2023
        %v2088 = vadd.f32 %v1883, %v2024
        %v2089 = vadd.f32 %v1884, %v2025
        %v2090 = vadd.f32 %v1885, %v2026
        %v2091 = vadd.f32 %v1886, %v2027
        %v2092 = vadd.f32 %v1887, %v2028
        %v2093 = vadd.f32 %v1888, %v2029
        %v2094 = vadd.f32 %v1889, %v2030
        %v2095 = vadd.f32 %v1890, %v2031
        %v2096 = vadd.f32 %v1891, %v2032
        %v2097 = vadd.f32 %v1892, %v2033
        %v2098 = vadd.f32 %v1893, %v2034
        %v2099 = vadd.f32 %v1894, %v2035
        %v2100 = vadd.f32 %v1895, %v2036
        %v2101 = vadd.f32 %v1896, %v2037
        %v2102 = vadd.f32 %v1897, %v2038
        %v2103 = vadd.f32 %v1898, %v2039
        %v2104 = vadd.f32 %v1899, %v2040
        %v2105 = vadd.f32 %v1900, %v2041
        %v2106 = vadd.f32 %v1901, %v2042
        %v2107 = vadd.f32 %v1902, %v2043
        %v2108 = vadd.f32 %v1903, %v2044
        %v2109 = vadd.f32 %v1904, %v2045
        %v2110 = vadd.f32 %v1905, %v2046
        %v2111 = vadd.f32 %v1906, %v2047
        %v2112 = vadd.f32 %v1907, %v2048
        %v2113 = vadd.f32 %v1908, %v2049
        %v2114 = vadd.f32 %v1909, %v2050
        %v2115 = vadd.f32 %v1910, %v2051
        %v2116 = vadd.f32 %v1911, %v2052
        %v2117 = vadd.f32 %v1912, %v2053
        %v2118 = vadd.f32 %v1913, %v2054
        %2119 = vmatprep.subr.mxu0 0.0
        %2120 = vmatpush1.msra.mxu0 %v2055
        %2121 = vmatprep.subr.mxu0 0.0
        %2122 = vmatpush1.msra.mxu0 %v2056
        %2123 = vmatprep.subr.mxu0 0.0
        %2124 = vmatpush1.msra.mxu0 %v2057
        %2125 = vmatprep.subr.mxu0 0.0
        %2126 = vmatpush1.msra.mxu0 %v2058
        %2127 = vmatprep.subr.mxu0 0.0
        %2128 = vmatpush1.msra.mxu0 %v2059
        %2129 = vmatprep.subr.mxu0 0.0
        %2130 = vmatpush1.msra.mxu0 %v2060
        %2131 = vmatprep.subr.mxu0 0.0
        %2132 = vmatpush1.msra.mxu0 %v2061
        %2133 = vmatprep.subr.mxu0 0.0
        %2134 = vmatpush1.msra.mxu0 %v2062
        %2135 = vmatprep.subr.mxu0 0.0
        %2136 = vmatpush1.msra.mxu0 %v2063
        %2137 = vmatprep.subr.mxu0 0.0
        %2138 = vmatpush1.msra.mxu0 %v2064
        %2139 = vmatprep.subr.mxu0 0.0
        %2140 = vmatpush1.msra.mxu0 %v2065
        %2141 = vmatprep.subr.mxu0 0.0
        %2142 = vmatpush1.msra.mxu0 %v2066
        %2143 = vmatprep.subr.mxu0 0.0
        %2144 = vmatpush1.msra.mxu0 %v2067
        %2145 = vmatprep.subr.mxu0 0.0
        %2146 = vmatpush1.msra.mxu0 %v2068
        %2147 = vmatprep.subr.mxu0 0.0
        %2148 = vmatpush1.msra.mxu0 %v2069
        %2149 = vmatprep.subr.mxu0 0.0
        %2150 = vmatpush1.msra.mxu0 %v2070
        %2151 = vmatprep.subr.mxu0 0.0
        %2152 = vmatpush1.msra.mxu0 %v2071
        %2153 = vmatprep.subr.mxu0 0.0
        %2154 = vmatpush1.msra.mxu0 %v2072
        %2155 = vmatprep.subr.mxu0 0.0
        %2156 = vmatpush1.msra.mxu0 %v2073
        %2157 = vmatprep.subr.mxu0 0.0
        %2158 = vmatpush1.msra.mxu0 %v2074
        %2159 = vmatprep.subr.mxu0 0.0
        %2160 = vmatpush1.msra.mxu0 %v2075
        %2161 = vmatprep.subr.mxu0 0.0
        %2162 = vmatpush1.msra.mxu0 %v2076
        %2163 = vmatprep.subr.mxu0 0.0
        %2164 = vmatpush1.msra.mxu0 %v2077
        %2165 = vmatprep.subr.mxu0 0.0
        %2166 = vmatpush1.msra.mxu0 %v2078
        %2167 = vmatprep.subr.mxu0 0.0
        %2168 = vmatpush1.msra.mxu0 %v2079
        %2169 = vmatprep.subr.mxu0 0.0
        %2170 = vmatpush1.msra.mxu0 %v2080
        %2171 = vmatprep.subr.mxu0 0.0
        %2172 = vmatpush1.msra.mxu0 %v2081
        %2173 = vmatprep.subr.mxu0 0.0
        %2174 = vmatpush1.msra.mxu0 %v2082
        %2175 = vmatprep.subr.mxu0 0.0
        %2176 = vmatpush1.msra.mxu0 %v2083
        %2177 = vmatprep.subr.mxu0 0.0
        %2178 = vmatpush1.msra.mxu0 %v2084
        %2179 = vmatprep.subr.mxu0 0.0
        %2180 = vmatpush1.msra.mxu0 %v2085
        %2181 = vmatprep.subr.mxu0 0.0
        %2182 = vmatpush1.msra.mxu0 %v2086
        %2183 = vmatprep.mubr.f32.mxu0 %v452
        %2184 = vmatmul.mubr.f32.gmra.mrb[0].mxu0 %v451
        %v2185 = vpop.f32.mrb[0].mxu0
        %v2186 = vadd.f32 0.0, %v2185
        %v2187 = vpop.f32.mrb[0].mxu0
        %2188 = vmatprep.mubr.f32.mxu0 %v456
        %2189 = vmatmul.mubr.f32.gmra.mrb[0].mxu0 %v455
        %v2190 = vpop.f32.mrb[0].mxu0
        %v2191 = vadd.f32 0.0, %v2190
        %v2192 = vpop.f32.mrb[0].mxu0
        %2193 = vdwg.mxu0
        %2194 = vmatprep.subr.mxu0 0.0
        %2195 = vmatpush1.msra.mxu0 %v2087
        %2196 = vmatprep.subr.mxu0 0.0
        %2197 = vmatpush1.msra.mxu0 %v2088
        %2198 = vmatprep.subr.mxu0 0.0
        %2199 = vmatpush1.msra.mxu0 %v2089
        %2200 = vmatprep.subr.mxu0 0.0
        %2201 = vmatpush1.msra.mxu0 %v2090
        %2202 = vmatprep.subr.mxu0 0.0
        %2203 = vmatpush1.msra.mxu0 %v2091
        %2204 = vmatprep.subr.mxu0 0.0
        %2205 = vmatpush1.msra.mxu0 %v2092
        %2206 = vmatprep.subr.mxu0 0.0
        %2207 = vmatpush1.msra.mxu0 %v2093
        %2208 = vmatprep.subr.mxu0 0.0
        %2209 = vmatpush1.msra.mxu0 %v2094
        %2210 = vmatprep.subr.mxu0 0.0
        %2211 = vmatpush1.msra.mxu0 %v2095
        %2212 = vmatprep.subr.mxu0 0.0
        %2213 = vmatpush1.msra.mxu0 %v2096
        %2214 = vmatprep.subr.mxu0 0.0
        %2215 = vmatpush1.msra.mxu0 %v2097
        %2216 = vmatprep.subr.mxu0 0.0
        %2217 = vmatpush1.msra.mxu0 %v2098
        %2218 = vmatprep.subr.mxu0 0.0
        %2219 = vmatpush1.msra.mxu0 %v2099
        %2220 = vmatprep.subr.mxu0 0.0
        %2221 = vmatpush1.msra.mxu0 %v2100
        %2222 = vmatprep.subr.mxu0 0.0
        %2223 = vmatpush1.msra.mxu0 %v2101
        %2224 = vmatprep.subr.mxu0 0.0
        %2225 = vmatpush1.msra.mxu0 %v2102
        %2226 = vmatprep.subr.mxu0 0.0
        %2227 = vmatpush1.msra.mxu0 %v2103
        %2228 = vmatprep.subr.mxu0 0.0
        %2229 = vmatpush1.msra.mxu0 %v2104
        %2230 = vmatprep.subr.mxu0 0.0
        %2231 = vmatpush1.msra.mxu0 %v2105
        %2232 = vmatprep.subr.mxu0 0.0
        %2233 = vmatpush1.msra.mxu0 %v2106
        %2234 = vmatprep.subr.mxu0 0.0
        %2235 = vmatpush1.msra.mxu0 %v2107
        %2236 = vmatprep.subr.mxu0 0.0
        %2237 = vmatpush1.msra.mxu0 %v2108
        %2238 = vmatprep.subr.mxu0 0.0
        %2239 = vmatpush1.msra.mxu0 %v2109
        %2240 = vmatprep.subr.mxu0 0.0
        %2241 = vmatpush1.msra.mxu0 %v2110
        %2242 = vmatprep.subr.mxu0 0.0
        %2243 = vmatpush1.msra.mxu0 %v2111
        %2244 = vmatprep.subr.mxu0 0.0
        %2245 = vmatpush1.msra.mxu0 %v2112
        %2246 = vmatprep.subr.mxu0 0.0
        %2247 = vmatpush1.msra.mxu0 %v2113
        %2248 = vmatprep.subr.mxu0 0.0
        %2249 = vmatpush1.msra.mxu0 %v2114
        %2250 = vmatprep.subr.mxu0 0.0
        %2251 = vmatpush1.msra.mxu0 %v2115
        %2252 = vmatprep.subr.mxu0 0.0
        %2253 = vmatpush1.msra.mxu0 %v2116
        %2254 = vmatprep.subr.mxu0 0.0
        %2255 = vmatpush1.msra.mxu0 %v2117
        %2256 = vmatprep.subr.mxu0 0.0
        %2257 = vmatpush1.msra.mxu0 %v2118
        %2258 = vmatprep.mubr.f32.mxu0 %v454
        %2259 = vmatmul.mubr.f32.gmra.mrb[0].mxu0 %v453
        %v2260 = vpop.f32.mrb[0].mxu0
        %v2261 = vadd.f32 %v2186, %v2260
        %v2262 = vpop.f32.mrb[0].mxu0
        %2263 = vmatprep.mubr.f32.mxu0 %v458
        %2264 = vmatmul.mubr.f32.gmra.mrb[0].mxu0 %v457
        %v2265 = vpop.f32.mrb[0].mxu0
        %v2266 = vadd.f32 %v2191, %v2265
        %v2267 = vpop.f32.mrb[0].mxu0
        %2268 = vdwg.mxu0
        %v2269 = vsub.f32 0.0, %v2266
        %v2270 = vmul.f32 %v2269, 1.442695
        %v2271 = vpow.pop %v2270
        %v2272 = vadd.f32 %v2271, 1.0
        %v2273 = vrcp.pop %v2272
        %v2274 = vmul.f32 1.0, %v2273
        %v2275 = vld [vmem:[%s362] sm:$0x1]
        %v2276 = vsub.f32 1.0, %v2275
        %v2277 = vmul.f32 %v2276, 3.0
        %v2278 = vmul.f32 %v2277, %v2276
        %v2279 = vmul.f32 %v2278, %v2275
        %v2281 = vlaneseq
        %v2282 = vshrl.u32 %v2281, 7
        %v2283 = vsub.s32 0, %v2282
        %v2284 = vrot.slane %v2279, %v2283
        %v2286 = vmul.f32 %v2284, %v2261
        %v2287 = vmul.f32 %v2275, 3.0
        %v2288 = vmul.f32 %v2287, %v2275
        %v2289 = vmul.f32 %v2288, %v2276
        %v2291 = vlaneseq
        %v2292 = vshrl.u32 %v2291, 7
        %v2293 = vsub.s32 0, %v2292
        %v2294 = vrot.slane %v2289, %v2293
        %v2296 = vmul.f32 %v2294, %v2261
        %v2298 = vrot.slane %v2296, 3
        %v2300 = vadd.f32 %v2286, %v2298
        %v2301 = vmul.f32 %v2275, %v2275
        %v2302 = vmul.f32 %v2301, %v2275
        %v2304 = vlaneseq
        %v2305 = vshrl.u32 %v2304, 7
        %v2306 = vsub.s32 0, %v2305
        %v2307 = vrot.slane %v2302, %v2306
        %v2309 = vmul.f32 %v2307, %v2261
        %v2310 = vmul.f32 %v2307, %v2266
        %vm2313 = vcmask 1041408
        %v2314 = vrot.slane %v2309, 6
        %v2315 = vrot.slane %v2310, 6
        %v2316 = vsel %vm2313, %v2314, %v2315
        %v2318 = vadd.f32 %v2300, %v2316
        %v2319 = vlaneseq
        %v2320 = vshrl.u32 %v2319, 7
        %v2321 = vsub.s32 1, %v2320
        %v2322 = vrot.slane %v2274, %v2321
        %v2323 = vmul.f32 %v2318, %v2322
        %v2324 = vadd.f32 %v385, %v2323
        %v2325 = vld [vmem:[#allocation10] sm:$0xff]
        %v2326 = vld [vmem:[#allocation10 + $0x8] sm:$0xff]
        %v2327 = vld [vmem:[#allocation10 + $0x10] sm:$0xff]
        %v2328 = vld [vmem:[#allocation10 + $0x18] sm:$0xff]
        %v2329 = vadd.f32 %v2324, -0.1625
        %v2330 = vmax.f32 %v2329, -1.3
        %v2331 = vmin.f32 %v2330, 1.3
        %v2332 = vmul.f32 %v2331, %v462
        %v2333 = vadd.f32 %v2332, 1e-10
        %v2334 = vfloor.f32 %v2333
        %v2335 = vadd.f32 %v2334, 0.5
        %v2336 = vmul.f32 %v2335, 0.325
        %v2337 = vmax.f32 %v2336, -1.1375
        %v2338 = vmin.f32 %v2337, 1.1375
        %v2339 = vmul.f32 %v2338, %v462
        %v2340 = vadd.f32 %v2339, 1e-10
        %v2341 = vfloor.f32 %v2340
        %v2342 = vadd.f32 %v2341, 4.0
        %vm2343 = vcmp.ge.f32.partialorder %v2342, 0.0
        %vm2344 = vcmp.le.f32.partialorder %v2342, 7.0
        %vm2345 = vmand %vm2343, %vm2344
        %v2346 = vsel %vm2345, 1, 0
        %v2347 = vcvt.s32.f32 %v2346
        %v2348 = vmax.f32 %v2342, 0.0
        %v2349 = vmin.f32 %v2348, 7.0
        %v2350 = vcvt.f32.s32.to.zero.pseudo %v2349
        %v2351 = vadd.f32 %v2324, 0.1625
        %v2352 = vmax.f32 %v2351, -1.3
        %v2353 = vmin.f32 %v2352, 1.3
        %v2354 = vmul.f32 %v2353, %v462
        %v2355 = vadd.f32 %v2354, 1e-10
        %v2356 = vfloor.f32 %v2355
        %v2357 = vadd.f32 %v2356, 0.5
        %v2358 = vmul.f32 %v2357, 0.325
        %v2359 = vmax.f32 %v2358, -1.1375
        %v2360 = vmin.f32 %v2359, 1.1375
        %v2361 = vmul.f32 %v2360, %v462
        %v2362 = vadd.f32 %v2361, 1e-10
        %v2363 = vfloor.f32 %v2362
        %v2364 = vadd.f32 %v2363, 4.0
        %vm2365 = vcmp.ge.f32.partialorder %v2364, 0.0
        %vm2366 = vcmp.le.f32.partialorder %v2364, 7.0
        %vm2367 = vmand %vm2365, %vm2366
        %v2368 = vsel %vm2367, 1, 0
        %v2369 = vcvt.s32.f32 %v2368
        %v2370 = vmax.f32 %v2364, 0.0
        %v2371 = vmin.f32 %v2370, 7.0
        %v2372 = vcvt.f32.s32.to.zero.pseudo %v2371
        %v2373 = vsub.f32 %v2324, %v2338
        %v2374 = vmul.f32 %v2373, %v462
        %v2375 = vsub.f32 1.0, %v2374
        %v2377 = vrot.slane %v2375, 1
        %v2379 = vmul.f32 %v2375, %v2377
        %v2380 = vrot.slane %v2375, 2
        %v2382 = vmul.f32 %v2379, %v2380
        %v2383 = vmul.f32 %v2382, %v2347
        %v2385 = vrot.slane %v2347, 1
        %v2387 = vmul.f32 %v2383, %v2385
        %v2388 = vrot.slane %v2347, 2
        %v2390 = vmul.f32 %v2387, %v2388
        %v2391 = vmul.u32 %v2350, 64
        %v2392 = vmul.u32 %v2350, 8
        %v2393 = vrot.slane %v2392, 1
        %v2394 = vadd.s32 %v2391, %v2393
        %v2395 = vrot.slane %v2350, 2
        %v2396 = vadd.s32 %v2394, %v2395
        %v2397 = vlaneseq
        %v2398 = vshrl.u32 %v2397, 7
        %v2399 = vsub.s32 0, %v2398
        %v2400 = vrot.slane %v2396, %v2399
        %vm2401 = vcmp.eq.s32.totalorder %v2400, %v387
        %vm2402 = vcmp.eq.s32.totalorder %v2400, %v388
        %vm2403 = vcmp.eq.s32.totalorder %v2400, %v389
        %vm2404 = vcmp.eq.s32.totalorder %v2400, %v390
        %vm2405 = vcmp.eq.s32.totalorder %v2400, %v391
        %vm2406 = vcmp.eq.s32.totalorder %v2400, %v392
        %vm2407 = vcmp.eq.s32.totalorder %v2400, %v393
        %vm2408 = vcmp.eq.s32.totalorder %v2400, %v394
        %vm2409 = vcmp.eq.s32.totalorder %v2400, %v395
        %vm2410 = vcmp.eq.s32.totalorder %v2400, %v396
        %vm2411 = vcmp.eq.s32.totalorder %v2400, %v397
        %vm2412 = vcmp.eq.s32.totalorder %v2400, %v398
        %vm2413 = vcmp.eq.s32.totalorder %v2400, %v399
        %vm2414 = vcmp.eq.s32.totalorder %v2400, %v400
        %vm2415 = vcmp.eq.s32.totalorder %v2400, %v401
        %vm2416 = vcmp.eq.s32.totalorder %v2400, %v402
        %vm2417 = vcmp.eq.s32.totalorder %v2400, %v403
        %vm2418 = vcmp.eq.s32.totalorder %v2400, %v404
        %vm2419 = vcmp.eq.s32.totalorder %v2400, %v405
        %vm2420 = vcmp.eq.s32.totalorder %v2400, %v406
        %vm2421 = vcmp.eq.s32.totalorder %v2400, %v407
        %vm2422 = vcmp.eq.s32.totalorder %v2400, %v408
        %vm2423 = vcmp.eq.s32.totalorder %v2400, %v409
        %vm2424 = vcmp.eq.s32.totalorder %v2400, %v410
        %vm2425 = vcmp.eq.s32.totalorder %v2400, %v411
        %vm2426 = vcmp.eq.s32.totalorder %v2400, %v412
        %vm2427 = vcmp.eq.s32.totalorder %v2400, %v413
        %vm2428 = vcmp.eq.s32.totalorder %v2400, %v414
        %vm2429 = vcmp.eq.s32.totalorder %v2400, %v415
        %vm2430 = vcmp.eq.s32.totalorder %v2400, %v416
        %vm2431 = vcmp.eq.s32.totalorder %v2400, %v417
        %vm2432 = vcmp.eq.s32.totalorder %v2400, %v418
        %vm2433 = vcmp.eq.s32.totalorder %v2400, %v419
        %vm2434 = vcmp.eq.s32.totalorder %v2400, %v420
        %vm2435 = vcmp.eq.s32.totalorder %v2400, %v421
        %vm2436 = vcmp.eq.s32.totalorder %v2400, %v422
        %vm2437 = vcmp.eq.s32.totalorder %v2400, %v423
        %vm2438 = vcmp.eq.s32.totalorder %v2400, %v424
        %vm2439 = vcmp.eq.s32.totalorder %v2400, %v425
        %vm2440 = vcmp.eq.s32.totalorder %v2400, %v426
        %vm2441 = vcmp.eq.s32.totalorder %v2400, %v427
        %vm2442 = vcmp.eq.s32.totalorder %v2400, %v428
        %vm2443 = vcmp.eq.s32.totalorder %v2400, %v429
        %vm2444 = vcmp.eq.s32.totalorder %v2400, %v430
        %vm2445 = vcmp.eq.s32.totalorder %v2400, %v431
        %vm2446 = vcmp.eq.s32.totalorder %v2400, %v432
        %vm2447 = vcmp.eq.s32.totalorder %v2400, %v433
        %vm2448 = vcmp.eq.s32.totalorder %v2400, %v434
        %vm2449 = vcmp.eq.s32.totalorder %v2400, %v435
        %vm2450 = vcmp.eq.s32.totalorder %v2400, %v436
        %vm2451 = vcmp.eq.s32.totalorder %v2400, %v437
        %vm2452 = vcmp.eq.s32.totalorder %v2400, %v438
        %vm2453 = vcmp.eq.s32.totalorder %v2400, %v439
        %vm2454 = vcmp.eq.s32.totalorder %v2400, %v440
        %vm2455 = vcmp.eq.s32.totalorder %v2400, %v441
        %vm2456 = vcmp.eq.s32.totalorder %v2400, %v442
        %vm2457 = vcmp.eq.s32.totalorder %v2400, %v443
        %vm2458 = vcmp.eq.s32.totalorder %v2400, %v444
        %vm2459 = vcmp.eq.s32.totalorder %v2400, %v445
        %vm2460 = vcmp.eq.s32.totalorder %v2400, %v446
        %vm2461 = vcmp.eq.s32.totalorder %v2400, %v447
        %vm2462 = vcmp.eq.s32.totalorder %v2400, %v448
        %vm2463 = vcmp.eq.s32.totalorder %v2400, %v449
        %vm2464 = vcmp.eq.s32.totalorder %v2400, %v450
        %v2465 = vlaneseq
        %v2466 = vshrl.u32 %v2465, 7
        %v2467 = vsub.s32 0, %v2466
        %v2468 = vrot.slane %v2390, %v2467
        %v2469 = vsel %vm2401, %v2468, 0.0
        %v2470 = vsel %vm2402, %v2468, 0.0
        %v2471 = vsel %vm2403, %v2468, 0.0
        %v2472 = vsel %vm2404, %v2468, 0.0
        %v2473 = vsel %vm2405, %v2468, 0.0
        %v2474 = vsel %vm2406, %v2468, 0.0
        %v2475 = vsel %vm2407, %v2468, 0.0
        %v2476 = vsel %vm2408, %v2468, 0.0
        %v2477 = vsel %vm2409, %v2468, 0.0
        %v2478 = vsel %vm2410, %v2468, 0.0
        %v2479 = vsel %vm2411, %v2468, 0.0
        %v2480 = vsel %vm2412, %v2468, 0.0
        %v2481 = vsel %vm2413, %v2468, 0.0
        %v2482 = vsel %vm2414, %v2468, 0.0
        %v2483 = vsel %vm2415, %v2468, 0.0
        %v2484 = vsel %vm2416, %v2468, 0.0
        %v2485 = vsel %vm2417, %v2468, 0.0
        %v2486 = vsel %vm2418, %v2468, 0.0
        %v2487 = vsel %vm2419, %v2468, 0.0
        %v2488 = vsel %vm2420, %v2468, 0.0
        %v2489 = vsel %vm2421, %v2468, 0.0
        %v2490 = vsel %vm2422, %v2468, 0.0
        %v2491 = vsel %vm2423, %v2468, 0.0
        %v2492 = vsel %vm2424, %v2468, 0.0
        %v2493 = vsel %vm2425, %v2468, 0.0
        %v2494 = vsel %vm2426, %v2468, 0.0
        %v2495 = vsel %vm2427, %v2468, 0.0
        %v2496 = vsel %vm2428, %v2468, 0.0
        %v2497 = vsel %vm2429, %v2468, 0.0
        %v2498 = vsel %vm2430, %v2468, 0.0
        %v2499 = vsel %vm2431, %v2468, 0.0
        %v2500 = vsel %vm2432, %v2468, 0.0
        %v2501 = vsel %vm2433, %v2468, 0.0
        %v2502 = vsel %vm2434, %v2468, 0.0
        %v2503 = vsel %vm2435, %v2468, 0.0
        %v2504 = vsel %vm2436, %v2468, 0.0
        %v2505 = vsel %vm2437, %v2468, 0.0
        %v2506 = vsel %vm2438, %v2468, 0.0
        %v2507 = vsel %vm2439, %v2468, 0.0
        %v2508 = vsel %vm2440, %v2468, 0.0
        %v2509 = vsel %vm2441, %v2468, 0.0
        %v2510 = vsel %vm2442, %v2468, 0.0
        %v2511 = vsel %vm2443, %v2468, 0.0
        %v2512 = vsel %vm2444, %v2468, 0.0
        %v2513 = vsel %vm2445, %v2468, 0.0
        %v2514 = vsel %vm2446, %v2468, 0.0
        %v2515 = vsel %vm2447, %v2468, 0.0
        %v2516 = vsel %vm2448, %v2468, 0.0
        %v2517 = vsel %vm2449, %v2468, 0.0
        %v2518 = vsel %vm2450, %v2468, 0.0
        %v2519 = vsel %vm2451, %v2468, 0.0
        %v2520 = vsel %vm2452, %v2468, 0.0
        %v2521 = vsel %vm2453, %v2468, 0.0
        %v2522 = vsel %vm2454, %v2468, 0.0
        %v2523 = vsel %vm2455, %v2468, 0.0
        %v2524 = vsel %vm2456, %v2468, 0.0
        %v2525 = vsel %vm2457, %v2468, 0.0
        %v2526 = vsel %vm2458, %v2468, 0.0
        %v2527 = vsel %vm2459, %v2468, 0.0
        %v2528 = vsel %vm2460, %v2468, 0.0
        %v2529 = vsel %vm2461, %v2468, 0.0
        %v2530 = vsel %vm2462, %v2468, 0.0
        %v2531 = vsel %vm2463, %v2468, 0.0
        %v2532 = vsel %vm2464, %v2468, 0.0
        %v2533 = vmul.f32 %v2374, %v2377
        %v2534 = vmul.f32 %v2533, %v2380
        %v2535 = vmul.f32 %v2534, %v2369
        %v2536 = vmul.f32 %v2535, %v2385
        %v2537 = vmul.f32 %v2536, %v2388
        %v2538 = vmul.u32 %v2372, 64
        %v2539 = vadd.s32 %v2538, %v2393
        %v2540 = vadd.s32 %v2539, %v2395
        %v2541 = vlaneseq
        %v2542 = vshrl.u32 %v2541, 7
        %v2543 = vsub.s32 0, %v2542
        %v2544 = vrot.slane %v2540, %v2543
        %vm2545 = vcmp.eq.s32.totalorder %v2544, %v387
        %vm2546 = vcmp.eq.s32.totalorder %v2544, %v388
        %vm2547 = vcmp.eq.s32.totalorder %v2544, %v389
        %vm2548 = vcmp.eq.s32.totalorder %v2544, %v390
        %vm2549 = vcmp.eq.s32.totalorder %v2544, %v391
        %vm2550 = vcmp.eq.s32.totalorder %v2544, %v392
        %vm2551 = vcmp.eq.s32.totalorder %v2544, %v393
        %vm2552 = vcmp.eq.s32.totalorder %v2544, %v394
        %vm2553 = vcmp.eq.s32.totalorder %v2544, %v395
        %vm2554 = vcmp.eq.s32.totalorder %v2544, %v396
        %vm2555 = vcmp.eq.s32.totalorder %v2544, %v397
        %vm2556 = vcmp.eq.s32.totalorder %v2544, %v398
        %vm2557 = vcmp.eq.s32.totalorder %v2544, %v399
        %vm2558 = vcmp.eq.s32.totalorder %v2544, %v400
        %vm2559 = vcmp.eq.s32.totalorder %v2544, %v401
        %vm2560 = vcmp.eq.s32.totalorder %v2544, %v402
        %vm2561 = vcmp.eq.s32.totalorder %v2544, %v403
        %vm2562 = vcmp.eq.s32.totalorder %v2544, %v404
        %vm2563 = vcmp.eq.s32.totalorder %v2544, %v405
        %vm2564 = vcmp.eq.s32.totalorder %v2544, %v406
        %vm2565 = vcmp.eq.s32.totalorder %v2544, %v407
        %vm2566 = vcmp.eq.s32.totalorder %v2544, %v408
        %vm2567 = vcmp.eq.s32.totalorder %v2544, %v409
        %vm2568 = vcmp.eq.s32.totalorder %v2544, %v410
        %vm2569 = vcmp.eq.s32.totalorder %v2544, %v411
        %vm2570 = vcmp.eq.s32.totalorder %v2544, %v412
        %vm2571 = vcmp.eq.s32.totalorder %v2544, %v413
        %vm2572 = vcmp.eq.s32.totalorder %v2544, %v414
        %vm2573 = vcmp.eq.s32.totalorder %v2544, %v415
        %vm2574 = vcmp.eq.s32.totalorder %v2544, %v416
        %vm2575 = vcmp.eq.s32.totalorder %v2544, %v417
        %vm2576 = vcmp.eq.s32.totalorder %v2544, %v418
        %vm2577 = vcmp.eq.s32.totalorder %v2544, %v419
        %vm2578 = vcmp.eq.s32.totalorder %v2544, %v420
        %vm2579 = vcmp.eq.s32.totalorder %v2544, %v421
        %vm2580 = vcmp.eq.s32.totalorder %v2544, %v422
        %vm2581 = vcmp.eq.s32.totalorder %v2544, %v423
        %vm2582 = vcmp.eq.s32.totalorder %v2544, %v424
        %vm2583 = vcmp.eq.s32.totalorder %v2544, %v425
        %vm2584 = vcmp.eq.s32.totalorder %v2544, %v426
        %vm2585 = vcmp.eq.s32.totalorder %v2544, %v427
        %vm2586 = vcmp.eq.s32.totalorder %v2544, %v428
        %vm2587 = vcmp.eq.s32.totalorder %v2544, %v429
        %vm2588 = vcmp.eq.s32.totalorder %v2544, %v430
        %vm2589 = vcmp.eq.s32.totalorder %v2544, %v431
        %vm2590 = vcmp.eq.s32.totalorder %v2544, %v432
        %vm2591 = vcmp.eq.s32.totalorder %v2544, %v433
        %vm2592 = vcmp.eq.s32.totalorder %v2544, %v434
        %vm2593 = vcmp.eq.s32.totalorder %v2544, %v435
        %vm2594 = vcmp.eq.s32.totalorder %v2544, %v436
        %vm2595 = vcmp.eq.s32.totalorder %v2544, %v437
        %vm2596 = vcmp.eq.s32.totalorder %v2544, %v438
        %vm2597 = vcmp.eq.s32.totalorder %v2544, %v439
        %vm2598 = vcmp.eq.s32.totalorder %v2544, %v440
        %vm2599 = vcmp.eq.s32.totalorder %v2544, %v441
        %vm2600 = vcmp.eq.s32.totalorder %v2544, %v442
        %vm2601 = vcmp.eq.s32.totalorder %v2544, %v443
        %vm2602 = vcmp.eq.s32.totalorder %v2544, %v444
        %vm2603 = vcmp.eq.s32.totalorder %v2544, %v445
        %vm2604 = vcmp.eq.s32.totalorder %v2544, %v446
        %vm2605 = vcmp.eq.s32.totalorder %v2544, %v447
        %vm2606 = vcmp.eq.s32.totalorder %v2544, %v448
        %vm2607 = vcmp.eq.s32.totalorder %v2544, %v449
        %vm2608 = vcmp.eq.s32.totalorder %v2544, %v450
        %v2609 = vlaneseq
        %v2610 = vshrl.u32 %v2609, 7
        %v2611 = vsub.s32 0, %v2610
        %v2612 = vrot.slane %v2537, %v2611
        %v2613 = vsel %vm2545, %v2612, 0.0
        %v2614 = vsel %vm2546, %v2612, 0.0
        %v2615 = vsel %vm2547, %v2612, 0.0
        %v2616 = vsel %vm2548, %v2612, 0.0
        %v2617 = vsel %vm2549, %v2612, 0.0
        %v2618 = vsel %vm2550, %v2612, 0.0
        %v2619 = vsel %vm2551, %v2612, 0.0
        %v2620 = vsel %vm2552, %v2612, 0.0
        %v2621 = vsel %vm2553, %v2612, 0.0
        %v2622 = vsel %vm2554, %v2612, 0.0
        %v2623 = vsel %vm2555, %v2612, 0.0
        %v2624 = vsel %vm2556, %v2612, 0.0
        %v2625 = vsel %vm2557, %v2612, 0.0
        %v2626 = vsel %vm2558, %v2612, 0.0
        %v2627 = vsel %vm2559, %v2612, 0.0
        %v2628 = vsel %vm2560, %v2612, 0.0
        %v2629 = vsel %vm2561, %v2612, 0.0
        %v2630 = vsel %vm2562, %v2612, 0.0
        %v2631 = vsel %vm2563, %v2612, 0.0
        %v2632 = vsel %vm2564, %v2612, 0.0
        %v2633 = vsel %vm2565, %v2612, 0.0
        %v2634 = vsel %vm2566, %v2612, 0.0
        %v2635 = vsel %vm2567, %v2612, 0.0
        %v2636 = vsel %vm2568, %v2612, 0.0
        %v2637 = vsel %vm2569, %v2612, 0.0
        %v2638 = vsel %vm2570, %v2612, 0.0
        %v2639 = vsel %vm2571, %v2612, 0.0
        %v2640 = vsel %vm2572, %v2612, 0.0
        %v2641 = vsel %vm2573, %v2612, 0.0
        %v2642 = vsel %vm2574, %v2612, 0.0
        %v2643 = vsel %vm2575, %v2612, 0.0
        %v2644 = vsel %vm2576, %v2612, 0.0
        %v2645 = vsel %vm2577, %v2612, 0.0
        %v2646 = vsel %vm2578, %v2612, 0.0
        %v2647 = vsel %vm2579, %v2612, 0.0
        %v2648 = vsel %vm2580, %v2612, 0.0
        %v2649 = vsel %vm2581, %v2612, 0.0
        %v2650 = vsel %vm2582, %v2612, 0.0
        %v2651 = vsel %vm2583, %v2612, 0.0
        %v2652 = vsel %vm2584, %v2612, 0.0
        %v2653 = vsel %vm2585, %v2612, 0.0
        %v2654 = vsel %vm2586, %v2612, 0.0
        %v2655 = vsel %vm2587, %v2612, 0.0
        %v2656 = vsel %vm2588, %v2612, 0.0
        %v2657 = vsel %vm2589, %v2612, 0.0
        %v2658 = vsel %vm2590, %v2612, 0.0
        %v2659 = vsel %vm2591, %v2612, 0.0
        %v2660 = vsel %vm2592, %v2612, 0.0
        %v2661 = vsel %vm2593, %v2612, 0.0
        %v2662 = vsel %vm2594, %v2612, 0.0
        %v2663 = vsel %vm2595, %v2612, 0.0
        %v2664 = vsel %vm2596, %v2612, 0.0
        %v2665 = vsel %vm2597, %v2612, 0.0
        %v2666 = vsel %vm2598, %v2612, 0.0
        %v2667 = vsel %vm2599, %v2612, 0.0
        %v2668 = vsel %vm2600, %v2612, 0.0
        %v2669 = vsel %vm2601, %v2612, 0.0
        %v2670 = vsel %vm2602, %v2612, 0.0
        %v2671 = vsel %vm2603, %v2612, 0.0
        %v2672 = vsel %vm2604, %v2612, 0.0
        %v2673 = vsel %vm2605, %v2612, 0.0
        %v2674 = vsel %vm2606, %v2612, 0.0
        %v2675 = vsel %vm2607, %v2612, 0.0
        %v2676 = vsel %vm2608, %v2612, 0.0
        %v2677 = vadd.f32 %v2469, %v2613
        %v2678 = vadd.f32 %v2470, %v2614
        %v2679 = vadd.f32 %v2471, %v2615
        %v2680 = vadd.f32 %v2472, %v2616
        %v2681 = vadd.f32 %v2473, %v2617
        %v2682 = vadd.f32 %v2474, %v2618
        %v2683 = vadd.f32 %v2475, %v2619
        %v2684 = vadd.f32 %v2476, %v2620
        %v2685 = vadd.f32 %v2477, %v2621
        %v2686 = vadd.f32 %v2478, %v2622
        %v2687 = vadd.f32 %v2479, %v2623
        %v2688 = vadd.f32 %v2480, %v2624
        %v2689 = vadd.f32 %v2481, %v2625
        %v2690 = vadd.f32 %v2482, %v2626
        %v2691 = vadd.f32 %v2483, %v2627
        %v2692 = vadd.f32 %v2484, %v2628
        %v2693 = vadd.f32 %v2485, %v2629
        %v2694 = vadd.f32 %v2486, %v2630
        %v2695 = vadd.f32 %v2487, %v2631
        %v2696 = vadd.f32 %v2488, %v2632
        %v2697 = vadd.f32 %v2489, %v2633
        %v2698 = vadd.f32 %v2490, %v2634
        %v2699 = vadd.f32 %v2491, %v2635
        %v2700 = vadd.f32 %v2492, %v2636
        %v2701 = vadd.f32 %v2493, %v2637
        %v2702 = vadd.f32 %v2494, %v2638
        %v2703 = vadd.f32 %v2495, %v2639
        %v2704 = vadd.f32 %v2496, %v2640
        %v2705 = vadd.f32 %v2497, %v2641
        %v2706 = vadd.f32 %v2498, %v2642
        %v2707 = vadd.f32 %v2499, %v2643
        %v2708 = vadd.f32 %v2500, %v2644
        %v2709 = vadd.f32 %v2501, %v2645
        %v2710 = vadd.f32 %v2502, %v2646
        %v2711 = vadd.f32 %v2503, %v2647
        %v2712 = vadd.f32 %v2504, %v2648
        %v2713 = vadd.f32 %v2505, %v2649
        %v2714 = vadd.f32 %v2506, %v2650
        %v2715 = vadd.f32 %v2507, %v2651
        %v2716 = vadd.f32 %v2508, %v2652
        %v2717 = vadd.f32 %v2509, %v2653
        %v2718 = vadd.f32 %v2510, %v2654
        %v2719 = vadd.f32 %v2511, %v2655
        %v2720 = vadd.f32 %v2512, %v2656
        %v2721 = vadd.f32 %v2513, %v2657
        %v2722 = vadd.f32 %v2514, %v2658
        %v2723 = vadd.f32 %v2515, %v2659
        %v2724 = vadd.f32 %v2516, %v2660
        %v2725 = vadd.f32 %v2517, %v2661
        %v2726 = vadd.f32 %v2518, %v2662
        %v2727 = vadd.f32 %v2519, %v2663
        %v2728 = vadd.f32 %v2520, %v2664
        %v2729 = vadd.f32 %v2521, %v2665
        %v2730 = vadd.f32 %v2522, %v2666
        %v2731 = vadd.f32 %v2523, %v2667
        %v2732 = vadd.f32 %v2524, %v2668
        %v2733 = vadd.f32 %v2525, %v2669
        %v2734 = vadd.f32 %v2526, %v2670
        %v2735 = vadd.f32 %v2527, %v2671
        %v2736 = vadd.f32 %v2528, %v2672
        %v2737 = vadd.f32 %v2529, %v2673
        %v2738 = vadd.f32 %v2530, %v2674
        %v2739 = vadd.f32 %v2531, %v2675
        %v2740 = vadd.f32 %v2532, %v2676
        %v2742 = vrot.slane %v2374, 1
        %v2744 = vmul.f32 %v2375, %v2742
        %v2745 = vmul.f32 %v2744, %v2380
        %v2746 = vmul.f32 %v2745, %v2347
        %v2748 = vrot.slane %v2369, 1
        %v2750 = vmul.f32 %v2746, %v2748
        %v2751 = vmul.f32 %v2750, %v2388
        %v2752 = vmul.u32 %v2372, 8
        %v2753 = vrot.slane %v2752, 1
        %v2754 = vadd.s32 %v2391, %v2753
        %v2755 = vadd.s32 %v2754, %v2395
        %v2756 = vlaneseq
        %v2757 = vshrl.u32 %v2756, 7
        %v2758 = vsub.s32 0, %v2757
        %v2759 = vrot.slane %v2755, %v2758
        %vm2760 = vcmp.eq.s32.totalorder %v2759, %v387
        %vm2761 = vcmp.eq.s32.totalorder %v2759, %v388
        %vm2762 = vcmp.eq.s32.totalorder %v2759, %v389
        %vm2763 = vcmp.eq.s32.totalorder %v2759, %v390
        %vm2764 = vcmp.eq.s32.totalorder %v2759, %v391
        %vm2765 = vcmp.eq.s32.totalorder %v2759, %v392
        %vm2766 = vcmp.eq.s32.totalorder %v2759, %v393
        %vm2767 = vcmp.eq.s32.totalorder %v2759, %v394
        %vm2768 = vcmp.eq.s32.totalorder %v2759, %v395
        %vm2769 = vcmp.eq.s32.totalorder %v2759, %v396
        %vm2770 = vcmp.eq.s32.totalorder %v2759, %v397
        %vm2771 = vcmp.eq.s32.totalorder %v2759, %v398
        %vm2772 = vcmp.eq.s32.totalorder %v2759, %v399
        %vm2773 = vcmp.eq.s32.totalorder %v2759, %v400
        %vm2774 = vcmp.eq.s32.totalorder %v2759, %v401
        %vm2775 = vcmp.eq.s32.totalorder %v2759, %v402
        %vm2776 = vcmp.eq.s32.totalorder %v2759, %v403
        %vm2777 = vcmp.eq.s32.totalorder %v2759, %v404
        %vm2778 = vcmp.eq.s32.totalorder %v2759, %v405
        %vm2779 = vcmp.eq.s32.totalorder %v2759, %v406
        %vm2780 = vcmp.eq.s32.totalorder %v2759, %v407
        %vm2781 = vcmp.eq.s32.totalorder %v2759, %v408
        %vm2782 = vcmp.eq.s32.totalorder %v2759, %v409
        %vm2783 = vcmp.eq.s32.totalorder %v2759, %v410
        %vm2784 = vcmp.eq.s32.totalorder %v2759, %v411
        %vm2785 = vcmp.eq.s32.totalorder %v2759, %v412
        %vm2786 = vcmp.eq.s32.totalorder %v2759, %v413
        %vm2787 = vcmp.eq.s32.totalorder %v2759, %v414
        %vm2788 = vcmp.eq.s32.totalorder %v2759, %v415
        %vm2789 = vcmp.eq.s32.totalorder %v2759, %v416
        %vm2790 = vcmp.eq.s32.totalorder %v2759, %v417
        %vm2791 = vcmp.eq.s32.totalorder %v2759, %v418
        %vm2792 = vcmp.eq.s32.totalorder %v2759, %v419
        %vm2793 = vcmp.eq.s32.totalorder %v2759, %v420
        %vm2794 = vcmp.eq.s32.totalorder %v2759, %v421
        %vm2795 = vcmp.eq.s32.totalorder %v2759, %v422
        %vm2796 = vcmp.eq.s32.totalorder %v2759, %v423
        %vm2797 = vcmp.eq.s32.totalorder %v2759, %v424
        %vm2798 = vcmp.eq.s32.totalorder %v2759, %v425
        %vm2799 = vcmp.eq.s32.totalorder %v2759, %v426
        %vm2800 = vcmp.eq.s32.totalorder %v2759, %v427
        %vm2801 = vcmp.eq.s32.totalorder %v2759, %v428
        %vm2802 = vcmp.eq.s32.totalorder %v2759, %v429
        %vm2803 = vcmp.eq.s32.totalorder %v2759, %v430
        %vm2804 = vcmp.eq.s32.totalorder %v2759, %v431
        %vm2805 = vcmp.eq.s32.totalorder %v2759, %v432
        %vm2806 = vcmp.eq.s32.totalorder %v2759, %v433
        %vm2807 = vcmp.eq.s32.totalorder %v2759, %v434
        %vm2808 = vcmp.eq.s32.totalorder %v2759, %v435
        %vm2809 = vcmp.eq.s32.totalorder %v2759, %v436
        %vm2810 = vcmp.eq.s32.totalorder %v2759, %v437
        %vm2811 = vcmp.eq.s32.totalorder %v2759, %v438
        %vm2812 = vcmp.eq.s32.totalorder %v2759, %v439
        %vm2813 = vcmp.eq.s32.totalorder %v2759, %v440
        %vm2814 = vcmp.eq.s32.totalorder %v2759, %v441
        %vm2815 = vcmp.eq.s32.totalorder %v2759, %v442
        %vm2816 = vcmp.eq.s32.totalorder %v2759, %v443
        %vm2817 = vcmp.eq.s32.totalorder %v2759, %v444
        %vm2818 = vcmp.eq.s32.totalorder %v2759, %v445
        %vm2819 = vcmp.eq.s32.totalorder %v2759, %v446
        %vm2820 = vcmp.eq.s32.totalorder %v2759, %v447
        %vm2821 = vcmp.eq.s32.totalorder %v2759, %v448
        %vm2822 = vcmp.eq.s32.totalorder %v2759, %v449
        %vm2823 = vcmp.eq.s32.totalorder %v2759, %v450
        %v2824 = vlaneseq
        %v2825 = vshrl.u32 %v2824, 7
        %v2826 = vsub.s32 0, %v2825
        %v2827 = vrot.slane %v2751, %v2826
        %v2828 = vsel %vm2760, %v2827, 0.0
        %v2829 = vsel %vm2761, %v2827, 0.0
        %v2830 = vsel %vm2762, %v2827, 0.0
        %v2831 = vsel %vm2763, %v2827, 0.0
        %v2832 = vsel %vm2764, %v2827, 0.0
        %v2833 = vsel %vm2765, %v2827, 0.0
        %v2834 = vsel %vm2766, %v2827, 0.0
        %v2835 = vsel %vm2767, %v2827, 0.0
        %v2836 = vsel %vm2768, %v2827, 0.0
        %v2837 = vsel %vm2769, %v2827, 0.0
        %v2838 = vsel %vm2770, %v2827, 0.0
        %v2839 = vsel %vm2771, %v2827, 0.0
        %v2840 = vsel %vm2772, %v2827, 0.0
        %v2841 = vsel %vm2773, %v2827, 0.0
        %v2842 = vsel %vm2774, %v2827, 0.0
        %v2843 = vsel %vm2775, %v2827, 0.0
        %v2844 = vsel %vm2776, %v2827, 0.0
        %v2845 = vsel %vm2777, %v2827, 0.0
        %v2846 = vsel %vm2778, %v2827, 0.0
        %v2847 = vsel %vm2779, %v2827, 0.0
        %v2848 = vsel %vm2780, %v2827, 0.0
        %v2849 = vsel %vm2781, %v2827, 0.0
        %v2850 = vsel %vm2782, %v2827, 0.0
        %v2851 = vsel %vm2783, %v2827, 0.0
        %v2852 = vsel %vm2784, %v2827, 0.0
        %v2853 = vsel %vm2785, %v2827, 0.0
        %v2854 = vsel %vm2786, %v2827, 0.0
        %v2855 = vsel %vm2787, %v2827, 0.0
        %v2856 = vsel %vm2788, %v2827, 0.0
        %v2857 = vsel %vm2789, %v2827, 0.0
        %v2858 = vsel %vm2790, %v2827, 0.0
        %v2859 = vsel %vm2791, %v2827, 0.0
        %v2860 = vsel %vm2792, %v2827, 0.0
        %v2861 = vsel %vm2793, %v2827, 0.0
        %v2862 = vsel %vm2794, %v2827, 0.0
        %v2863 = vsel %vm2795, %v2827, 0.0
        %v2864 = vsel %vm2796, %v2827, 0.0
        %v2865 = vsel %vm2797, %v2827, 0.0
        %v2866 = vsel %vm2798, %v2827, 0.0
        %v2867 = vsel %vm2799, %v2827, 0.0
        %v2868 = vsel %vm2800, %v2827, 0.0
        %v2869 = vsel %vm2801, %v2827, 0.0
        %v2870 = vsel %vm2802, %v2827, 0.0
        %v2871 = vsel %vm2803, %v2827, 0.0
        %v2872 = vsel %vm2804, %v2827, 0.0
        %v2873 = vsel %vm2805, %v2827, 0.0
        %v2874 = vsel %vm2806, %v2827, 0.0
        %v2875 = vsel %vm2807, %v2827, 0.0
        %v2876 = vsel %vm2808, %v2827, 0.0
        %v2877 = vsel %vm2809, %v2827, 0.0
        %v2878 = vsel %vm2810, %v2827, 0.0
        %v2879 = vsel %vm2811, %v2827, 0.0
        %v2880 = vsel %vm2812, %v2827, 0.0
        %v2881 = vsel %vm2813, %v2827, 0.0
        %v2882 = vsel %vm2814, %v2827, 0.0
        %v2883 = vsel %vm2815, %v2827, 0.0
        %v2884 = vsel %vm2816, %v2827, 0.0
        %v2885 = vsel %vm2817, %v2827, 0.0
        %v2886 = vsel %vm2818, %v2827, 0.0
        %v2887 = vsel %vm2819, %v2827, 0.0
        %v2888 = vsel %vm2820, %v2827, 0.0
        %v2889 = vsel %vm2821, %v2827, 0.0
        %v2890 = vsel %vm2822, %v2827, 0.0
        %v2891 = vsel %vm2823, %v2827, 0.0
        %v2892 = vadd.f32 %v2677, %v2828
        %v2893 = vadd.f32 %v2678, %v2829
        %v2894 = vadd.f32 %v2679, %v2830
        %v2895 = vadd.f32 %v2680, %v2831
        %v2896 = vadd.f32 %v2681, %v2832
        %v2897 = vadd.f32 %v2682, %v2833
        %v2898 = vadd.f32 %v2683, %v2834
        %v2899 = vadd.f32 %v2684, %v2835
        %v2900 = vadd.f32 %v2685, %v2836
        %v2901 = vadd.f32 %v2686, %v2837
        %v2902 = vadd.f32 %v2687, %v2838
        %v2903 = vadd.f32 %v2688, %v2839
        %v2904 = vadd.f32 %v2689, %v2840
        %v2905 = vadd.f32 %v2690, %v2841
        %v2906 = vadd.f32 %v2691, %v2842
        %v2907 = vadd.f32 %v2692, %v2843
        %v2908 = vadd.f32 %v2693, %v2844
        %v2909 = vadd.f32 %v2694, %v2845
        %v2910 = vadd.f32 %v2695, %v2846
        %v2911 = vadd.f32 %v2696, %v2847
        %v2912 = vadd.f32 %v2697, %v2848
        %v2913 = vadd.f32 %v2698, %v2849
        %v2914 = vadd.f32 %v2699, %v2850
        %v2915 = vadd.f32 %v2700, %v2851
        %v2916 = vadd.f32 %v2701, %v2852
        %v2917 = vadd.f32 %v2702, %v2853
        %v2918 = vadd.f32 %v2703, %v2854
        %v2919 = vadd.f32 %v2704, %v2855
        %v2920 = vadd.f32 %v2705, %v2856
        %v2921 = vadd.f32 %v2706, %v2857
        %v2922 = vadd.f32 %v2707, %v2858
        %v2923 = vadd.f32 %v2708, %v2859
        %v2924 = vadd.f32 %v2709, %v2860
        %v2925 = vadd.f32 %v2710, %v2861
        %v2926 = vadd.f32 %v2711, %v2862
        %v2927 = vadd.f32 %v2712, %v2863
        %v2928 = vadd.f32 %v2713, %v2864
        %v2929 = vadd.f32 %v2714, %v2865
        %v2930 = vadd.f32 %v2715, %v2866
        %v2931 = vadd.f32 %v2716, %v2867
        %v2932 = vadd.f32 %v2717, %v2868
        %v2933 = vadd.f32 %v2718, %v2869
        %v2934 = vadd.f32 %v2719, %v2870
        %v2935 = vadd.f32 %v2720, %v2871
        %v2936 = vadd.f32 %v2721, %v2872
        %v2937 = vadd.f32 %v2722, %v2873
        %v2938 = vadd.f32 %v2723, %v2874
        %v2939 = vadd.f32 %v2724, %v2875
        %v2940 = vadd.f32 %v2725, %v2876
        %v2941 = vadd.f32 %v2726, %v2877
        %v2942 = vadd.f32 %v2727, %v2878
        %v2943 = vadd.f32 %v2728, %v2879
        %v2944 = vadd.f32 %v2729, %v2880
        %v2945 = vadd.f32 %v2730, %v2881
        %v2946 = vadd.f32 %v2731, %v2882
        %v2947 = vadd.f32 %v2732, %v2883
        %v2948 = vadd.f32 %v2733, %v2884
        %v2949 = vadd.f32 %v2734, %v2885
        %v2950 = vadd.f32 %v2735, %v2886
        %v2951 = vadd.f32 %v2736, %v2887
        %v2952 = vadd.f32 %v2737, %v2888
        %v2953 = vadd.f32 %v2738, %v2889
        %v2954 = vadd.f32 %v2739, %v2890
        %v2955 = vadd.f32 %v2740, %v2891
        %v2956 = vmul.f32 %v2374, %v2742
        %v2957 = vmul.f32 %v2956, %v2380
        %v2958 = vmul.f32 %v2957, %v2369
        %v2959 = vmul.f32 %v2958, %v2748
        %v2960 = vmul.f32 %v2959, %v2388
        %v2961 = vadd.s32 %v2538, %v2753
        %v2962 = vadd.s32 %v2961, %v2395
        %v2963 = vlaneseq
        %v2964 = vshrl.u32 %v2963, 7
        %v2965 = vsub.s32 0, %v2964
        %v2966 = vrot.slane %v2962, %v2965
        %vm2967 = vcmp.eq.s32.totalorder %v2966, %v387
        %vm2968 = vcmp.eq.s32.totalorder %v2966, %v388
        %vm2969 = vcmp.eq.s32.totalorder %v2966, %v389
        %vm2970 = vcmp.eq.s32.totalorder %v2966, %v390
        %vm2971 = vcmp.eq.s32.totalorder %v2966, %v391
        %vm2972 = vcmp.eq.s32.totalorder %v2966, %v392
        %vm2973 = vcmp.eq.s32.totalorder %v2966, %v393
        %vm2974 = vcmp.eq.s32.totalorder %v2966, %v394
        %vm2975 = vcmp.eq.s32.totalorder %v2966, %v395
        %vm2976 = vcmp.eq.s32.totalorder %v2966, %v396
        %vm2977 = vcmp.eq.s32.totalorder %v2966, %v397
        %vm2978 = vcmp.eq.s32.totalorder %v2966, %v398
        %vm2979 = vcmp.eq.s32.totalorder %v2966, %v399
        %vm2980 = vcmp.eq.s32.totalorder %v2966, %v400
        %vm2981 = vcmp.eq.s32.totalorder %v2966, %v401
        %vm2982 = vcmp.eq.s32.totalorder %v2966, %v402
        %vm2983 = vcmp.eq.s32.totalorder %v2966, %v403
        %vm2984 = vcmp.eq.s32.totalorder %v2966, %v404
        %vm2985 = vcmp.eq.s32.totalorder %v2966, %v405
        %vm2986 = vcmp.eq.s32.totalorder %v2966, %v406
        %vm2987 = vcmp.eq.s32.totalorder %v2966, %v407
        %vm2988 = vcmp.eq.s32.totalorder %v2966, %v408
        %vm2989 = vcmp.eq.s32.totalorder %v2966, %v409
        %vm2990 = vcmp.eq.s32.totalorder %v2966, %v410
        %vm2991 = vcmp.eq.s32.totalorder %v2966, %v411
        %vm2992 = vcmp.eq.s32.totalorder %v2966, %v412
        %vm2993 = vcmp.eq.s32.totalorder %v2966, %v413
        %vm2994 = vcmp.eq.s32.totalorder %v2966, %v414
        %vm2995 = vcmp.eq.s32.totalorder %v2966, %v415
        %vm2996 = vcmp.eq.s32.totalorder %v2966, %v416
        %vm2997 = vcmp.eq.s32.totalorder %v2966, %v417
        %vm2998 = vcmp.eq.s32.totalorder %v2966, %v418
        %vm2999 = vcmp.eq.s32.totalorder %v2966, %v419
        %vm3000 = vcmp.eq.s32.totalorder %v2966, %v420
        %vm3001 = vcmp.eq.s32.totalorder %v2966, %v421
        %vm3002 = vcmp.eq.s32.totalorder %v2966, %v422
        %vm3003 = vcmp.eq.s32.totalorder %v2966, %v423
        %vm3004 = vcmp.eq.s32.totalorder %v2966, %v424
        %vm3005 = vcmp.eq.s32.totalorder %v2966, %v425
        %vm3006 = vcmp.eq.s32.totalorder %v2966, %v426
        %vm3007 = vcmp.eq.s32.totalorder %v2966, %v427
        %vm3008 = vcmp.eq.s32.totalorder %v2966, %v428
        %vm3009 = vcmp.eq.s32.totalorder %v2966, %v429
        %vm3010 = vcmp.eq.s32.totalorder %v2966, %v430
        %vm3011 = vcmp.eq.s32.totalorder %v2966, %v431
        %vm3012 = vcmp.eq.s32.totalorder %v2966, %v432
        %vm3013 = vcmp.eq.s32.totalorder %v2966, %v433
        %vm3014 = vcmp.eq.s32.totalorder %v2966, %v434
        %vm3015 = vcmp.eq.s32.totalorder %v2966, %v435
        %vm3016 = vcmp.eq.s32.totalorder %v2966, %v436
        %vm3017 = vcmp.eq.s32.totalorder %v2966, %v437
        %vm3018 = vcmp.eq.s32.totalorder %v2966, %v438
        %vm3019 = vcmp.eq.s32.totalorder %v2966, %v439
        %vm3020 = vcmp.eq.s32.totalorder %v2966, %v440
        %vm3021 = vcmp.eq.s32.totalorder %v2966, %v441
        %vm3022 = vcmp.eq.s32.totalorder %v2966, %v442
        %vm3023 = vcmp.eq.s32.totalorder %v2966, %v443
        %vm3024 = vcmp.eq.s32.totalorder %v2966, %v444
        %vm3025 = vcmp.eq.s32.totalorder %v2966, %v445
        %vm3026 = vcmp.eq.s32.totalorder %v2966, %v446
        %vm3027 = vcmp.eq.s32.totalorder %v2966, %v447
        %vm3028 = vcmp.eq.s32.totalorder %v2966, %v448
        %vm3029 = vcmp.eq.s32.totalorder %v2966, %v449
        %vm3030 = vcmp.eq.s32.totalorder %v2966, %v450
        %v3031 = vlaneseq
        %v3032 = vshrl.u32 %v3031, 7
        %v3033 = vsub.s32 0, %v3032
        %v3034 = vrot.slane %v2960, %v3033
        %v3035 = vsel %vm2967, %v3034, 0.0
        %v3036 = vsel %vm2968, %v3034, 0.0
        %v3037 = vsel %vm2969, %v3034, 0.0
        %v3038 = vsel %vm2970, %v3034, 0.0
        %v3039 = vsel %vm2971, %v3034, 0.0
        %v3040 = vsel %vm2972, %v3034, 0.0
        %v3041 = vsel %vm2973, %v3034, 0.0
        %v3042 = vsel %vm2974, %v3034, 0.0
        %v3043 = vsel %vm2975, %v3034, 0.0
        %v3044 = vsel %vm2976, %v3034, 0.0
        %v3045 = vsel %vm2977, %v3034, 0.0
        %v3046 = vsel %vm2978, %v3034, 0.0
        %v3047 = vsel %vm2979, %v3034, 0.0
        %v3048 = vsel %vm2980, %v3034, 0.0
        %v3049 = vsel %vm2981, %v3034, 0.0
        %v3050 = vsel %vm2982, %v3034, 0.0
        %v3051 = vsel %vm2983, %v3034, 0.0
        %v3052 = vsel %vm2984, %v3034, 0.0
        %v3053 = vsel %vm2985, %v3034, 0.0
        %v3054 = vsel %vm2986, %v3034, 0.0
        %v3055 = vsel %vm2987, %v3034, 0.0
        %v3056 = vsel %vm2988, %v3034, 0.0
        %v3057 = vsel %vm2989, %v3034, 0.0
        %v3058 = vsel %vm2990, %v3034, 0.0
        %v3059 = vsel %vm2991, %v3034, 0.0
        %v3060 = vsel %vm2992, %v3034, 0.0
        %v3061 = vsel %vm2993, %v3034, 0.0
        %v3062 = vsel %vm2994, %v3034, 0.0
        %v3063 = vsel %vm2995, %v3034, 0.0
        %v3064 = vsel %vm2996, %v3034, 0.0
        %v3065 = vsel %vm2997, %v3034, 0.0
        %v3066 = vsel %vm2998, %v3034, 0.0
        %v3067 = vsel %vm2999, %v3034, 0.0
        %v3068 = vsel %vm3000, %v3034, 0.0
        %v3069 = vsel %vm3001, %v3034, 0.0
        %v3070 = vsel %vm3002, %v3034, 0.0
        %v3071 = vsel %vm3003, %v3034, 0.0
        %v3072 = vsel %vm3004, %v3034, 0.0
        %v3073 = vsel %vm3005, %v3034, 0.0
        %v3074 = vsel %vm3006, %v3034, 0.0
        %v3075 = vsel %vm3007, %v3034, 0.0
        %v3076 = vsel %vm3008, %v3034, 0.0
        %v3077 = vsel %vm3009, %v3034, 0.0
        %v3078 = vsel %vm3010, %v3034, 0.0
        %v3079 = vsel %vm3011, %v3034, 0.0
        %v3080 = vsel %vm3012, %v3034, 0.0
        %v3081 = vsel %vm3013, %v3034, 0.0
        %v3082 = vsel %vm3014, %v3034, 0.0
        %v3083 = vsel %vm3015, %v3034, 0.0
        %v3084 = vsel %vm3016, %v3034, 0.0
        %v3085 = vsel %vm3017, %v3034, 0.0
        %v3086 = vsel %vm3018, %v3034, 0.0
        %v3087 = vsel %vm3019, %v3034, 0.0
        %v3088 = vsel %vm3020, %v3034, 0.0
        %v3089 = vsel %vm3021, %v3034, 0.0
        %v3090 = vsel %vm3022, %v3034, 0.0
        %v3091 = vsel %vm3023, %v3034, 0.0
        %v3092 = vsel %vm3024, %v3034, 0.0
        %v3093 = vsel %vm3025, %v3034, 0.0
        %v3094 = vsel %vm3026, %v3034, 0.0
        %v3095 = vsel %vm3027, %v3034, 0.0
        %v3096 = vsel %vm3028, %v3034, 0.0
        %v3097 = vsel %vm3029, %v3034, 0.0
        %v3098 = vsel %vm3030, %v3034, 0.0
        %v3099 = vadd.f32 %v2892, %v3035
        %v3100 = vadd.f32 %v2893, %v3036
        %v3101 = vadd.f32 %v2894, %v3037
        %v3102 = vadd.f32 %v2895, %v3038
        %v3103 = vadd.f32 %v2896, %v3039
        %v3104 = vadd.f32 %v2897, %v3040
        %v3105 = vadd.f32 %v2898, %v3041
        %v3106 = vadd.f32 %v2899, %v3042
        %v3107 = vadd.f32 %v2900, %v3043
        %v3108 = vadd.f32 %v2901, %v3044
        %v3109 = vadd.f32 %v2902, %v3045
        %v3110 = vadd.f32 %v2903, %v3046
        %v3111 = vadd.f32 %v2904, %v3047
        %v3112 = vadd.f32 %v2905, %v3048
        %v3113 = vadd.f32 %v2906, %v3049
        %v3114 = vadd.f32 %v2907, %v3050
        %v3115 = vadd.f32 %v2908, %v3051
        %v3116 = vadd.f32 %v2909, %v3052
        %v3117 = vadd.f32 %v2910, %v3053
        %v3118 = vadd.f32 %v2911, %v3054
        %v3119 = vadd.f32 %v2912, %v3055
        %v3120 = vadd.f32 %v2913, %v3056
        %v3121 = vadd.f32 %v2914, %v3057
        %v3122 = vadd.f32 %v2915, %v3058
        %v3123 = vadd.f32 %v2916, %v3059
        %v3124 = vadd.f32 %v2917, %v3060
        %v3125 = vadd.f32 %v2918, %v3061
        %v3126 = vadd.f32 %v2919, %v3062
        %v3127 = vadd.f32 %v2920, %v3063
        %v3128 = vadd.f32 %v2921, %v3064
        %v3129 = vadd.f32 %v2922, %v3065
        %v3130 = vadd.f32 %v2923, %v3066
        %v3131 = vadd.f32 %v2924, %v3067
        %v3132 = vadd.f32 %v2925, %v3068
        %v3133 = vadd.f32 %v2926, %v3069
        %v3134 = vadd.f32 %v2927, %v3070
        %v3135 = vadd.f32 %v2928, %v3071
        %v3136 = vadd.f32 %v2929, %v3072
        %v3137 = vadd.f32 %v2930, %v3073
        %v3138 = vadd.f32 %v2931, %v3074
        %v3139 = vadd.f32 %v2932, %v3075
        %v3140 = vadd.f32 %v2933, %v3076
        %v3141 = vadd.f32 %v2934, %v3077
        %v3142 = vadd.f32 %v2935, %v3078
        %v3143 = vadd.f32 %v2936, %v3079
        %v3144 = vadd.f32 %v2937, %v3080
        %v3145 = vadd.f32 %v2938, %v3081
        %v3146 = vadd.f32 %v2939, %v3082
        %v3147 = vadd.f32 %v2940, %v3083
        %v3148 = vadd.f32 %v2941, %v3084
        %v3149 = vadd.f32 %v2942, %v3085
        %v3150 = vadd.f32 %v2943, %v3086
        %v3151 = vadd.f32 %v2944, %v3087
        %v3152 = vadd.f32 %v2945, %v3088
        %v3153 = vadd.f32 %v2946, %v3089
        %v3154 = vadd.f32 %v2947, %v3090
        %v3155 = vadd.f32 %v2948, %v3091
        %v3156 = vadd.f32 %v2949, %v3092
        %v3157 = vadd.f32 %v2950, %v3093
        %v3158 = vadd.f32 %v2951, %v3094
        %v3159 = vadd.f32 %v2952, %v3095
        %v3160 = vadd.f32 %v2953, %v3096
        %v3161 = vadd.f32 %v2954, %v3097
        %v3162 = vadd.f32 %v2955, %v3098
        %v3163 = vrot.slane %v2374, 2
        %v3165 = vmul.f32 %v2379, %v3163
        %v3166 = vmul.f32 %v3165, %v2347
        %v3167 = vmul.f32 %v3166, %v2385
        %v3168 = vrot.slane %v2369, 2
        %v3170 = vmul.f32 %v3167, %v3168
        %v3171 = vrot.slane %v2372, 2
        %v3172 = vadd.s32 %v2394, %v3171
        %v3173 = vlaneseq
        %v3174 = vshrl.u32 %v3173, 7
        %v3175 = vsub.s32 0, %v3174
        %v3176 = vrot.slane %v3172, %v3175
        %vm3177 = vcmp.eq.s32.totalorder %v3176, %v387
        %vm3178 = vcmp.eq.s32.totalorder %v3176, %v388
        %vm3179 = vcmp.eq.s32.totalorder %v3176, %v389
        %vm3180 = vcmp.eq.s32.totalorder %v3176, %v390
        %vm3181 = vcmp.eq.s32.totalorder %v3176, %v391
        %vm3182 = vcmp.eq.s32.totalorder %v3176, %v392
        %vm3183 = vcmp.eq.s32.totalorder %v3176, %v393
        %vm3184 = vcmp.eq.s32.totalorder %v3176, %v394
        %vm3185 = vcmp.eq.s32.totalorder %v3176, %v395
        %vm3186 = vcmp.eq.s32.totalorder %v3176, %v396
        %vm3187 = vcmp.eq.s32.totalorder %v3176, %v397
        %vm3188 = vcmp.eq.s32.totalorder %v3176, %v398
        %vm3189 = vcmp.eq.s32.totalorder %v3176, %v399
        %vm3190 = vcmp.eq.s32.totalorder %v3176, %v400
        %vm3191 = vcmp.eq.s32.totalorder %v3176, %v401
        %vm3192 = vcmp.eq.s32.totalorder %v3176, %v402
        %vm3193 = vcmp.eq.s32.totalorder %v3176, %v403
        %vm3194 = vcmp.eq.s32.totalorder %v3176, %v404
        %vm3195 = vcmp.eq.s32.totalorder %v3176, %v405
        %vm3196 = vcmp.eq.s32.totalorder %v3176, %v406
        %vm3197 = vcmp.eq.s32.totalorder %v3176, %v407
        %vm3198 = vcmp.eq.s32.totalorder %v3176, %v408
        %vm3199 = vcmp.eq.s32.totalorder %v3176, %v409
        %vm3200 = vcmp.eq.s32.totalorder %v3176, %v410
        %vm3201 = vcmp.eq.s32.totalorder %v3176, %v411
        %vm3202 = vcmp.eq.s32.totalorder %v3176, %v412
        %vm3203 = vcmp.eq.s32.totalorder %v3176, %v413
        %vm3204 = vcmp.eq.s32.totalorder %v3176, %v414
        %vm3205 = vcmp.eq.s32.totalorder %v3176, %v415
        %vm3206 = vcmp.eq.s32.totalorder %v3176, %v416
        %vm3207 = vcmp.eq.s32.totalorder %v3176, %v417
        %vm3208 = vcmp.eq.s32.totalorder %v3176, %v418
        %vm3209 = vcmp.eq.s32.totalorder %v3176, %v419
        %vm3210 = vcmp.eq.s32.totalorder %v3176, %v420
        %vm3211 = vcmp.eq.s32.totalorder %v3176, %v421
        %vm3212 = vcmp.eq.s32.totalorder %v3176, %v422
        %vm3213 = vcmp.eq.s32.totalorder %v3176, %v423
        %vm3214 = vcmp.eq.s32.totalorder %v3176, %v424
        %vm3215 = vcmp.eq.s32.totalorder %v3176, %v425
        %vm3216 = vcmp.eq.s32.totalorder %v3176, %v426
        %vm3217 = vcmp.eq.s32.totalorder %v3176, %v427
        %vm3218 = vcmp.eq.s32.totalorder %v3176, %v428
        %vm3219 = vcmp.eq.s32.totalorder %v3176, %v429
        %vm3220 = vcmp.eq.s32.totalorder %v3176, %v430
        %vm3221 = vcmp.eq.s32.totalorder %v3176, %v431
        %vm3222 = vcmp.eq.s32.totalorder %v3176, %v432
        %vm3223 = vcmp.eq.s32.totalorder %v3176, %v433
        %vm3224 = vcmp.eq.s32.totalorder %v3176, %v434
        %vm3225 = vcmp.eq.s32.totalorder %v3176, %v435
        %vm3226 = vcmp.eq.s32.totalorder %v3176, %v436
        %vm3227 = vcmp.eq.s32.totalorder %v3176, %v437
        %vm3228 = vcmp.eq.s32.totalorder %v3176, %v438
        %vm3229 = vcmp.eq.s32.totalorder %v3176, %v439
        %vm3230 = vcmp.eq.s32.totalorder %v3176, %v440
        %vm3231 = vcmp.eq.s32.totalorder %v3176, %v441
        %vm3232 = vcmp.eq.s32.totalorder %v3176, %v442
        %vm3233 = vcmp.eq.s32.totalorder %v3176, %v443
        %vm3234 = vcmp.eq.s32.totalorder %v3176, %v444
        %vm3235 = vcmp.eq.s32.totalorder %v3176, %v445
        %vm3236 = vcmp.eq.s32.totalorder %v3176, %v446
        %vm3237 = vcmp.eq.s32.totalorder %v3176, %v447
        %vm3238 = vcmp.eq.s32.totalorder %v3176, %v448
        %vm3239 = vcmp.eq.s32.totalorder %v3176, %v449
        %vm3240 = vcmp.eq.s32.totalorder %v3176, %v450
        %v3241 = vlaneseq
        %v3242 = vshrl.u32 %v3241, 7
        %v3243 = vsub.s32 0, %v3242
        %v3244 = vrot.slane %v3170, %v3243
        %v3245 = vsel %vm3177, %v3244, 0.0
        %v3246 = vsel %vm3178, %v3244, 0.0
        %v3247 = vsel %vm3179, %v3244, 0.0
        %v3248 = vsel %vm3180, %v3244, 0.0
        %v3249 = vsel %vm3181, %v3244, 0.0
        %v3250 = vsel %vm3182, %v3244, 0.0
        %v3251 = vsel %vm3183, %v3244, 0.0
        %v3252 = vsel %vm3184, %v3244, 0.0
        %v3253 = vsel %vm3185, %v3244, 0.0
        %v3254 = vsel %vm3186, %v3244, 0.0
        %v3255 = vsel %vm3187, %v3244, 0.0
        %v3256 = vsel %vm3188, %v3244, 0.0
        %v3257 = vsel %vm3189, %v3244, 0.0
        %v3258 = vsel %vm3190, %v3244, 0.0
        %v3259 = vsel %vm3191, %v3244, 0.0
        %v3260 = vsel %vm3192, %v3244, 0.0
        %v3261 = vsel %vm3193, %v3244, 0.0
        %v3262 = vsel %vm3194, %v3244, 0.0
        %v3263 = vsel %vm3195, %v3244, 0.0
        %v3264 = vsel %vm3196, %v3244, 0.0
        %v3265 = vsel %vm3197, %v3244, 0.0
        %v3266 = vsel %vm3198, %v3244, 0.0
        %v3267 = vsel %vm3199, %v3244, 0.0
        %v3268 = vsel %vm3200, %v3244, 0.0
        %v3269 = vsel %vm3201, %v3244, 0.0
        %v3270 = vsel %vm3202, %v3244, 0.0
        %v3271 = vsel %vm3203, %v3244, 0.0
        %v3272 = vsel %vm3204, %v3244, 0.0
        %v3273 = vsel %vm3205, %v3244, 0.0
        %v3274 = vsel %vm3206, %v3244, 0.0
        %v3275 = vsel %vm3207, %v3244, 0.0
        %v3276 = vsel %vm3208, %v3244, 0.0
        %v3277 = vsel %vm3209, %v3244, 0.0
        %v3278 = vsel %vm3210, %v3244, 0.0
        %v3279 = vsel %vm3211, %v3244, 0.0
        %v3280 = vsel %vm3212, %v3244, 0.0
        %v3281 = vsel %vm3213, %v3244, 0.0
        %v3282 = vsel %vm3214, %v3244, 0.0
        %v3283 = vsel %vm3215, %v3244, 0.0
        %v3284 = vsel %vm3216, %v3244, 0.0
        %v3285 = vsel %vm3217, %v3244, 0.0
        %v3286 = vsel %vm3218, %v3244, 0.0
        %v3287 = vsel %vm3219, %v3244, 0.0
        %v3288 = vsel %vm3220, %v3244, 0.0
        %v3289 = vsel %vm3221, %v3244, 0.0
        %v3290 = vsel %vm3222, %v3244, 0.0
        %v3291 = vsel %vm3223, %v3244, 0.0
        %v3292 = vsel %vm3224, %v3244, 0.0
        %v3293 = vsel %vm3225, %v3244, 0.0
        %v3294 = vsel %vm3226, %v3244, 0.0
        %v3295 = vsel %vm3227, %v3244, 0.0
        %v3296 = vsel %vm3228, %v3244, 0.0
        %v3297 = vsel %vm3229, %v3244, 0.0
        %v3298 = vsel %vm3230, %v3244, 0.0
        %v3299 = vsel %vm3231, %v3244, 0.0
        %v3300 = vsel %vm3232, %v3244, 0.0
        %v3301 = vsel %vm3233, %v3244, 0.0
        %v3302 = vsel %vm3234, %v3244, 0.0
        %v3303 = vsel %vm3235, %v3244, 0.0
        %v3304 = vsel %vm3236, %v3244, 0.0
        %v3305 = vsel %vm3237, %v3244, 0.0
        %v3306 = vsel %vm3238, %v3244, 0.0
        %v3307 = vsel %vm3239, %v3244, 0.0
        %v3308 = vsel %vm3240, %v3244, 0.0
        %v3309 = vadd.f32 %v3099, %v3245
        %v3310 = vadd.f32 %v3100, %v3246
        %v3311 = vadd.f32 %v3101, %v3247
        %v3312 = vadd.f32 %v3102, %v3248
        %v3313 = vadd.f32 %v3103, %v3249
        %v3314 = vadd.f32 %v3104, %v3250
        %v3315 = vadd.f32 %v3105, %v3251
        %v3316 = vadd.f32 %v3106, %v3252
        %v3317 = vadd.f32 %v3107, %v3253
        %v3318 = vadd.f32 %v3108, %v3254
        %v3319 = vadd.f32 %v3109, %v3255
        %v3320 = vadd.f32 %v3110, %v3256
        %v3321 = vadd.f32 %v3111, %v3257
        %v3322 = vadd.f32 %v3112, %v3258
        %v3323 = vadd.f32 %v3113, %v3259
        %v3324 = vadd.f32 %v3114, %v3260
        %v3325 = vadd.f32 %v3115, %v3261
        %v3326 = vadd.f32 %v3116, %v3262
        %v3327 = vadd.f32 %v3117, %v3263
        %v3328 = vadd.f32 %v3118, %v3264
        %v3329 = vadd.f32 %v3119, %v3265
        %v3330 = vadd.f32 %v3120, %v3266
        %v3331 = vadd.f32 %v3121, %v3267
        %v3332 = vadd.f32 %v3122, %v3268
        %v3333 = vadd.f32 %v3123, %v3269
        %v3334 = vadd.f32 %v3124, %v3270
        %v3335 = vadd.f32 %v3125, %v3271
        %v3336 = vadd.f32 %v3126, %v3272
        %v3337 = vadd.f32 %v3127, %v3273
        %v3338 = vadd.f32 %v3128, %v3274
        %v3339 = vadd.f32 %v3129, %v3275
        %v3340 = vadd.f32 %v3130, %v3276
        %v3341 = vadd.f32 %v3131, %v3277
        %v3342 = vadd.f32 %v3132, %v3278
        %v3343 = vadd.f32 %v3133, %v3279
        %v3344 = vadd.f32 %v3134, %v3280
        %v3345 = vadd.f32 %v3135, %v3281
        %v3346 = vadd.f32 %v3136, %v3282
        %v3347 = vadd.f32 %v3137, %v3283
        %v3348 = vadd.f32 %v3138, %v3284
        %v3349 = vadd.f32 %v3139, %v3285
        %v3350 = vadd.f32 %v3140, %v3286
        %v3351 = vadd.f32 %v3141, %v3287
        %v3352 = vadd.f32 %v3142, %v3288
        %v3353 = vadd.f32 %v3143, %v3289
        %v3354 = vadd.f32 %v3144, %v3290
        %v3355 = vadd.f32 %v3145, %v3291
        %v3356 = vadd.f32 %v3146, %v3292
        %v3357 = vadd.f32 %v3147, %v3293
        %v3358 = vadd.f32 %v3148, %v3294
        %v3359 = vadd.f32 %v3149, %v3295
        %v3360 = vadd.f32 %v3150, %v3296
        %v3361 = vadd.f32 %v3151, %v3297
        %v3362 = vadd.f32 %v3152, %v3298
        %v3363 = vadd.f32 %v3153, %v3299
        %v3364 = vadd.f32 %v3154, %v3300
        %v3365 = vadd.f32 %v3155, %v3301
        %v3366 = vadd.f32 %v3156, %v3302
        %v3367 = vadd.f32 %v3157, %v3303
        %v3368 = vadd.f32 %v3158, %v3304
        %v3369 = vadd.f32 %v3159, %v3305
        %v3370 = vadd.f32 %v3160, %v3306
        %v3371 = vadd.f32 %v3161, %v3307
        %v3372 = vadd.f32 %v3162, %v3308
        %v3373 = vmul.f32 %v2533, %v3163
        %v3374 = vmul.f32 %v3373, %v2369
        %v3375 = vmul.f32 %v3374, %v2385
        %v3376 = vmul.f32 %v3375, %v3168
        %v3377 = vadd.s32 %v2539, %v3171
        %v3378 = vlaneseq
        %v3379 = vshrl.u32 %v3378, 7
        %v3380 = vsub.s32 0, %v3379
        %v3381 = vrot.slane %v3377, %v3380
        %vm3382 = vcmp.eq.s32.totalorder %v3381, %v387
        %vm3383 = vcmp.eq.s32.totalorder %v3381, %v388
        %vm3384 = vcmp.eq.s32.totalorder %v3381, %v389
        %vm3385 = vcmp.eq.s32.totalorder %v3381, %v390
        %vm3386 = vcmp.eq.s32.totalorder %v3381, %v391
        %vm3387 = vcmp.eq.s32.totalorder %v3381, %v392
        %vm3388 = vcmp.eq.s32.totalorder %v3381, %v393
        %vm3389 = vcmp.eq.s32.totalorder %v3381, %v394
        %vm3390 = vcmp.eq.s32.totalorder %v3381, %v395
        %vm3391 = vcmp.eq.s32.totalorder %v3381, %v396
        %vm3392 = vcmp.eq.s32.totalorder %v3381, %v397
        %vm3393 = vcmp.eq.s32.totalorder %v3381, %v398
        %vm3394 = vcmp.eq.s32.totalorder %v3381, %v399
        %vm3395 = vcmp.eq.s32.totalorder %v3381, %v400
        %vm3396 = vcmp.eq.s32.totalorder %v3381, %v401
        %vm3397 = vcmp.eq.s32.totalorder %v3381, %v402
        %vm3398 = vcmp.eq.s32.totalorder %v3381, %v403
        %vm3399 = vcmp.eq.s32.totalorder %v3381, %v404
        %vm3400 = vcmp.eq.s32.totalorder %v3381, %v405
        %vm3401 = vcmp.eq.s32.totalorder %v3381, %v406
        %vm3402 = vcmp.eq.s32.totalorder %v3381, %v407
        %vm3403 = vcmp.eq.s32.totalorder %v3381, %v408
        %vm3404 = vcmp.eq.s32.totalorder %v3381, %v409
        %vm3405 = vcmp.eq.s32.totalorder %v3381, %v410
        %vm3406 = vcmp.eq.s32.totalorder %v3381, %v411
        %vm3407 = vcmp.eq.s32.totalorder %v3381, %v412
        %vm3408 = vcmp.eq.s32.totalorder %v3381, %v413
        %vm3409 = vcmp.eq.s32.totalorder %v3381, %v414
        %vm3410 = vcmp.eq.s32.totalorder %v3381, %v415
        %vm3411 = vcmp.eq.s32.totalorder %v3381, %v416
        %vm3412 = vcmp.eq.s32.totalorder %v3381, %v417
        %vm3413 = vcmp.eq.s32.totalorder %v3381, %v418
        %vm3414 = vcmp.eq.s32.totalorder %v3381, %v419
        %vm3415 = vcmp.eq.s32.totalorder %v3381, %v420
        %vm3416 = vcmp.eq.s32.totalorder %v3381, %v421
        %vm3417 = vcmp.eq.s32.totalorder %v3381, %v422
        %vm3418 = vcmp.eq.s32.totalorder %v3381, %v423
        %vm3419 = vcmp.eq.s32.totalorder %v3381, %v424
        %vm3420 = vcmp.eq.s32.totalorder %v3381, %v425
        %vm3421 = vcmp.eq.s32.totalorder %v3381, %v426
        %vm3422 = vcmp.eq.s32.totalorder %v3381, %v427
        %vm3423 = vcmp.eq.s32.totalorder %v3381, %v428
        %vm3424 = vcmp.eq.s32.totalorder %v3381, %v429
        %vm3425 = vcmp.eq.s32.totalorder %v3381, %v430
        %vm3426 = vcmp.eq.s32.totalorder %v3381, %v431
        %vm3427 = vcmp.eq.s32.totalorder %v3381, %v432
        %vm3428 = vcmp.eq.s32.totalorder %v3381, %v433
        %vm3429 = vcmp.eq.s32.totalorder %v3381, %v434
        %vm3430 = vcmp.eq.s32.totalorder %v3381, %v435
        %vm3431 = vcmp.eq.s32.totalorder %v3381, %v436
        %vm3432 = vcmp.eq.s32.totalorder %v3381, %v437
        %vm3433 = vcmp.eq.s32.totalorder %v3381, %v438
        %vm3434 = vcmp.eq.s32.totalorder %v3381, %v439
        %vm3435 = vcmp.eq.s32.totalorder %v3381, %v440
        %vm3436 = vcmp.eq.s32.totalorder %v3381, %v441
        %vm3437 = vcmp.eq.s32.totalorder %v3381, %v442
        %vm3438 = vcmp.eq.s32.totalorder %v3381, %v443
        %vm3439 = vcmp.eq.s32.totalorder %v3381, %v444
        %vm3440 = vcmp.eq.s32.totalorder %v3381, %v445
        %vm3441 = vcmp.eq.s32.totalorder %v3381, %v446
        %vm3442 = vcmp.eq.s32.totalorder %v3381, %v447
        %vm3443 = vcmp.eq.s32.totalorder %v3381, %v448
        %vm3444 = vcmp.eq.s32.totalorder %v3381, %v449
        %vm3445 = vcmp.eq.s32.totalorder %v3381, %v450
        %v3446 = vlaneseq
        %v3447 = vshrl.u32 %v3446, 7
        %v3448 = vsub.s32 0, %v3447
        %v3449 = vrot.slane %v3376, %v3448
        %v3450 = vsel %vm3382, %v3449, 0.0
        %v3451 = vsel %vm3383, %v3449, 0.0
        %v3452 = vsel %vm3384, %v3449, 0.0
        %v3453 = vsel %vm3385, %v3449, 0.0
        %v3454 = vsel %vm3386, %v3449, 0.0
        %v3455 = vsel %vm3387, %v3449, 0.0
        %v3456 = vsel %vm3388, %v3449, 0.0
        %v3457 = vsel %vm3389, %v3449, 0.0
        %v3458 = vsel %vm3390, %v3449, 0.0
        %v3459 = vsel %vm3391, %v3449, 0.0
        %v3460 = vsel %vm3392, %v3449, 0.0
        %v3461 = vsel %vm3393, %v3449, 0.0
        %v3462 = vsel %vm3394, %v3449, 0.0
        %v3463 = vsel %vm3395, %v3449, 0.0
        %v3464 = vsel %vm3396, %v3449, 0.0
        %v3465 = vsel %vm3397, %v3449, 0.0
        %v3466 = vsel %vm3398, %v3449, 0.0
        %v3467 = vsel %vm3399, %v3449, 0.0
        %v3468 = vsel %vm3400, %v3449, 0.0
        %v3469 = vsel %vm3401, %v3449, 0.0
        %v3470 = vsel %vm3402, %v3449, 0.0
        %v3471 = vsel %vm3403, %v3449, 0.0
        %v3472 = vsel %vm3404, %v3449, 0.0
        %v3473 = vsel %vm3405, %v3449, 0.0
        %v3474 = vsel %vm3406, %v3449, 0.0
        %v3475 = vsel %vm3407, %v3449, 0.0
        %v3476 = vsel %vm3408, %v3449, 0.0
        %v3477 = vsel %vm3409, %v3449, 0.0
        %v3478 = vsel %vm3410, %v3449, 0.0
        %v3479 = vsel %vm3411, %v3449, 0.0
        %v3480 = vsel %vm3412, %v3449, 0.0
        %v3481 = vsel %vm3413, %v3449, 0.0
        %v3482 = vsel %vm3414, %v3449, 0.0
        %v3483 = vsel %vm3415, %v3449, 0.0
        %v3484 = vsel %vm3416, %v3449, 0.0
        %v3485 = vsel %vm3417, %v3449, 0.0
        %v3486 = vsel %vm3418, %v3449, 0.0
        %v3487 = vsel %vm3419, %v3449, 0.0
        %v3488 = vsel %vm3420, %v3449, 0.0
        %v3489 = vsel %vm3421, %v3449, 0.0
        %v3490 = vsel %vm3422, %v3449, 0.0
        %v3491 = vsel %vm3423, %v3449, 0.0
        %v3492 = vsel %vm3424, %v3449, 0.0
        %v3493 = vsel %vm3425, %v3449, 0.0
        %v3494 = vsel %vm3426, %v3449, 0.0
        %v3495 = vsel %vm3427, %v3449, 0.0
        %v3496 = vsel %vm3428, %v3449, 0.0
        %v3497 = vsel %vm3429, %v3449, 0.0
        %v3498 = vsel %vm3430, %v3449, 0.0
        %v3499 = vsel %vm3431, %v3449, 0.0
        %v3500 = vsel %vm3432, %v3449, 0.0
        %v3501 = vsel %vm3433, %v3449, 0.0
        %v3502 = vsel %vm3434, %v3449, 0.0
        %v3503 = vsel %vm3435, %v3449, 0.0
        %v3504 = vsel %vm3436, %v3449, 0.0
        %v3505 = vsel %vm3437, %v3449, 0.0
        %v3506 = vsel %vm3438, %v3449, 0.0
        %v3507 = vsel %vm3439, %v3449, 0.0
        %v3508 = vsel %vm3440, %v3449, 0.0
        %v3509 = vsel %vm3441, %v3449, 0.0
        %v3510 = vsel %vm3442, %v3449, 0.0
        %v3511 = vsel %vm3443, %v3449, 0.0
        %v3512 = vsel %vm3444, %v3449, 0.0
        %v3513 = vsel %vm3445, %v3449, 0.0
        %v3514 = vadd.f32 %v3309, %v3450
        %v3515 = vadd.f32 %v3310, %v3451
        %v3516 = vadd.f32 %v3311, %v3452
        %v3517 = vadd.f32 %v3312, %v3453
        %v3518 = vadd.f32 %v3313, %v3454
        %v3519 = vadd.f32 %v3314, %v3455
        %v3520 = vadd.f32 %v3315, %v3456
        %v3521 = vadd.f32 %v3316, %v3457
        %v3522 = vadd.f32 %v3317, %v3458
        %v3523 = vadd.f32 %v3318, %v3459
        %v3524 = vadd.f32 %v3319, %v3460
        %v3525 = vadd.f32 %v3320, %v3461
        %v3526 = vadd.f32 %v3321, %v3462
        %v3527 = vadd.f32 %v3322, %v3463
        %v3528 = vadd.f32 %v3323, %v3464
        %v3529 = vadd.f32 %v3324, %v3465
        %v3530 = vadd.f32 %v3325, %v3466
        %v3531 = vadd.f32 %v3326, %v3467
        %v3532 = vadd.f32 %v3327, %v3468
        %v3533 = vadd.f32 %v3328, %v3469
        %v3534 = vadd.f32 %v3329, %v3470
        %v3535 = vadd.f32 %v3330, %v3471
        %v3536 = vadd.f32 %v3331, %v3472
        %v3537 = vadd.f32 %v3332, %v3473
        %v3538 = vadd.f32 %v3333, %v3474
        %v3539 = vadd.f32 %v3334, %v3475
        %v3540 = vadd.f32 %v3335, %v3476
        %v3541 = vadd.f32 %v3336, %v3477
        %v3542 = vadd.f32 %v3337, %v3478
        %v3543 = vadd.f32 %v3338, %v3479
        %v3544 = vadd.f32 %v3339, %v3480
        %v3545 = vadd.f32 %v3340, %v3481
        %v3546 = vadd.f32 %v3341, %v3482
        %v3547 = vadd.f32 %v3342, %v3483
        %v3548 = vadd.f32 %v3343, %v3484
        %v3549 = vadd.f32 %v3344, %v3485
        %v3550 = vadd.f32 %v3345, %v3486
        %v3551 = vadd.f32 %v3346, %v3487
        %v3552 = vadd.f32 %v3347, %v3488
        %v3553 = vadd.f32 %v3348, %v3489
        %v3554 = vadd.f32 %v3349, %v3490
        %v3555 = vadd.f32 %v3350, %v3491
        %v3556 = vadd.f32 %v3351, %v3492
        %v3557 = vadd.f32 %v3352, %v3493
        %v3558 = vadd.f32 %v3353, %v3494
        %v3559 = vadd.f32 %v3354, %v3495
        %v3560 = vadd.f32 %v3355, %v3496
        %v3561 = vadd.f32 %v3356, %v3497
        %v3562 = vadd.f32 %v3357, %v3498
        %v3563 = vadd.f32 %v3358, %v3499
        %v3564 = vadd.f32 %v3359, %v3500
        %v3565 = vadd.f32 %v3360, %v3501
        %v3566 = vadd.f32 %v3361, %v3502
        %v3567 = vadd.f32 %v3362, %v3503
        %v3568 = vadd.f32 %v3363, %v3504
        %v3569 = vadd.f32 %v3364, %v3505
        %v3570 = vadd.f32 %v3365, %v3506
        %v3571 = vadd.f32 %v3366, %v3507
        %v3572 = vadd.f32 %v3367, %v3508
        %v3573 = vadd.f32 %v3368, %v3509
        %v3574 = vadd.f32 %v3369, %v3510
        %v3575 = vadd.f32 %v3370, %v3511
        %v3576 = vadd.f32 %v3371, %v3512
        %v3577 = vadd.f32 %v3372, %v3513
        %v3578 = vmul.f32 %v2744, %v3163
        %v3579 = vmul.f32 %v3578, %v2347
        %v3580 = vmul.f32 %v3579, %v2748
        %v3581 = vmul.f32 %v3580, %v3168
        %v3582 = vadd.s32 %v2754, %v3171
        %v3583 = vlaneseq
        %v3584 = vshrl.u32 %v3583, 7
        %v3585 = vsub.s32 0, %v3584
        %v3586 = vrot.slane %v3582, %v3585
        %vm3587 = vcmp.eq.s32.totalorder %v3586, %v387
        %vm3588 = vcmp.eq.s32.totalorder %v3586, %v388
        %vm3589 = vcmp.eq.s32.totalorder %v3586, %v389
        %vm3590 = vcmp.eq.s32.totalorder %v3586, %v390
        %vm3591 = vcmp.eq.s32.totalorder %v3586, %v391
        %vm3592 = vcmp.eq.s32.totalorder %v3586, %v392
        %vm3593 = vcmp.eq.s32.totalorder %v3586, %v393
        %vm3594 = vcmp.eq.s32.totalorder %v3586, %v394
        %vm3595 = vcmp.eq.s32.totalorder %v3586, %v395
        %vm3596 = vcmp.eq.s32.totalorder %v3586, %v396
        %vm3597 = vcmp.eq.s32.totalorder %v3586, %v397
        %vm3598 = vcmp.eq.s32.totalorder %v3586, %v398
        %vm3599 = vcmp.eq.s32.totalorder %v3586, %v399
        %vm3600 = vcmp.eq.s32.totalorder %v3586, %v400
        %vm3601 = vcmp.eq.s32.totalorder %v3586, %v401
        %vm3602 = vcmp.eq.s32.totalorder %v3586, %v402
        %vm3603 = vcmp.eq.s32.totalorder %v3586, %v403
        %vm3604 = vcmp.eq.s32.totalorder %v3586, %v404
        %vm3605 = vcmp.eq.s32.totalorder %v3586, %v405
        %vm3606 = vcmp.eq.s32.totalorder %v3586, %v406
        %vm3607 = vcmp.eq.s32.totalorder %v3586, %v407
        %vm3608 = vcmp.eq.s32.totalorder %v3586, %v408
        %vm3609 = vcmp.eq.s32.totalorder %v3586, %v409
        %vm3610 = vcmp.eq.s32.totalorder %v3586, %v410
        %vm3611 = vcmp.eq.s32.totalorder %v3586, %v411
        %vm3612 = vcmp.eq.s32.totalorder %v3586, %v412
        %vm3613 = vcmp.eq.s32.totalorder %v3586, %v413
        %vm3614 = vcmp.eq.s32.totalorder %v3586, %v414
        %vm3615 = vcmp.eq.s32.totalorder %v3586, %v415
        %vm3616 = vcmp.eq.s32.totalorder %v3586, %v416
        %vm3617 = vcmp.eq.s32.totalorder %v3586, %v417
        %vm3618 = vcmp.eq.s32.totalorder %v3586, %v418
        %vm3619 = vcmp.eq.s32.totalorder %v3586, %v419
        %vm3620 = vcmp.eq.s32.totalorder %v3586, %v420
        %vm3621 = vcmp.eq.s32.totalorder %v3586, %v421
        %vm3622 = vcmp.eq.s32.totalorder %v3586, %v422
        %vm3623 = vcmp.eq.s32.totalorder %v3586, %v423
        %vm3624 = vcmp.eq.s32.totalorder %v3586, %v424
        %vm3625 = vcmp.eq.s32.totalorder %v3586, %v425
        %vm3626 = vcmp.eq.s32.totalorder %v3586, %v426
        %vm3627 = vcmp.eq.s32.totalorder %v3586, %v427
        %vm3628 = vcmp.eq.s32.totalorder %v3586, %v428
        %vm3629 = vcmp.eq.s32.totalorder %v3586, %v429
        %vm3630 = vcmp.eq.s32.totalorder %v3586, %v430
        %vm3631 = vcmp.eq.s32.totalorder %v3586, %v431
        %vm3632 = vcmp.eq.s32.totalorder %v3586, %v432
        %vm3633 = vcmp.eq.s32.totalorder %v3586, %v433
        %vm3634 = vcmp.eq.s32.totalorder %v3586, %v434
        %vm3635 = vcmp.eq.s32.totalorder %v3586, %v435
        %vm3636 = vcmp.eq.s32.totalorder %v3586, %v436
        %vm3637 = vcmp.eq.s32.totalorder %v3586, %v437
        %vm3638 = vcmp.eq.s32.totalorder %v3586, %v438
        %vm3639 = vcmp.eq.s32.totalorder %v3586, %v439
        %vm3640 = vcmp.eq.s32.totalorder %v3586, %v440
        %vm3641 = vcmp.eq.s32.totalorder %v3586, %v441
        %vm3642 = vcmp.eq.s32.totalorder %v3586, %v442
        %vm3643 = vcmp.eq.s32.totalorder %v3586, %v443
        %vm3644 = vcmp.eq.s32.totalorder %v3586, %v444
        %vm3645 = vcmp.eq.s32.totalorder %v3586, %v445
        %vm3646 = vcmp.eq.s32.totalorder %v3586, %v446
        %vm3647 = vcmp.eq.s32.totalorder %v3586, %v447
        %vm3648 = vcmp.eq.s32.totalorder %v3586, %v448
        %vm3649 = vcmp.eq.s32.totalorder %v3586, %v449
        %vm3650 = vcmp.eq.s32.totalorder %v3586, %v450
        %v3651 = vlaneseq
        %v3652 = vshrl.u32 %v3651, 7
        %v3653 = vsub.s32 0, %v3652
        %v3654 = vrot.slane %v3581, %v3653
        %v3655 = vsel %vm3587, %v3654, 0.0
        %v3656 = vsel %vm3588, %v3654, 0.0
        %v3657 = vsel %vm3589, %v3654, 0.0
        %v3658 = vsel %vm3590, %v3654, 0.0
        %v3659 = vsel %vm3591, %v3654, 0.0
        %v3660 = vsel %vm3592, %v3654, 0.0
        %v3661 = vsel %vm3593, %v3654, 0.0
        %v3662 = vsel %vm3594, %v3654, 0.0
        %v3663 = vsel %vm3595, %v3654, 0.0
        %v3664 = vsel %vm3596, %v3654, 0.0
        %v3665 = vsel %vm3597, %v3654, 0.0
        %v3666 = vsel %vm3598, %v3654, 0.0
        %v3667 = vsel %vm3599, %v3654, 0.0
        %v3668 = vsel %vm3600, %v3654, 0.0
        %v3669 = vsel %vm3601, %v3654, 0.0
        %v3670 = vsel %vm3602, %v3654, 0.0
        %v3671 = vsel %vm3603, %v3654, 0.0
        %v3672 = vsel %vm3604, %v3654, 0.0
        %v3673 = vsel %vm3605, %v3654, 0.0
        %v3674 = vsel %vm3606, %v3654, 0.0
        %v3675 = vsel %vm3607, %v3654, 0.0
        %v3676 = vsel %vm3608, %v3654, 0.0
        %v3677 = vsel %vm3609, %v3654, 0.0
        %v3678 = vsel %vm3610, %v3654, 0.0
        %v3679 = vsel %vm3611, %v3654, 0.0
        %v3680 = vsel %vm3612, %v3654, 0.0
        %v3681 = vsel %vm3613, %v3654, 0.0
        %v3682 = vsel %vm3614, %v3654, 0.0
        %v3683 = vsel %vm3615, %v3654, 0.0
        %v3684 = vsel %vm3616, %v3654, 0.0
        %v3685 = vsel %vm3617, %v3654, 0.0
        %v3686 = vsel %vm3618, %v3654, 0.0
        %v3687 = vsel %vm3619, %v3654, 0.0
        %v3688 = vsel %vm3620, %v3654, 0.0
        %v3689 = vsel %vm3621, %v3654, 0.0
        %v3690 = vsel %vm3622, %v3654, 0.0
        %v3691 = vsel %vm3623, %v3654, 0.0
        %v3692 = vsel %vm3624, %v3654, 0.0
        %v3693 = vsel %vm3625, %v3654, 0.0
        %v3694 = vsel %vm3626, %v3654, 0.0
        %v3695 = vsel %vm3627, %v3654, 0.0
        %v3696 = vsel %vm3628, %v3654, 0.0
        %v3697 = vsel %vm3629, %v3654, 0.0
        %v3698 = vsel %vm3630, %v3654, 0.0
        %v3699 = vsel %vm3631, %v3654, 0.0
        %v3700 = vsel %vm3632, %v3654, 0.0
        %v3701 = vsel %vm3633, %v3654, 0.0
        %v3702 = vsel %vm3634, %v3654, 0.0
        %v3703 = vsel %vm3635, %v3654, 0.0
        %v3704 = vsel %vm3636, %v3654, 0.0
        %v3705 = vsel %vm3637, %v3654, 0.0
        %v3706 = vsel %vm3638, %v3654, 0.0
        %v3707 = vsel %vm3639, %v3654, 0.0
        %v3708 = vsel %vm3640, %v3654, 0.0
        %v3709 = vsel %vm3641, %v3654, 0.0
        %v3710 = vsel %vm3642, %v3654, 0.0
        %v3711 = vsel %vm3643, %v3654, 0.0
        %v3712 = vsel %vm3644, %v3654, 0.0
        %v3713 = vsel %vm3645, %v3654, 0.0
        %v3714 = vsel %vm3646, %v3654, 0.0
        %v3715 = vsel %vm3647, %v3654, 0.0
        %v3716 = vsel %vm3648, %v3654, 0.0
        %v3717 = vsel %vm3649, %v3654, 0.0
        %v3718 = vsel %vm3650, %v3654, 0.0
        %v3719 = vadd.f32 %v3514, %v3655
        %v3720 = vadd.f32 %v3515, %v3656
        %v3721 = vadd.f32 %v3516, %v3657
        %v3722 = vadd.f32 %v3517, %v3658
        %v3723 = vadd.f32 %v3518, %v3659
        %v3724 = vadd.f32 %v3519, %v3660
        %v3725 = vadd.f32 %v3520, %v3661
        %v3726 = vadd.f32 %v3521, %v3662
        %v3727 = vadd.f32 %v3522, %v3663
        %v3728 = vadd.f32 %v3523, %v3664
        %v3729 = vadd.f32 %v3524, %v3665
        %v3730 = vadd.f32 %v3525, %v3666
        %v3731 = vadd.f32 %v3526, %v3667
        %v3732 = vadd.f32 %v3527, %v3668
        %v3733 = vadd.f32 %v3528, %v3669
        %v3734 = vadd.f32 %v3529, %v3670
        %v3735 = vadd.f32 %v3530, %v3671
        %v3736 = vadd.f32 %v3531, %v3672
        %v3737 = vadd.f32 %v3532, %v3673
        %v3738 = vadd.f32 %v3533, %v3674
        %v3739 = vadd.f32 %v3534, %v3675
        %v3740 = vadd.f32 %v3535, %v3676
        %v3741 = vadd.f32 %v3536, %v3677
        %v3742 = vadd.f32 %v3537, %v3678
        %v3743 = vadd.f32 %v3538, %v3679
        %v3744 = vadd.f32 %v3539, %v3680
        %v3745 = vadd.f32 %v3540, %v3681
        %v3746 = vadd.f32 %v3541, %v3682
        %v3747 = vadd.f32 %v3542, %v3683
        %v3748 = vadd.f32 %v3543, %v3684
        %v3749 = vadd.f32 %v3544, %v3685
        %v3750 = vadd.f32 %v3545, %v3686
        %v3751 = vadd.f32 %v3546, %v3687
        %v3752 = vadd.f32 %v3547, %v3688
        %v3753 = vadd.f32 %v3548, %v3689
        %v3754 = vadd.f32 %v3549, %v3690
        %v3755 = vadd.f32 %v3550, %v3691
        %v3756 = vadd.f32 %v3551, %v3692
        %v3757 = vadd.f32 %v3552, %v3693
        %v3758 = vadd.f32 %v3553, %v3694
        %v3759 = vadd.f32 %v3554, %v3695
        %v3760 = vadd.f32 %v3555, %v3696
        %v3761 = vadd.f32 %v3556, %v3697
        %v3762 = vadd.f32 %v3557, %v3698
        %v3763 = vadd.f32 %v3558, %v3699
        %v3764 = vadd.f32 %v3559, %v3700
        %v3765 = vadd.f32 %v3560, %v3701
        %v3766 = vadd.f32 %v3561, %v3702
        %v3767 = vadd.f32 %v3562, %v3703
        %v3768 = vadd.f32 %v3563, %v3704
        %v3769 = vadd.f32 %v3564, %v3705
        %v3770 = vadd.f32 %v3565, %v3706
        %v3771 = vadd.f32 %v3566, %v3707
        %v3772 = vadd.f32 %v3567, %v3708
        %v3773 = vadd.f32 %v3568, %v3709
        %v3774 = vadd.f32 %v3569, %v3710
        %v3775 = vadd.f32 %v3570, %v3711
        %v3776 = vadd.f32 %v3571, %v3712
        %v3777 = vadd.f32 %v3572, %v3713
        %v3778 = vadd.f32 %v3573, %v3714
        %v3779 = vadd.f32 %v3574, %v3715
        %v3780 = vadd.f32 %v3575, %v3716
        %v3781 = vadd.f32 %v3576, %v3717
        %v3782 = vadd.f32 %v3577, %v3718
        %v3783 = vmul.f32 %v2956, %v3163
        %v3784 = vmul.f32 %v3783, %v2369
        %v3785 = vmul.f32 %v3784, %v2748
        %v3786 = vmul.f32 %v3785, %v3168
        %v3787 = vadd.s32 %v2961, %v3171
        %v3788 = vlaneseq
        %v3789 = vshrl.u32 %v3788, 7
        %v3790 = vsub.s32 0, %v3789
        %v3791 = vrot.slane %v3787, %v3790
        %vm3792 = vcmp.eq.s32.totalorder %v3791, %v387
        %vm3793 = vcmp.eq.s32.totalorder %v3791, %v388
        %vm3794 = vcmp.eq.s32.totalorder %v3791, %v389
        %vm3795 = vcmp.eq.s32.totalorder %v3791, %v390
        %vm3796 = vcmp.eq.s32.totalorder %v3791, %v391
        %vm3797 = vcmp.eq.s32.totalorder %v3791, %v392
        %vm3798 = vcmp.eq.s32.totalorder %v3791, %v393
        %vm3799 = vcmp.eq.s32.totalorder %v3791, %v394
        %vm3800 = vcmp.eq.s32.totalorder %v3791, %v395
        %vm3801 = vcmp.eq.s32.totalorder %v3791, %v396
        %vm3802 = vcmp.eq.s32.totalorder %v3791, %v397
        %vm3803 = vcmp.eq.s32.totalorder %v3791, %v398
        %vm3804 = vcmp.eq.s32.totalorder %v3791, %v399
        %vm3805 = vcmp.eq.s32.totalorder %v3791, %v400
        %vm3806 = vcmp.eq.s32.totalorder %v3791, %v401
        %vm3807 = vcmp.eq.s32.totalorder %v3791, %v402
        %vm3808 = vcmp.eq.s32.totalorder %v3791, %v403
        %vm3809 = vcmp.eq.s32.totalorder %v3791, %v404
        %vm3810 = vcmp.eq.s32.totalorder %v3791, %v405
        %vm3811 = vcmp.eq.s32.totalorder %v3791, %v406
        %vm3812 = vcmp.eq.s32.totalorder %v3791, %v407
        %vm3813 = vcmp.eq.s32.totalorder %v3791, %v408
        %vm3814 = vcmp.eq.s32.totalorder %v3791, %v409
        %vm3815 = vcmp.eq.s32.totalorder %v3791, %v410
        %vm3816 = vcmp.eq.s32.totalorder %v3791, %v411
        %vm3817 = vcmp.eq.s32.totalorder %v3791, %v412
        %vm3818 = vcmp.eq.s32.totalorder %v3791, %v413
        %vm3819 = vcmp.eq.s32.totalorder %v3791, %v414
        %vm3820 = vcmp.eq.s32.totalorder %v3791, %v415
        %vm3821 = vcmp.eq.s32.totalorder %v3791, %v416
        %vm3822 = vcmp.eq.s32.totalorder %v3791, %v417
        %vm3823 = vcmp.eq.s32.totalorder %v3791, %v418
        %vm3824 = vcmp.eq.s32.totalorder %v3791, %v419
        %vm3825 = vcmp.eq.s32.totalorder %v3791, %v420
        %vm3826 = vcmp.eq.s32.totalorder %v3791, %v421
        %vm3827 = vcmp.eq.s32.totalorder %v3791, %v422
        %vm3828 = vcmp.eq.s32.totalorder %v3791, %v423
        %vm3829 = vcmp.eq.s32.totalorder %v3791, %v424
        %vm3830 = vcmp.eq.s32.totalorder %v3791, %v425
        %vm3831 = vcmp.eq.s32.totalorder %v3791, %v426
        %vm3832 = vcmp.eq.s32.totalorder %v3791, %v427
        %vm3833 = vcmp.eq.s32.totalorder %v3791, %v428
        %vm3834 = vcmp.eq.s32.totalorder %v3791, %v429
        %vm3835 = vcmp.eq.s32.totalorder %v3791, %v430
        %vm3836 = vcmp.eq.s32.totalorder %v3791, %v431
        %vm3837 = vcmp.eq.s32.totalorder %v3791, %v432
        %vm3838 = vcmp.eq.s32.totalorder %v3791, %v433
        %vm3839 = vcmp.eq.s32.totalorder %v3791, %v434
        %vm3840 = vcmp.eq.s32.totalorder %v3791, %v435
        %vm3841 = vcmp.eq.s32.totalorder %v3791, %v436
        %vm3842 = vcmp.eq.s32.totalorder %v3791, %v437
        %vm3843 = vcmp.eq.s32.totalorder %v3791, %v438
        %vm3844 = vcmp.eq.s32.totalorder %v3791, %v439
        %vm3845 = vcmp.eq.s32.totalorder %v3791, %v440
        %vm3846 = vcmp.eq.s32.totalorder %v3791, %v441
        %vm3847 = vcmp.eq.s32.totalorder %v3791, %v442
        %vm3848 = vcmp.eq.s32.totalorder %v3791, %v443
        %vm3849 = vcmp.eq.s32.totalorder %v3791, %v444
        %vm3850 = vcmp.eq.s32.totalorder %v3791, %v445
        %vm3851 = vcmp.eq.s32.totalorder %v3791, %v446
        %vm3852 = vcmp.eq.s32.totalorder %v3791, %v447
        %vm3853 = vcmp.eq.s32.totalorder %v3791, %v448
        %vm3854 = vcmp.eq.s32.totalorder %v3791, %v449
        %vm3855 = vcmp.eq.s32.totalorder %v3791, %v450
        %v3856 = vlaneseq
        %v3857 = vshrl.u32 %v3856, 7
        %v3858 = vsub.s32 0, %v3857
        %v3859 = vrot.slane %v3786, %v3858
        %v3860 = vsel %vm3792, %v3859, 0.0
        %v3861 = vsel %vm3793, %v3859, 0.0
        %v3862 = vsel %vm3794, %v3859, 0.0
        %v3863 = vsel %vm3795, %v3859, 0.0
        %v3864 = vsel %vm3796, %v3859, 0.0
        %v3865 = vsel %vm3797, %v3859, 0.0
        %v3866 = vsel %vm3798, %v3859, 0.0
        %v3867 = vsel %vm3799, %v3859, 0.0
        %v3868 = vsel %vm3800, %v3859, 0.0
        %v3869 = vsel %vm3801, %v3859, 0.0
        %v3870 = vsel %vm3802, %v3859, 0.0
        %v3871 = vsel %vm3803, %v3859, 0.0
        %v3872 = vsel %vm3804, %v3859, 0.0
        %v3873 = vsel %vm3805, %v3859, 0.0
        %v3874 = vsel %vm3806, %v3859, 0.0
        %v3875 = vsel %vm3807, %v3859, 0.0
        %v3876 = vsel %vm3808, %v3859, 0.0
        %v3877 = vsel %vm3809, %v3859, 0.0
        %v3878 = vsel %vm3810, %v3859, 0.0
        %v3879 = vsel %vm3811, %v3859, 0.0
        %v3880 = vsel %vm3812, %v3859, 0.0
        %v3881 = vsel %vm3813, %v3859, 0.0
        %v3882 = vsel %vm3814, %v3859, 0.0
        %v3883 = vsel %vm3815, %v3859, 0.0
        %v3884 = vsel %vm3816, %v3859, 0.0
        %v3885 = vsel %vm3817, %v3859, 0.0
        %v3886 = vsel %vm3818, %v3859, 0.0
        %v3887 = vsel %vm3819, %v3859, 0.0
        %v3888 = vsel %vm3820, %v3859, 0.0
        %v3889 = vsel %vm3821, %v3859, 0.0
        %v3890 = vsel %vm3822, %v3859, 0.0
        %v3891 = vsel %vm3823, %v3859, 0.0
        %v3892 = vsel %vm3824, %v3859, 0.0
        %v3893 = vsel %vm3825, %v3859, 0.0
        %v3894 = vsel %vm3826, %v3859, 0.0
        %v3895 = vsel %vm3827, %v3859, 0.0
        %v3896 = vsel %vm3828, %v3859, 0.0
        %v3897 = vsel %vm3829, %v3859, 0.0
        %v3898 = vsel %vm3830, %v3859, 0.0
        %v3899 = vsel %vm3831, %v3859, 0.0
        %v3900 = vsel %vm3832, %v3859, 0.0
        %v3901 = vsel %vm3833, %v3859, 0.0
        %v3902 = vsel %vm3834, %v3859, 0.0
        %v3903 = vsel %vm3835, %v3859, 0.0
        %v3904 = vsel %vm3836, %v3859, 0.0
        %v3905 = vsel %vm3837, %v3859, 0.0
        %v3906 = vsel %vm3838, %v3859, 0.0
        %v3907 = vsel %vm3839, %v3859, 0.0
        %v3908 = vsel %vm3840, %v3859, 0.0
        %v3909 = vsel %vm3841, %v3859, 0.0
        %v3910 = vsel %vm3842, %v3859, 0.0
        %v3911 = vsel %vm3843, %v3859, 0.0
        %v3912 = vsel %vm3844, %v3859, 0.0
        %v3913 = vsel %vm3845, %v3859, 0.0
        %v3914 = vsel %vm3846, %v3859, 0.0
        %v3915 = vsel %vm3847, %v3859, 0.0
        %v3916 = vsel %vm3848, %v3859, 0.0
        %v3917 = vsel %vm3849, %v3859, 0.0
        %v3918 = vsel %vm3850, %v3859, 0.0
        %v3919 = vsel %vm3851, %v3859, 0.0
        %v3920 = vsel %vm3852, %v3859, 0.0
        %v3921 = vsel %vm3853, %v3859, 0.0
        %v3922 = vsel %vm3854, %v3859, 0.0
        %v3923 = vsel %vm3855, %v3859, 0.0
        %v3924 = vadd.f32 %v3719, %v3860
        %v3925 = vadd.f32 %v3720, %v3861
        %v3926 = vadd.f32 %v3721, %v3862
        %v3927 = vadd.f32 %v3722, %v3863
        %v3928 = vadd.f32 %v3723, %v3864
        %v3929 = vadd.f32 %v3724, %v3865
        %v3930 = vadd.f32 %v3725, %v3866
        %v3931 = vadd.f32 %v3726, %v3867
        %v3932 = vadd.f32 %v3727, %v3868
        %v3933 = vadd.f32 %v3728, %v3869
        %v3934 = vadd.f32 %v3729, %v3870
        %v3935 = vadd.f32 %v3730, %v3871
        %v3936 = vadd.f32 %v3731, %v3872
        %v3937 = vadd.f32 %v3732, %v3873
        %v3938 = vadd.f32 %v3733, %v3874
        %v3939 = vadd.f32 %v3734, %v3875
        %v3940 = vadd.f32 %v3735, %v3876
        %v3941 = vadd.f32 %v3736, %v3877
        %v3942 = vadd.f32 %v3737, %v3878
        %v3943 = vadd.f32 %v3738, %v3879
        %v3944 = vadd.f32 %v3739, %v3880
        %v3945 = vadd.f32 %v3740, %v3881
        %v3946 = vadd.f32 %v3741, %v3882
        %v3947 = vadd.f32 %v3742, %v3883
        %v3948 = vadd.f32 %v3743, %v3884
        %v3949 = vadd.f32 %v3744, %v3885
        %v3950 = vadd.f32 %v3745, %v3886
        %v3951 = vadd.f32 %v3746, %v3887
        %v3952 = vadd.f32 %v3747, %v3888
        %v3953 = vadd.f32 %v3748, %v3889
        %v3954 = vadd.f32 %v3749, %v3890
        %v3955 = vadd.f32 %v3750, %v3891
        %v3956 = vadd.f32 %v3751, %v3892
        %v3957 = vadd.f32 %v3752, %v3893
        %v3958 = vadd.f32 %v3753, %v3894
        %v3959 = vadd.f32 %v3754, %v3895
        %v3960 = vadd.f32 %v3755, %v3896
        %v3961 = vadd.f32 %v3756, %v3897
        %v3962 = vadd.f32 %v3757, %v3898
        %v3963 = vadd.f32 %v3758, %v3899
        %v3964 = vadd.f32 %v3759, %v3900
        %v3965 = vadd.f32 %v3760, %v3901
        %v3966 = vadd.f32 %v3761, %v3902
        %v3967 = vadd.f32 %v3762, %v3903
        %v3968 = vadd.f32 %v3763, %v3904
        %v3969 = vadd.f32 %v3764, %v3905
        %v3970 = vadd.f32 %v3765, %v3906
        %v3971 = vadd.f32 %v3766, %v3907
        %v3972 = vadd.f32 %v3767, %v3908
        %v3973 = vadd.f32 %v3768, %v3909
        %v3974 = vadd.f32 %v3769, %v3910
        %v3975 = vadd.f32 %v3770, %v3911
        %v3976 = vadd.f32 %v3771, %v3912
        %v3977 = vadd.f32 %v3772, %v3913
        %v3978 = vadd.f32 %v3773, %v3914
        %v3979 = vadd.f32 %v3774, %v3915
        %v3980 = vadd.f32 %v3775, %v3916
        %v3981 = vadd.f32 %v3776, %v3917
        %v3982 = vadd.f32 %v3777, %v3918
        %v3983 = vadd.f32 %v3778, %v3919
        %v3984 = vadd.f32 %v3779, %v3920
        %v3985 = vadd.f32 %v3780, %v3921
        %v3986 = vadd.f32 %v3781, %v3922
        %v3987 = vadd.f32 %v3782, %v3923
        %3988 = vmatprep.subr.mxu0 0.0
        %3989 = vmatpush1.msra.mxu0 %v3924
        %3990 = vmatprep.subr.mxu0 0.0
        %3991 = vmatpush1.msra.mxu0 %v3925
        %3992 = vmatprep.subr.mxu0 0.0
        %3993 = vmatpush1.msra.mxu0 %v3926
        %3994 = vmatprep.subr.mxu0 0.0
        %3995 = vmatpush1.msra.mxu0 %v3927
        %3996 = vmatprep.subr.mxu0 0.0
        %3997 = vmatpush1.msra.mxu0 %v3928
        %3998 = vmatprep.subr.mxu0 0.0
        %3999 = vmatpush1.msra.mxu0 %v3929
        %4000 = vmatprep.subr.mxu0 0.0
        %4001 = vmatpush1.msra.mxu0 %v3930
        %4002 = vmatprep.subr.mxu0 0.0
        %4003 = vmatpush1.msra.mxu0 %v3931
        %4004 = vmatprep.subr.mxu0 0.0
        %4005 = vmatpush1.msra.mxu0 %v3932
        %4006 = vmatprep.subr.mxu0 0.0
        %4007 = vmatpush1.msra.mxu0 %v3933
        %4008 = vmatprep.subr.mxu0 0.0
        %4009 = vmatpush1.msra.mxu0 %v3934
        %4010 = vmatprep.subr.mxu0 0.0
        %4011 = vmatpush1.msra.mxu0 %v3935
        %4012 = vmatprep.subr.mxu0 0.0
        %4013 = vmatpush1.msra.mxu0 %v3936
        %4014 = vmatprep.subr.mxu0 0.0
        %4015 = vmatpush1.msra.mxu0 %v3937
        %4016 = vmatprep.subr.mxu0 0.0
        %4017 = vmatpush1.msra.mxu0 %v3938
        %4018 = vmatprep.subr.mxu0 0.0
        %4019 = vmatpush1.msra.mxu0 %v3939
        %4020 = vmatprep.subr.mxu0 0.0
        %4021 = vmatpush1.msra.mxu0 %v3940
        %4022 = vmatprep.subr.mxu0 0.0
        %4023 = vmatpush1.msra.mxu0 %v3941
        %4024 = vmatprep.subr.mxu0 0.0
        %4025 = vmatpush1.msra.mxu0 %v3942
        %4026 = vmatprep.subr.mxu0 0.0
        %4027 = vmatpush1.msra.mxu0 %v3943
        %4028 = vmatprep.subr.mxu0 0.0
        %4029 = vmatpush1.msra.mxu0 %v3944
        %4030 = vmatprep.subr.mxu0 0.0
        %4031 = vmatpush1.msra.mxu0 %v3945
        %4032 = vmatprep.subr.mxu0 0.0
        %4033 = vmatpush1.msra.mxu0 %v3946
        %4034 = vmatprep.subr.mxu0 0.0
        %4035 = vmatpush1.msra.mxu0 %v3947
        %4036 = vmatprep.subr.mxu0 0.0
        %4037 = vmatpush1.msra.mxu0 %v3948
        %4038 = vmatprep.subr.mxu0 0.0
        %4039 = vmatpush1.msra.mxu0 %v3949
        %4040 = vmatprep.subr.mxu0 0.0
        %4041 = vmatpush1.msra.mxu0 %v3950
        %4042 = vmatprep.subr.mxu0 0.0
        %4043 = vmatpush1.msra.mxu0 %v3951
        %4044 = vmatprep.subr.mxu0 0.0
        %4045 = vmatpush1.msra.mxu0 %v3952
        %4046 = vmatprep.subr.mxu0 0.0
        %4047 = vmatpush1.msra.mxu0 %v3953
        %4048 = vmatprep.subr.mxu0 0.0
        %4049 = vmatpush1.msra.mxu0 %v3954
        %4050 = vmatprep.subr.mxu0 0.0
        %4051 = vmatpush1.msra.mxu0 %v3955
        %4052 = vmatprep.mubr.f32.mxu0 %v2326
        %4053 = vmatmul.mubr.f32.gmra.mrb[0].mxu0 %v2325
        %v4054 = vpop.f32.mrb[0].mxu0
        %v4055 = vadd.f32 0.0, %v4054
        %v4056 = vpop.f32.mrb[0].mxu0
        %4057 = vdwg.mxu0
        %4058 = vmatprep.subr.mxu0 0.0
        %4059 = vmatpush1.msra.mxu0 %v3956
        %4060 = vmatprep.subr.mxu0 0.0
        %4061 = vmatpush1.msra.mxu0 %v3957
        %4062 = vmatprep.subr.mxu0 0.0
        %4063 = vmatpush1.msra.mxu0 %v3958
        %4064 = vmatprep.subr.mxu0 0.0
        %4065 = vmatpush1.msra.mxu0 %v3959
        %4066 = vmatprep.subr.mxu0 0.0
        %4067 = vmatpush1.msra.mxu0 %v3960
        %4068 = vmatprep.subr.mxu0 0.0
        %4069 = vmatpush1.msra.mxu0 %v3961
        %4070 = vmatprep.subr.mxu0 0.0
        %4071 = vmatpush1.msra.mxu0 %v3962
        %4072 = vmatprep.subr.mxu0 0.0
        %4073 = vmatpush1.msra.mxu0 %v3963
        %4074 = vmatprep.subr.mxu0 0.0
        %4075 = vmatpush1.msra.mxu0 %v3964
        %4076 = vmatprep.subr.mxu0 0.0
        %4077 = vmatpush1.msra.mxu0 %v3965
        %4078 = vmatprep.subr.mxu0 0.0
        %4079 = vmatpush1.msra.mxu0 %v3966
        %4080 = vmatprep.subr.mxu0 0.0
        %4081 = vmatpush1.msra.mxu0 %v3967
        %4082 = vmatprep.subr.mxu0 0.0
        %4083 = vmatpush1.msra.mxu0 %v3968
        %4084 = vmatprep.subr.mxu0 0.0
        %4085 = vmatpush1.msra.mxu0 %v3969
        %4086 = vmatprep.subr.mxu0 0.0
        %4087 = vmatpush1.msra.mxu0 %v3970
        %4088 = vmatprep.subr.mxu0 0.0
        %4089 = vmatpush1.msra.mxu0 %v3971
        %4090 = vmatprep.subr.mxu0 0.0
        %4091 = vmatpush1.msra.mxu0 %v3972
        %4092 = vmatprep.subr.mxu0 0.0
        %4093 = vmatpush1.msra.mxu0 %v3973
        %4094 = vmatprep.subr.mxu0 0.0
        %4095 = vmatpush1.msra.mxu0 %v3974
        %4096 = vmatprep.subr.mxu0 0.0
        %4097 = vmatpush1.msra.mxu0 %v3975
        %4098 = vmatprep.subr.mxu0 0.0
        %4099 = vmatpush1.msra.mxu0 %v3976
        %4100 = vmatprep.subr.mxu0 0.0
        %4101 = vmatpush1.msra.mxu0 %v3977
        %4102 = vmatprep.subr.mxu0 0.0
        %4103 = vmatpush1.msra.mxu0 %v3978
        %4104 = vmatprep.subr.mxu0 0.0
        %4105 = vmatpush1.msra.mxu0 %v3979
        %4106 = vmatprep.subr.mxu0 0.0
        %4107 = vmatpush1.msra.mxu0 %v3980
        %4108 = vmatprep.subr.mxu0 0.0
        %4109 = vmatpush1.msra.mxu0 %v3981
        %4110 = vmatprep.subr.mxu0 0.0
        %4111 = vmatpush1.msra.mxu0 %v3982
        %4112 = vmatprep.subr.mxu0 0.0
        %4113 = vmatpush1.msra.mxu0 %v3983
        %4114 = vmatprep.subr.mxu0 0.0
        %4115 = vmatpush1.msra.mxu0 %v3984
        %4116 = vmatprep.subr.mxu0 0.0
        %4117 = vmatpush1.msra.mxu0 %v3985
        %4118 = vmatprep.subr.mxu0 0.0
        %4119 = vmatpush1.msra.mxu0 %v3986
        %4120 = vmatprep.subr.mxu0 0.0
        %4121 = vmatpush1.msra.mxu0 %v3987
        %4122 = vmatprep.mubr.f32.mxu0 %v2328
        %4123 = vmatmul.mubr.f32.gmra.mrb[0].mxu0 %v2327
        %v4124 = vpop.f32.mrb[0].mxu0
        %v4125 = vadd.f32 %v4055, %v4124
        %v4126 = vpop.f32.mrb[0].mxu0
        %4127 = vdwg.mxu0
        %v4128 = vsub.f32 0.0, %v4125
        %v4129 = vmul.f32 %v4128, 1.442695
        %v4130 = vpow.pop %v4129
        %v4131 = vadd.f32 %v4130, 1.0
        %v4132 = vrcp.pop %v4131
        %v4133 = vmul.f32 1.0, %v4132
        %v4134 = vsub.f32 %v4125, 1.0
        %v4135 = vmax.f32 %v4134, 0.0
        %v4136 = vand.u32 2147483647, %v4134
        %v4137 = vsub.f32 0.0, %v4136
        %v4138 = vmul.f32 %v4137, 1.442695
        %v4139 = vpow.pop %v4138
        %v4140 = vadd.f32 %v4139, 1.0
        %v4141 = vlog2.pop %v4140
        %v4142 = vmul.f32 %v4141, 0.6931472
        %v4143 = vadd.f32 %v4135, %v4142
        %v4144 = vsub.f32 0.0, %v4143
        %v4145 = vld [vmem:[%s365] sm:$0x1]
        %v4146 = vstv %s380
        %v4147 = vmul.f32 %v4146, %v4145
        %v4148 = vmul.f32 %v4144, %v4147
        %v4149 = vmul.f32 %v4148, 1.442695
        %v4150 = vpow.pop %v4149
        %v4151 = vsub.f32 1.0, %v4150
        %v4152 = vld [vmem:[#allocation2] sm:$0x1]
        %v4153 = vmul.f32 %v4151, %v4152
        %v4154 = vld [vmem:[#allocation11] sm:$0x7]
        %v4155 = vlaneseq
        %v4156 = vshrl.u32 %v4155, 7
        %v4157 = vsub.s32 0, %v4156
        %v4158 = vrot.slane %v4153, %v4157
        %v4159 = vmul.f32 %v4158, %v4133
        %v4161 = vrot.slane %v4159, 1
        %v4163 = vadd.f32 %v4154, %v4161
        %4164 = vst [vmem:[#allocation11] sm:$0x7] %v4163
        %v4165 = vld [vmem:[#allocation2] sm:$0x1]
        %v4166 = vsub.f32 1.0, %v4151
        %v4167 = vadd.f32 %v4166, 1e-10
        %v4168 = vmul.f32 %v4165, %v4167
        %4169 = vst [vmem:[#allocation2] sm:$0x1] %v4168
        // Predicated region
        $region69: #{tpu_custom_call.1} parent=47 // pred_check
          %p4170 = pneg %p219
        $region70: #{tpu_custom_call.1} parent=47 // pred_check_branch
          %4172 = sbr.rel (%p4170) target = $region72
        $region71: #{tpu_custom_call.1} parent=47 // pred_region
          %s4174 = ssub.s32 64, 64
          %4175 = vsyncadd [#allocation5], %s4174
          %s4176 = smul.addr %s26, 64
          %s4177 = scalar_lea.hbm %s7, %s4176
          %s4179 = sshll.u32 [#allocation11], 4
          %s4180 = int_to_ptr.vmem [resolvable:$true] %s4179
          %4182 = dma.vmem_to_hbm [thread:$0]  %s4180, 64, %s4177, [#allocation5]
        $region72: #{tpu_custom_call.1} parent=47 // pred_fallthru
          _
        // Predicated region
        $region73: #{tpu_custom_call.1} parent=47 // pred_check
          %p4183 = pneg %p219
        $region74: #{tpu_custom_call.1} parent=47 // pred_check_branch
          %4185 = sbr.rel (%p4183) target = $region76
        $region75: #{tpu_custom_call.1} parent=47 // pred_region
          %4186 = dma.done [#allocation5], 64
        $region76: #{tpu_custom_call.1} parent=47 // pred_fallthru
          _
      $region48: #{tpu_custom_call.1} parent=5 // pred_fallthru
        _
      %p4187 = scmp.le.s32.totalorder 2, %s17
      // Predicated region
      $region77: #{tpu_custom_call.1} parent=5 // pred_check
        %p4188 = pneg %p4187
      $region78: #{tpu_custom_call.1} parent=5 // pred_check_branch
        %4190 = sbr.rel (%p4188) target = $region80
      $region79: #{tpu_custom_call.1} parent=5 // pred_region
        %s4191 = ssub.s32 %s17, 2
      $region80: #{tpu_custom_call.1} parent=5 // pred_fallthru
        _
    $region6: #{tpu_custom_call.1} parent=1 // loop_footer
      %s21 = sadd.s32 1, %s17
    $region7: #{tpu_custom_call.1} parent=1 // loop_footer_branch
      %16 = sbr.rel target = $region3
    $region8: #{tpu_custom_call.1} parent=1 // loop_exit
      _
    %4192 = vsyncpa [#allocation4], 1
    %s4193 = scalar_lea.sflag [#allocation4], 1
    %4194 = vsyncpa %s4193, 1
    %4195 = vsyncpa [#allocation9], 1
    %4196 = vsyncpa [#allocation5], 1
    %s4197 = scalar_lea.sflag [#allocation5], 1
    %4198 = vsyncpa %s4197, 1
    %4199 = vsyncpa [#allocation6], 1
    %s4200 = scalar_lea.sflag [#allocation6], 1
    %4201 = vsyncpa %s4200, 1

</llo_original>
